<compile_context>
chip_gen: v7x
topology: tpu7x:2x2x1
jax: 0.10.0
libtpu: 0.0.40
codegen_flags: <defaults>
</compile_context>

<pallas_src>
import functools

import jax
import jax.numpy as jnp
from jax.experimental import pallas as pl
from jax.experimental.pallas import tpu as pltpu

FEAT_DIM = 1280   # EfficientNet-b1 feature dim (include_top=False)
EMB_DIM = 512     # mlp = nn.Linear(1280, 512)


# ----------------------------------------------------------------------------
# Pallas kernel: one grid step per stream (0 = image, 1 = context).
# ----------------------------------------------------------------------------
def _fused_kernel(x_ref, ws_ref, bs_ref, wh_ref, bh_ref, o_ref, *,
                  batch, n_patches):
    # x_ref : (1, B*P, Kp)  bf16  im2col patches of this stream
    # ws_ref: (Kp, C)       bf16  shared stem conv weight (zero-padded rows)
    # bs_ref: (1, C)        f32   stem bias
    # wh_ref: (1, C, E)     bf16  per-stream head weight (mlp / context_mlp)
    # bh_ref: (1, 1, E)     f32   per-stream head bias
    # o_ref : (1, B, E)     f32   per-stream embeddings (dense store)
    x = x_ref[0]                                                    # (M, Kp) bf16

    # Stem conv as one big matmul: all B*P patch rows through the MXU at once.
    h = jnp.dot(x, ws_ref[...], preferred_element_type=jnp.float32)  # (M, C) f32
    h = h + bs_ref[...]
    h = h * jax.nn.sigmoid(h)                 # swish / SiLU, f32 on VPU + EUP

    # Per-image global average pool: split rows back into (B, P, C) and sum
    # over the patch axis (XLU), then multiply by the constant reciprocal.
    h = h.reshape(batch, n_patches, h.shape[-1])
    pooled = jnp.sum(h, axis=1) * (1.0 / float(n_patches))           # (B, C) f32

    # Per-stream FC head (stream 0 -> mlp, stream 1 -> context_mlp).
    emb = jnp.dot(pooled.astype(jnp.bfloat16), wh_ref[0],
                  preferred_element_type=jnp.float32)                # (B, E) f32
    emb = emb + bh_ref[0]
    o_ref[0] = emb.astype(o_ref.dtype)


def _fused_forward(patches, w_stem, b_stem, w_heads, b_heads, *,
                   batch, n_patches):
    S, M, Kp = patches.shape                       # S = 2 streams, M = B*P
    C = w_stem.shape[1]
    E = w_heads.shape[-1]

    cost = pl.CostEstimate(
        flops=2 * S * (M * Kp * C + batch * C * E),
        transcendentals=S * M * C,
        bytes_accessed=(patches.size * 2 + w_stem.size * 2 + b_stem.size * 4
                        + w_heads.size * 2 + b_heads.size * 4
                        + S * batch * E * 4),
    )

    kernel = functools.partial(_fused_kernel, batch=batch, n_patches=n_patches)

    return pl.pallas_call(
        kernel,
        out_shape=jax.ShapeDtypeStruct((S, batch, E), jnp.float32),
        grid_spec=pltpu.PrefetchScalarGridSpec(
            num_scalar_prefetch=0,
            grid=(S,),                              # batch folded into M, so the
                                                    # only grid axis is the stream
            in_specs=[
                pl.BlockSpec((1, M, Kp), lambda s: (s, 0, 0)),   # patches
                pl.BlockSpec((Kp, C), lambda s: (0, 0)),         # shared stem W
                pl.BlockSpec((1, C), lambda s: (0, 0)),          # shared stem b
                pl.BlockSpec((1, C, E), lambda s: (s, 0, 0)),    # per-stream head W
                pl.BlockSpec((1, 1, E), lambda s: (s, 0, 0)),    # per-stream head b
            ],
            out_specs=pl.BlockSpec((1, batch, E), lambda s: (s, 0, 0)),
        ),
        compiler_params=pltpu.CompilerParams(
            dimension_semantics=("parallel",)),     # v7x: one stream per TC
        cost_estimate=cost,
    )(patches, w_stem, b_stem, w_heads, b_heads)


# ----------------------------------------------------------------------------
# Plain-JAX glue: NCHW -> im2col patches (3x3 / stride 2 / pad 1).
# ----------------------------------------------------------------------------
def _im2col_nchw(x_nchw, kh=3, kw=3, stride=2, pad=1):
    # TODO(synk): for real EfficientNet-b1 resolutions, build the patches from
    # a VMEM-resident image inside the kernel (or use lax.conv for the stem)
    # to avoid the 9x HBM blow-up of host-side im2col.
    x = jnp.transpose(x_nchw, (0, 2, 3, 1))                 # NCHW -> NHWC
    B, H, W, Cin = x.shape
    xp = jnp.pad(x, ((0, 0), (pad, pad), (pad, pad), (0, 0)))
    OH = (H + 2 * pad - kh) // stride + 1
    OW = (W + 2 * pad - kw) // stride + 1
    cols = []
    for di in range(kh):
        for dj in range(kw):
            cols.append(xp[:, di:di + stride * OH:stride,
                           dj:dj + stride * OW:stride, :])
    patches = jnp.stack(cols, axis=3)                       # (B, OH, OW, kh*kw, Cin)
    return patches.reshape(B, OH * OW, kh * kw * Cin)       # (B, P, K)


# ----------------------------------------------------------------------------
# Style2VecV2 forward: shared cnn stem, separate mlp / context_mlp heads.
# ----------------------------------------------------------------------------
def style2vec_v2_forward(params, image, context):
    B = image.shape[0]
    p_img = _im2col_nchw(image)                             # (B, P, K)
    p_ctx = _im2col_nchw(context)
    _, P, K = p_img.shape

    # Zero-pad the contraction dim (27 -> 32) for dense vreg / MXU packing;
    # w_stem gets matching zero rows so results are unchanged.
    Kp = ((K + 7) // 8) * 8

    def prep(p):
        p = jnp.pad(p, ((0, 0), (0, 0), (0, Kp - K)))
        return p.reshape(B * P, Kp)                         # fold batch into M

    patches = jnp.stack([prep(p_img), prep(p_ctx)], axis=0).astype(jnp.bfloat16)

    cnn = params["cnn"]
    w_stem = jnp.pad(cnn["w_stem"], ((0, Kp - K), (0, 0))).astype(jnp.bfloat16)
    w_heads = jnp.stack([params["mlp"]["w"], params["context_mlp"]["w"]],
                        axis=0).astype(jnp.bfloat16)        # (2, C, E)
    b_heads = jnp.stack([params["mlp"]["b"], params["context_mlp"]["b"]],
                        axis=0)                             # (2, 1, E)

    out = _fused_forward(patches, w_stem, cnn["b_stem"], w_heads, b_heads,
                         batch=B, n_patches=P)              # (2, B, E)
    return out[0], out[1]                                   # (ivec, contextvec)


def init_params(key, c_in=3, kh=3, kw=3, feat_dim=FEAT_DIM, emb_dim=EMB_DIM):
    ks = jax.random.split(key, 6)
    K = kh * kw * c_in

    def linear(kw_, kb_, d_in, d_out):
        return {
            "w": jax.random.normal(kw_, (d_in, d_out), jnp.float32) * 0.05,
            "b": jax.random.normal(kb_, (1, d_out), jnp.float32) * 0.01,
        }

    return {
        "cnn": {
            "w_stem": jax.random.normal(ks[0], (K, feat_dim), jnp.float32) * 0.05,
            "b_stem": jax.random.normal(ks[1], (1, feat_dim), jnp.float32) * 0.01,
        },
        "mlp": linear(ks[2], ks[3], feat_dim, emb_dim),
        "context_mlp": linear(ks[4], ks[5], feat_dim, emb_dim),
    }


if __name__ == "__main__":
    key = jax.random.PRNGKey(0)
    k_par, k_img, k_ctx = jax.random.split(key, 3)

    params = init_params(k_par)

    # PyTorch-style NCHW inputs (small stand-in shapes).
    image = jax.random.normal(k_img, (2, 3, 16, 16), jnp.float32)
    context = jax.random.normal(k_ctx, (2, 3, 16, 16), jnp.float32)

    ivec, contextvec = jax.jit(style2vec_v2_forward)(params, image, context)
    jax.block_until_ready((ivec, contextvec))

    assert ivec.shape == (2, EMB_DIM) and contextvec.shape == (2, EMB_DIM)
    assert bool(jnp.all(jnp.isfinite(ivec)))
    assert bool(jnp.all(jnp.isfinite(contextvec)))
    print("KERNEL_OK")
</pallas_src>

<mosaic_0001>
module attributes {stable_mosaic.version = 11 : i64} {
  func.func @_fused_kernel(%arg0: i32, %arg1: memref<1x128x32xbf16, #tpu.memory_space<vmem>>, %arg2: memref<32x1280xbf16, #tpu.memory_space<vmem>>, %arg3: memref<1x1280xf32, #tpu.memory_space<vmem>>, %arg4: memref<1x1280x512xbf16, #tpu.memory_space<vmem>>, %arg5: memref<1x1x512xf32, #tpu.memory_space<vmem>>, %arg6: memref<1x2x512xf32, #tpu.memory_space<vmem>>) attributes {dimension_semantics = [#tpu.dimension_semantics<parallel>], iteration_bounds = array<i64: 2>, scalar_prefetch = 0 : i64, scratch_operands = 0 : i64, tpu.core_type = #tpu.core_type<tc>, window_params = [{transform_indices = @transform_0, window_bounds = array<i64: 1, 128, 32>}, {pipeline_mode = #tpu.pipeline_mode<synchronous>, transform_indices = @transform_1, window_bounds = array<i64: 32, 1280>}, {pipeline_mode = #tpu.pipeline_mode<synchronous>, transform_indices = @transform_2, window_bounds = array<i64: 1, 1280>}, {transform_indices = @transform_3, window_bounds = array<i64: 1, 1280, 512>}, {transform_indices = @transform_4, window_bounds = array<i64: 1, 1, 512>}, {transform_indices = @transform_5, window_bounds = array<i64: 1, 2, 512>}]} {
    %c0 = arith.constant 0 : index
    %c0_0 = arith.constant 0 : index
    %c0_1 = arith.constant 0 : index
    %0 = vector.load %arg1[%c0, %c0_0, %c0_1] : memref<1x128x32xbf16, #tpu.memory_space<vmem>>, vector<1x128x32xbf16>
    %1 = vector.shape_cast %0 : vector<1x128x32xbf16> to vector<128x32xbf16>
    %c0_2 = arith.constant 0 : index
    %c0_3 = arith.constant 0 : index
    %2 = vector.load %arg2[%c0_2, %c0_3] : memref<32x1280xbf16, #tpu.memory_space<vmem>>, vector<32x1280xbf16>
    %cst = arith.constant dense<0.000000e+00> : vector<128x1280xf32>
    %3 = tpu.matmul %1, %2, %cst {dimension_numbers = #tpu.dot_dimension_numbers<[1], [0], [0], [1], [0, 0, 1, 1], [], []>} : vector<128x32xbf16>, vector<32x1280xbf16>, vector<128x1280xf32> -> vector<128x1280xf32>
    %c0_4 = arith.constant 0 : index
    %c0_5 = arith.constant 0 : index
    %4 = vector.load %arg3[%c0_4, %c0_5] : memref<1x1280xf32, #tpu.memory_space<vmem>>, vector<1x1280xf32>
    %5 = vector.broadcast %4 : vector<1x1280xf32> to vector<128x1280xf32>
    %6 = arith.addf %3, %5 : vector<128x1280xf32>
    %7 = arith.negf %6 : vector<128x1280xf32>
    %8 = math.exp %7 : vector<128x1280xf32>
    %cst_6 = arith.constant 1.000000e+00 : f32
    %9 = vector.broadcast %cst_6 : f32 to vector<128x1280xf32>
    %10 = arith.addf %9, %8 : vector<128x1280xf32>
    %11 = arith.divf %9, %10 : vector<128x1280xf32>
    %12 = arith.mulf %6, %11 : vector<128x1280xf32>
    %13 = vector.shape_cast %12 : vector<128x1280xf32> to vector<2x64x1280xf32>
    %cst_7 = arith.constant dense<0.000000e+00> : vector<2x1280xf32>
    %14 = vector.multi_reduction <add>, %13, %cst_7 [1] : vector<2x64x1280xf32> to vector<2x1280xf32>
    %cst_8 = arith.constant 1.562500e-02 : f32
    %15 = vector.broadcast %cst_8 : f32 to vector<2x1280xf32>
    %16 = arith.mulf %14, %15 : vector<2x1280xf32>
    %17 = arith.truncf %16 : vector<2x1280xf32> to vector<2x1280xbf16>
    %c0_9 = arith.constant 0 : index
    %c0_10 = arith.constant 0 : index
    %c0_11 = arith.constant 0 : index
    %18 = vector.load %arg4[%c0_9, %c0_10, %c0_11] : memref<1x1280x512xbf16, #tpu.memory_space<vmem>>, vector<1x1280x512xbf16>
    %19 = vector.shape_cast %18 : vector<1x1280x512xbf16> to vector<1280x512xbf16>
    %cst_12 = arith.constant dense<0.000000e+00> : vector<2x512xf32>
    %20 = tpu.matmul %17, %19, %cst_12 {dimension_numbers = #tpu.dot_dimension_numbers<[1], [0], [0], [1], [0, 0, 1, 1], [], []>} : vector<2x1280xbf16>, vector<1280x512xbf16>, vector<2x512xf32> -> vector<2x512xf32>
    %c0_13 = arith.constant 0 : index
    %c0_14 = arith.constant 0 : index
    %c0_15 = arith.constant 0 : index
    %21 = vector.load %arg5[%c0_13, %c0_14, %c0_15] : memref<1x1x512xf32, #tpu.memory_space<vmem>>, vector<1x1x512xf32>
    %22 = vector.shape_cast %21 : vector<1x1x512xf32> to vector<1x512xf32>
    %23 = vector.broadcast %22 : vector<1x512xf32> to vector<2x512xf32>
    %24 = arith.addf %20, %23 : vector<2x512xf32>
    %c0_16 = arith.constant 0 : index
    %c0_17 = arith.constant 0 : index
    %c0_18 = arith.constant 0 : index
    %25 = vector.load %arg6[%c0_16, %c0_17, %c0_18] : memref<1x2x512xf32, #tpu.memory_space<vmem>>, vector<1x2x512xf32>
    %26 = vector.shape_cast %25 : vector<1x2x512xf32> to vector<2x512xf32>
    %27 = vector.shape_cast %24 : vector<2x512xf32> to vector<1x2x512xf32>
    tpu.vector_store %arg6[%c0_16, %c0_17, %c0_18], %27 {strides = array<i32>} : memref<1x2x512xf32, #tpu.memory_space<vmem>>, vector<1x2x512xf32>,
    return
  }
  func.func @transform_0(%arg0: i32) -> (i32, i32, i32) {
    %c0_i32 = arith.constant 0 : i32
    %c0_i32_0 = arith.constant 0 : i32
    %c0_i32_1 = arith.constant 0 : i32
    return %arg0, %c0_i32, %c0_i32_0 : i32, i32, i32
  }
  func.func @transform_1(%arg0: i32) -> (i32, i32) {
    %c0_i32 = arith.constant 0 : i32
    %c0_i32_0 = arith.constant 0 : i32
    %c0_i32_1 = arith.constant 0 : i32
    return %c0_i32, %c0_i32_0 : i32, i32
  }
  func.func @transform_2(%arg0: i32) -> (i32, i32) {
    %c0_i32 = arith.constant 0 : i32
    %c0_i32_0 = arith.constant 0 : i32
    %c0_i32_1 = arith.constant 0 : i32
    return %c0_i32, %c0_i32_0 : i32, i32
  }
  func.func @transform_3(%arg0: i32) -> (i32, i32, i32) {
    %c0_i32 = arith.constant 0 : i32
    %c0_i32_0 = arith.constant 0 : i32
    %c0_i32_1 = arith.constant 0 : i32
    return %arg0, %c0_i32, %c0_i32_0 : i32, i32, i32
  }
  func.func @transform_4(%arg0: i32) -> (i32, i32, i32) {
    %c0_i32 = arith.constant 0 : i32
    %c0_i32_0 = arith.constant 0 : i32
    %c0_i32_1 = arith.constant 0 : i32
    return %arg0, %c0_i32, %c0_i32_0 : i32, i32, i32
  }
  func.func @transform_5(%arg0: i32) -> (i32, i32, i32) {
    %c0_i32 = arith.constant 0 : i32
    %c0_i32_0 = arith.constant 0 : i32
    %c0_i32_1 = arith.constant 0 : i32
    return %arg0, %c0_i32, %c0_i32_0 : i32, i32, i32
  }
}

</mosaic_0001>

<llo_original>
// kernel: style2vec_v2_forward.1
$region0: #{style2vec_v2_forward.1}
  #allocation0 [shape = 'u32[]', space=smem, size = 0x4, offset = 0x4, fixed_abs, tag = 'smem constant byte address 0x4 - core index']
  #allocation1 [shape = 'u32[144,128]{1,0:T(1,128)}', space=vmem, size = 0x12000, scoped, tag = 'internal scratch']
  %s0 = inlined_call_operand.vmem [shape: bf16[2,128,32], index: 0, kind: input, shape index: {}]
  %s1 = inlined_call_operand.vmem [shape: bf16[32,1280], index: 1, kind: input, shape index: {}]
  %s2 = inlined_call_operand.vmem [shape: f32[1,1280], index: 2, kind: input, shape index: {}]
  %s3 = inlined_call_operand.vmem [shape: bf16[2,1280,512], index: 3, kind: input, shape index: {}]
  %s4 = inlined_call_operand.vmem [shape: f32[2,1,512], index: 4, kind: input, shape index: {}]
  %s5 = inlined_call_operand.vmem [shape: f32[2,2,512], index: 5, kind: output, shape index: {}]
  %s6 = sld [smem:[#allocation0]]
  $region53: #{style2vec_v2_forward.1} parent=0
    _
  %s8 = ssub.s32 1, %s6
  %s9 = scalar_select 0, %s8, %s6
  loop: start=0, step=1, limit=4
  $region2: #{style2vec_v2_forward.1} parent=0 // loop_pre_header
    _
  $region3: #{style2vec_v2_forward.1} parent=0 // loop_header
    %s11 = sphi 0, %s15
    %p12 = scmp.ge.s32.totalorder %s11, 4
    %s21 = sphi 0, %s23
    %s24 = sphi 0, %s21
    %s25 = sphi 0, %s24
    %s41 = sphi 0, %s25
    %s45 = sphi 0, %s45
    %s47 = sphi 0, %s45
    %s48 = sphi 0, %s47
    %s62 = sphi 0, %s48
    %s66 = sphi 0, %s66
    %s68 = sphi 0, %s66
    %s69 = sphi 0, %s68
    %s83 = sphi 0, %s69
    %s89 = sphi 0, %s91
    %s92 = sphi 0, %s89
    %s93 = sphi 0, %s92
    %s109 = sphi 0, %s93
    %s115 = sphi 0, %s117
    %s118 = sphi 0, %s115
    %s119 = sphi 0, %s118
    %s135 = sphi 0, %s119
    %s141 = sphi 0, %s143
    %s144 = sphi 0, %s141
    %s145 = sphi 0, %s144
    %s161 = sphi 0, %s145
  $region4: #{style2vec_v2_forward.1} parent=0 // loop_header_branch
    %14 = sbr.rel (%p12) target = $region8
  $region5: #{style2vec_v2_forward.1} parent=0 // loop_body
    %s16 = ssub.s32 %s11, 1
    %s17 = ssub.s32 %s11, 2
    %s18 = sadd.s32 %s11, 1
    %s19 = ssub.s32 %s11, %s18
    %p20 = scmp.eq.s32.totalorder %s19, 0
    %s22 = sadd.s32 %s21, 1
    %s23 = scalar_select %p20, %s21, %s22
    %p26 = pneg %p20
    %p27 = scmp.eq.s32.totalorder %s11, 1
    %p28 = por %p26, %p27
    %p29 = scmp.ne.s32.totalorder %s21, %s24
    %p30 = scmp.eq.s32.totalorder %s11, 0
    %p31 = por %p29, %p30
    %p32 = scmp.ne.s32.totalorder %s21, %s24
    %p33 = scmp.eq.s32.totalorder %s16, 1
    %p34 = por %p32, %p33
    %p35 = scmp.ne.s32.totalorder %s24, %s25
    %p36 = scmp.eq.s32.totalorder %s16, 0
    %p37 = por %p35, %p36
    %p38 = scmp.ne.s32.totalorder %s24, %s25
    %p39 = scmp.eq.s32.totalorder %s17, 1
    %p40 = por %p38, %p39
    %p42 = scmp.ne.s32.totalorder %s25, %s41
    %p43 = scmp.eq.s32.totalorder %s17, 0
    %p44 = por %p42, %p43
    %s46 = sadd.s32 %s45, 1
    %p49 = scmp.eq.s32.totalorder %s11, 1
    %p50 = scmp.ne.s32.totalorder %s45, %s47
    %p51 = scmp.eq.s32.totalorder %s11, 0
    %p52 = por %p50, %p51
    %p53 = scmp.ne.s32.totalorder %s45, %s47
    %p54 = scmp.eq.s32.totalorder %s16, 1
    %p55 = por %p53, %p54
    %p56 = scmp.ne.s32.totalorder %s47, %s48
    %p57 = scmp.eq.s32.totalorder %s16, 0
    %p58 = por %p56, %p57
    %p59 = scmp.ne.s32.totalorder %s47, %s48
    %p60 = scmp.eq.s32.totalorder %s17, 1
    %p61 = por %p59, %p60
    %p63 = scmp.ne.s32.totalorder %s48, %s62
    %p64 = scmp.eq.s32.totalorder %s17, 0
    %p65 = por %p63, %p64
    %s67 = sadd.s32 %s66, 1
    %p70 = scmp.eq.s32.totalorder %s11, 1
    %p71 = scmp.ne.s32.totalorder %s66, %s68
    %p72 = scmp.eq.s32.totalorder %s11, 0
    %p73 = por %p71, %p72
    %p74 = scmp.ne.s32.totalorder %s66, %s68
    %p75 = scmp.eq.s32.totalorder %s16, 1
    %p76 = por %p74, %p75
    %p77 = scmp.ne.s32.totalorder %s68, %s69
    %p78 = scmp.eq.s32.totalorder %s16, 0
    %p79 = por %p77, %p78
    %p80 = scmp.ne.s32.totalorder %s68, %s69
    %p81 = scmp.eq.s32.totalorder %s17, 1
    %p82 = por %p80, %p81
    %p84 = scmp.ne.s32.totalorder %s69, %s83
    %p85 = scmp.eq.s32.totalorder %s17, 0
    %p86 = por %p84, %p85
    %s87 = ssub.s32 %s11, %s18
    %p88 = scmp.eq.s32.totalorder %s87, 0
    %s90 = sadd.s32 %s89, 1
    %s91 = scalar_select %p88, %s89, %s90
    %p94 = pneg %p88
    %p95 = scmp.eq.s32.totalorder %s11, 1
    %p96 = por %p94, %p95
    %p97 = scmp.ne.s32.totalorder %s89, %s92
    %p98 = scmp.eq.s32.totalorder %s11, 0
    %p99 = por %p97, %p98
    %p100 = scmp.ne.s32.totalorder %s89, %s92
    %p101 = scmp.eq.s32.totalorder %s16, 1
    %p102 = por %p100, %p101
    %p103 = scmp.ne.s32.totalorder %s92, %s93
    %p104 = scmp.eq.s32.totalorder %s16, 0
    %p105 = por %p103, %p104
    %p106 = scmp.ne.s32.totalorder %s92, %s93
    %p107 = scmp.eq.s32.totalorder %s17, 1
    %p108 = por %p106, %p107
    %p110 = scmp.ne.s32.totalorder %s93, %s109
    %p111 = scmp.eq.s32.totalorder %s17, 0
    %p112 = por %p110, %p111
    %s113 = ssub.s32 %s11, %s18
    %p114 = scmp.eq.s32.totalorder %s113, 0
    %s116 = sadd.s32 %s115, 1
    %s117 = scalar_select %p114, %s115, %s116
    %p120 = pneg %p114
    %p121 = scmp.eq.s32.totalorder %s11, 1
    %p122 = por %p120, %p121
    %p123 = scmp.ne.s32.totalorder %s115, %s118
    %p124 = scmp.eq.s32.totalorder %s11, 0
    %p125 = por %p123, %p124
    %p126 = scmp.ne.s32.totalorder %s115, %s118
    %p127 = scmp.eq.s32.totalorder %s16, 1
    %p128 = por %p126, %p127
    %p129 = scmp.ne.s32.totalorder %s118, %s119
    %p130 = scmp.eq.s32.totalorder %s16, 0
    %p131 = por %p129, %p130
    %p132 = scmp.ne.s32.totalorder %s118, %s119
    %p133 = scmp.eq.s32.totalorder %s17, 1
    %p134 = por %p132, %p133
    %p136 = scmp.ne.s32.totalorder %s119, %s135
    %p137 = scmp.eq.s32.totalorder %s17, 0
    %p138 = por %p136, %p137
    %s139 = ssub.s32 %s11, %s18
    %p140 = scmp.eq.s32.totalorder %s139, 0
    %s142 = sadd.s32 %s141, 1
    %s143 = scalar_select %p140, %s141, %s142
    %p146 = pneg %p140
    %p147 = scmp.eq.s32.totalorder %s11, 1
    %p148 = por %p146, %p147
    %p149 = scmp.ne.s32.totalorder %s141, %s144
    %p150 = scmp.eq.s32.totalorder %s11, 0
    %p151 = por %p149, %p150
    %p152 = scmp.ne.s32.totalorder %s141, %s144
    %p153 = scmp.eq.s32.totalorder %s16, 1
    %p154 = por %p152, %p153
    %p155 = scmp.ne.s32.totalorder %s144, %s145
    %p156 = scmp.eq.s32.totalorder %s16, 0
    %p157 = por %p155, %p156
    %p158 = scmp.ne.s32.totalorder %s144, %s145
    %p159 = scmp.eq.s32.totalorder %s17, 1
    %p160 = por %p158, %p159
    %p162 = scmp.ne.s32.totalorder %s145, %s161
    %p163 = scmp.eq.s32.totalorder %s17, 0
    %p164 = por %p162, %p163
    %p165 = scmp.le.s32.totalorder 1, %s11
    %p166 = scmp.lt.s32.totalorder %s11, 3
    %p167 = pnand %p165, %p166
    %p168 = pneg %p167
    // Predicated region
    $region9: #{style2vec_v2_forward.1} parent=5 // pred_check
      _
    $region10: #{style2vec_v2_forward.1} parent=5 // pred_check_branch
      %170 = sbr.rel (%p167) target = $region12
    $region11: #{style2vec_v2_forward.1} parent=5 // pred_region
      %s171 = ssub.s32 %s11, 1
      // Predicated region
      $region13: #{style2vec_v2_forward.1} parent=11 // pred_check
        %p172 = pneg %p58
      $region14: #{style2vec_v2_forward.1} parent=11 // pred_check_branch
        %174 = sbr.rel (%p172) target = $region16
      $region15: #{style2vec_v2_forward.1} parent=11 // pred_region
        _
      $region16: #{style2vec_v2_forward.1} parent=11 // pred_fallthru
        _
      // Predicated region
      $region17: #{style2vec_v2_forward.1} parent=11 // pred_check
        %p175 = pneg %p79
      $region18: #{style2vec_v2_forward.1} parent=11 // pred_check_branch
        %177 = sbr.rel (%p175) target = $region20
      $region19: #{style2vec_v2_forward.1} parent=11 // pred_region
        _
      $region20: #{style2vec_v2_forward.1} parent=11 // pred_fallthru
        _
    $region12: #{style2vec_v2_forward.1} parent=5 // pred_fallthru
      _
    %p178 = scmp.lt.s32.totalorder %s11, 2
    // Predicated region
    $region21: #{style2vec_v2_forward.1} parent=5 // pred_check
      %p179 = pneg %p178
    $region22: #{style2vec_v2_forward.1} parent=5 // pred_check_branch
      %181 = sbr.rel (%p179) target = $region24
    $region23: #{style2vec_v2_forward.1} parent=5 // pred_region
      // Predicated region
      $region25: #{style2vec_v2_forward.1} parent=23 // pred_check
        %p182 = pneg %p31
      $region26: #{style2vec_v2_forward.1} parent=23 // pred_check_branch
        %184 = sbr.rel (%p182) target = $region28
      $region27: #{style2vec_v2_forward.1} parent=23 // pred_region
        %p185 = scmp.lt.s32.totalorder %s11, 1
        %s186 = scalar_select %p185, %s11, 1
        %s187 = smul.addr %s186, 16
        %s188 = smul.addr %s187, 4
        %s189 = scalar_lea.vmem %s0, %s188
      $region28: #{style2vec_v2_forward.1} parent=23 // pred_fallthru
        _
      // Predicated region
      $region29: #{style2vec_v2_forward.1} parent=23 // pred_check
        %p190 = pneg %p99
      $region30: #{style2vec_v2_forward.1} parent=23 // pred_check_branch
        %192 = sbr.rel (%p190) target = $region32
      $region31: #{style2vec_v2_forward.1} parent=23 // pred_region
        %p193 = scmp.lt.s32.totalorder %s11, 1
        %s194 = scalar_select %p193, %s11, 1
        %s195 = smul.addr %s194, 640
        %s196 = smul.addr %s195, 4
        %s197 = scalar_lea.vmem %s3, %s196
      $region32: #{style2vec_v2_forward.1} parent=23 // pred_fallthru
        _
      // Predicated region
      $region33: #{style2vec_v2_forward.1} parent=23 // pred_check
        %p198 = pneg %p125
      $region34: #{style2vec_v2_forward.1} parent=23 // pred_check_branch
        %200 = sbr.rel (%p198) target = $region36
      $region35: #{style2vec_v2_forward.1} parent=23 // pred_region
        %p201 = scmp.lt.s32.totalorder %s11, 1
        %s202 = scalar_select %p201, %s11, 1
        %s203 = smul.addr %s202, 4
        %s204 = scalar_lea.vmem %s4, %s203
      $region36: #{style2vec_v2_forward.1} parent=23 // pred_fallthru
        _
    $region24: #{style2vec_v2_forward.1} parent=5 // pred_fallthru
      _
    %p205 = scmp.le.s32.totalorder 1, %s11
    %p206 = scmp.lt.s32.totalorder %s11, 3
    %p207 = pnand %p205, %p206
    %p208 = pneg %p207
    // Predicated region
    $region37: #{style2vec_v2_forward.1} parent=5 // pred_check
      _
    $region38: #{style2vec_v2_forward.1} parent=5 // pred_check_branch
      %210 = sbr.rel (%p207) target = $region40
    $region39: #{style2vec_v2_forward.1} parent=5 // pred_region
      %s211 = ssub.s32 %s11, 1
      %p212 = scmp.lt.s32.totalorder %s16, 1
      %s213 = scalar_select %p212, %s16, 1
      %s214 = smul.addr %s213, 16
      %s215 = smul.addr %s214, 4
      %s216 = scalar_lea.vmem %s0, %s215
      %p217 = pneg %p37
      %p218 = pneg %p34
      %p219 = pneg %p58
      %p220 = pneg %p55
      %p221 = pneg %p79
      %p222 = pneg %p76
      %p223 = scmp.lt.s32.totalorder %s16, 1
      %s224 = scalar_select %p223, %s16, 1
      %s225 = smul.addr %s224, 640
      %s226 = smul.addr %s225, 4
      %s227 = scalar_lea.vmem %s3, %s226
      %p228 = pneg %p105
      %p229 = pneg %p102
      %p230 = scmp.lt.s32.totalorder %s16, 1
      %s231 = scalar_select %p230, %s16, 1
      %s232 = smul.addr %s231, 4
      %s233 = scalar_lea.vmem %s4, %s232
      %p234 = pneg %p131
      %p235 = pneg %p128
      %p236 = pneg %p157
      %p237 = pneg %p154
      %p238 = scmp.lt.s32.totalorder %s16, 1
      %s239 = scalar_select %p238, %s16, 1
      %s240 = smul.addr %s239, 4
      %s241 = smul.addr %s240, 2
      %s242 = scalar_lea.vmem %s5, %s241
      %p243 = scmp.lt.s32.totalorder %s16, 1
      %s244 = scalar_select %p243, %s16, 1
      %s245 = smul.addr %s244, 16
      %s246 = smul.addr %s245, 4
      %s247 = scalar_lea.vmem %s0, %s246
      %p248 = scmp.lt.s32.totalorder %s16, 1
      %s249 = scalar_select %p248, %s16, 1
      %s250 = smul.addr %s249, 640
      %s251 = smul.addr %s250, 4
      %s252 = scalar_lea.vmem %s3, %s251
      %p253 = scmp.lt.s32.totalorder %s16, 1
      %s254 = scalar_select %p253, %s16, 1
      %s255 = smul.addr %s254, 4
      %s256 = scalar_lea.vmem %s4, %s255
      %p257 = scmp.lt.s32.totalorder %s16, 1
      %s258 = scalar_select %p257, %s16, 1
      %s259 = smul.addr %s258, 4
      %s260 = smul.addr %s259, 2
      %s261 = scalar_lea.vmem %s5, %s260
      %v263 = vld [vmem:[%s247] sm:$0xf]
      %v264 = vld [vmem:[%s247 + $0x4] sm:$0xf]
      %v265 = vld [vmem:[%s247 + $0x8] sm:$0xf]
      %v266 = vld [vmem:[%s247 + $0xc] sm:$0xf]
      %v267 = vld [vmem:[%s247 + $0x10] sm:$0xf]
      %v268 = vld [vmem:[%s247 + $0x14] sm:$0xf]
      %v269 = vld [vmem:[%s247 + $0x18] sm:$0xf]
      %v270 = vld [vmem:[%s247 + $0x1c] sm:$0xf]
      %v271 = vld [vmem:[%s247 + $0x20] sm:$0xf]
      %v272 = vld [vmem:[%s247 + $0x24] sm:$0xf]
      %v273 = vld [vmem:[%s247 + $0x28] sm:$0xf]
      %v274 = vld [vmem:[%s247 + $0x2c] sm:$0xf]
      %v275 = vld [vmem:[%s247 + $0x30] sm:$0xf]
      %v276 = vld [vmem:[%s247 + $0x34] sm:$0xf]
      %v277 = vld [vmem:[%s247 + $0x38] sm:$0xf]
      %v278 = vld [vmem:[%s247 + $0x3c] sm:$0xf]
      %v279 = vld [vmem:[%s1] sm:$0xff]
      %v280 = vld [vmem:[%s1 + $0x8] sm:$0xff]
      %v281 = vld [vmem:[%s1 + $0x10] sm:$0xff]
      %v282 = vld [vmem:[%s1 + $0x18] sm:$0xff]
      %v283 = vld [vmem:[%s1 + $0x20] sm:$0xff]
      %v284 = vld [vmem:[%s1 + $0x28] sm:$0xff]
      %v285 = vld [vmem:[%s1 + $0x30] sm:$0xff]
      %v286 = vld [vmem:[%s1 + $0x38] sm:$0xff]
      %v287 = vld [vmem:[%s1 + $0x40] sm:$0xff]
      %v288 = vld [vmem:[%s1 + $0x48] sm:$0xff]
      %v289 = vld [vmem:[%s1 + $0x50] sm:$0xff]
      %v290 = vld [vmem:[%s1 + $0x58] sm:$0xff]
      %v291 = vld [vmem:[%s1 + $0x60] sm:$0xff]
      %v292 = vld [vmem:[%s1 + $0x68] sm:$0xff]
      %v293 = vld [vmem:[%s1 + $0x70] sm:$0xff]
      %v294 = vld [vmem:[%s1 + $0x78] sm:$0xff]
      %v295 = vld [vmem:[%s1 + $0x80] sm:$0xff]
      %v296 = vld [vmem:[%s1 + $0x88] sm:$0xff]
      %v297 = vld [vmem:[%s1 + $0x90] sm:$0xff]
      %v298 = vld [vmem:[%s1 + $0x98] sm:$0xff]
      %v299 = vld [vmem:[%s2] sm:$0xff]
      %v300 = vld [vmem:[%s2 + $0x8] sm:$0x3]
      %v303 = vlaneseq
      %v304 = vshrl.u32 %v303, 7
      %v305 = vsub.s32 0, %v304
      %v306 = vrot.slane %v299, %v305
      %v307 = vlaneseq
      %v308 = vshrl.u32 %v307, 7
      %v309 = vsub.s32 1, %v308
      %v310 = vrot.slane %v299, %v309
      %v311 = vlaneseq
      %v312 = vshrl.u32 %v311, 7
      %v313 = vsub.s32 2, %v312
      %v314 = vrot.slane %v299, %v313
      %v315 = vlaneseq
      %v316 = vshrl.u32 %v315, 7
      %v317 = vsub.s32 3, %v316
      %v318 = vrot.slane %v299, %v317
      %v319 = vlaneseq
      %v320 = vshrl.u32 %v319, 7
      %v321 = vsub.s32 4, %v320
      %v322 = vrot.slane %v299, %v321
      %v323 = vlaneseq
      %v324 = vshrl.u32 %v323, 7
      %v325 = vsub.s32 5, %v324
      %v326 = vrot.slane %v299, %v325
      %v327 = vlaneseq
      %v328 = vshrl.u32 %v327, 7
      %v329 = vsub.s32 6, %v328
      %v330 = vrot.slane %v299, %v329
      %v331 = vlaneseq
      %v332 = vshrl.u32 %v331, 7
      %v333 = vsub.s32 7, %v332
      %v334 = vrot.slane %v299, %v333
      %v335 = vlaneseq
      %v336 = vshrl.u32 %v335, 7
      %v337 = vsub.s32 0, %v336
      %v338 = vrot.slane %v300, %v337
      %v339 = vlaneseq
      %v340 = vshrl.u32 %v339, 7
      %v341 = vsub.s32 1, %v340
      %v342 = vrot.slane %v300, %v341
      %v369 = vunpack.c.l.b16 %v263
      %v370 = vunpack.c.l.b16 %v264
      %v371 = vunpack.c.l.b16 %v265
      %v372 = vunpack.c.l.b16 %v266
      %v373 = vunpack.c.l.b16 %v267
      %v374 = vunpack.c.l.b16 %v268
      %v375 = vunpack.c.l.b16 %v269
      %v376 = vunpack.c.l.b16 %v270
      %v377 = vunpack.c.l.b16 %v271
      %v378 = vunpack.c.l.b16 %v272
      %v379 = vunpack.c.l.b16 %v273
      %v380 = vunpack.c.l.b16 %v274
      %v381 = vunpack.c.l.b16 %v275
      %v382 = vunpack.c.l.b16 %v276
      %v383 = vunpack.c.l.b16 %v277
      %v384 = vunpack.c.l.b16 %v278
      %v385 = vpack.c.b16 %v370, %v369
      %v386 = vpack.c.b16 %v372, %v371
      %v387 = vpack.c.b16 %v374, %v373
      %v388 = vpack.c.b16 %v376, %v375
      %v389 = vpack.c.b16 %v378, %v377
      %v390 = vpack.c.b16 %v380, %v379
      %v391 = vpack.c.b16 %v382, %v381
      %v392 = vpack.c.b16 %v384, %v383
      %v413 = vunpack.c.l.b16 %v279
      %v414 = vunpack.c.h.b16 %v279
      %v415 = vunpack.c.l.b16 %v280
      %v416 = vunpack.c.h.b16 %v280
      %v417 = vunpack.c.l.b16 %v281
      %v418 = vunpack.c.h.b16 %v281
      %v419 = vunpack.c.l.b16 %v282
      %v420 = vunpack.c.h.b16 %v282
      %v421 = vunpack.c.l.b16 %v283
      %v422 = vunpack.c.h.b16 %v283
      %v423 = vunpack.c.l.b16 %v284
      %v424 = vunpack.c.h.b16 %v284
      %v425 = vunpack.c.l.b16 %v285
      %v426 = vunpack.c.h.b16 %v285
      %v427 = vunpack.c.l.b16 %v286
      %v428 = vunpack.c.h.b16 %v286
      %v429 = vunpack.c.l.b16 %v287
      %v430 = vunpack.c.h.b16 %v287
      %v431 = vunpack.c.l.b16 %v288
      %v432 = vunpack.c.h.b16 %v288
      %v433 = vunpack.c.l.b16 %v289
      %v434 = vunpack.c.h.b16 %v289
      %v435 = vunpack.c.l.b16 %v290
      %v436 = vunpack.c.h.b16 %v290
      %v437 = vunpack.c.l.b16 %v291
      %v438 = vunpack.c.h.b16 %v291
      %v439 = vunpack.c.l.b16 %v292
      %v440 = vunpack.c.h.b16 %v292
      %v441 = vunpack.c.l.b16 %v293
      %v442 = vunpack.c.h.b16 %v293
      %v443 = vunpack.c.l.b16 %v294
      %v444 = vunpack.c.h.b16 %v294
      %v445 = vunpack.c.l.b16 %v295
      %v446 = vunpack.c.h.b16 %v295
      %v447 = vunpack.c.l.b16 %v296
      %v448 = vunpack.c.h.b16 %v296
      %v449 = vunpack.c.l.b16 %v297
      %v450 = vunpack.c.h.b16 %v297
      %v451 = vunpack.c.l.b16 %v298
      %v452 = vunpack.c.h.b16 %v298
      %v453 = vpack.c.b16 %v423, %v413
      %v454 = vpack.c.b16 %v424, %v414
      %v455 = vpack.c.b16 %v425, %v415
      %v456 = vpack.c.b16 %v426, %v416
      %v457 = vpack.c.b16 %v427, %v417
      %v458 = vpack.c.b16 %v428, %v418
      %v459 = vpack.c.b16 %v429, %v419
      %v460 = vpack.c.b16 %v430, %v420
      %v461 = vpack.c.b16 %v431, %v421
      %v462 = vpack.c.b16 %v432, %v422
      %v463 = vpack.c.b16 %v443, %v433
      %v464 = vpack.c.b16 %v444, %v434
      %v465 = vpack.c.b16 %v445, %v435
      %v466 = vpack.c.b16 %v446, %v436
      %v467 = vpack.c.b16 %v447, %v437
      %v468 = vpack.c.b16 %v448, %v438
      %v469 = vpack.c.b16 %v449, %v439
      %v470 = vpack.c.b16 %v450, %v440
      %v471 = vpack.c.b16 %v451, %v441
      %v472 = vpack.c.b16 %v452, %v442
      %vm493 = vcmask 261120
      %v495 = vsel %vm493, %v385, 0
      %v498 = vsel %vm493, %v386, 0
      %v501 = vsel %vm493, %v387, 0
      %v504 = vsel %vm493, %v388, 0
      %v507 = vsel %vm493, %v389, 0
      %v510 = vsel %vm493, %v390, 0
      %v513 = vsel %vm493, %v391, 0
      %v516 = vsel %vm493, %v392, 0
      %518 = vmatprep.subr.bf16.mxu0 %v454
      %519 = vmatpush1.bf16.msra.mxu0 %v453
      %520 = vmatprep.subr.bf16.mxu0 %v464
      %521 = vmatpush1.bf16.msra.mxu0 %v463
      %522 = vmatprep.subr.bf16.mxu0 0
      %523 = vmatpush1.bf16.msra.mxu0 0
      %524 = vmatprep.subr.bf16.mxu0 0
      %525 = vmatpush1.bf16.msra.mxu0 0
      %526 = vmatprep.subr.bf16.mxu0 0
      %527 = vmatpush1.bf16.msra.mxu0 0
      %528 = vmatprep.subr.bf16.mxu0 0
      %529 = vmatpush1.bf16.msra.mxu0 0
      %530 = vmatprep.subr.bf16.mxu0 0
      %531 = vmatpush1.bf16.msra.mxu0 0
      %532 = vmatprep.subr.bf16.mxu0 0
      %533 = vmatpush1.bf16.msra.mxu0 0
      %534 = vmatprep.subr.bf16.mxu0 0
      %535 = vmatpush1.bf16.msra.mxu0 0
      %536 = vmatprep.subr.bf16.mxu0 0
      %537 = vmatpush1.bf16.msra.mxu0 0
      %538 = vmatprep.subr.bf16.mxu0 0
      %539 = vmatpush1.bf16.msra.mxu0 0
      %540 = vmatprep.subr.bf16.mxu0 0
      %541 = vmatpush1.bf16.msra.mxu0 0
      %542 = vmatprep.subr.bf16.mxu0 0
      %543 = vmatpush1.bf16.msra.mxu0 0
      %544 = vmatprep.subr.bf16.mxu0 0
      %545 = vmatpush1.bf16.msra.mxu0 0
      %546 = vmatprep.subr.bf16.mxu0 0
      %547 = vmatpush1.bf16.msra.mxu0 0
      %548 = vmatprep.subr.bf16.mxu0 0
      %549 = vmatpush1.bf16.msra.mxu0 0
      %550 = vmatprep.mubr.bf16.mxu0 0
      %551 = vmatmul.mubr.bf16.gmra.mrb[0].mxu0 %v495
      %v552 = vpop.f32.mrb[0].mxu0
      %v553 = vadd.f32 %v306, %v552
      %v554 = vpop.f32.mrb[0].mxu0
      %v555 = vadd.f32 %v310, %v554
      %v556 = vpop.f32.mrb[0].mxu0
      %v557 = vadd.f32 %v306, %v556
      %v558 = vpop.f32.mrb[0].mxu0
      %v559 = vadd.f32 %v310, %v558
      %560 = vmatprep.mubr.bf16.mxu0 0
      %561 = vmatmul.mubr.bf16.gmra.mrb[0].mxu0 %v498
      %v562 = vpop.f32.mrb[0].mxu0
      %v563 = vadd.f32 %v306, %v562
      %v564 = vpop.f32.mrb[0].mxu0
      %v565 = vadd.f32 %v310, %v564
      %v566 = vpop.f32.mrb[0].mxu0
      %v567 = vadd.f32 %v306, %v566
      %v568 = vpop.f32.mrb[0].mxu0
      %v569 = vadd.f32 %v310, %v568
      %570 = vmatprep.mubr.bf16.mxu0 0
      %571 = vmatmul.mubr.bf16.gmra.mrb[0].mxu0 %v501
      %v572 = vpop.f32.mrb[0].mxu0
      %v573 = vadd.f32 %v306, %v572
      %v574 = vpop.f32.mrb[0].mxu0
      %v575 = vadd.f32 %v310, %v574
      %v576 = vpop.f32.mrb[0].mxu0
      %v577 = vadd.f32 %v306, %v576
      %v578 = vpop.f32.mrb[0].mxu0
      %v579 = vadd.f32 %v310, %v578
      %580 = vmatprep.mubr.bf16.mxu0 0
      %581 = vmatmul.mubr.bf16.gmra.mrb[0].mxu0 %v504
      %v582 = vpop.f32.mrb[0].mxu0
      %v583 = vadd.f32 %v306, %v582
      %v584 = vpop.f32.mrb[0].mxu0
      %v585 = vadd.f32 %v310, %v584
      %v586 = vpop.f32.mrb[0].mxu0
      %v587 = vadd.f32 %v306, %v586
      %v588 = vpop.f32.mrb[0].mxu0
      %v589 = vadd.f32 %v310, %v588
      %590 = vmatprep.mubr.bf16.mxu0 0
      %591 = vmatmul.mubr.bf16.gmra.mrb[0].mxu0 %v507
      %v592 = vpop.f32.mrb[0].mxu0
      %v593 = vadd.f32 %v306, %v592
      %v594 = vpop.f32.mrb[0].mxu0
      %v595 = vadd.f32 %v310, %v594
      %v596 = vpop.f32.mrb[0].mxu0
      %v597 = vadd.f32 %v306, %v596
      %v598 = vpop.f32.mrb[0].mxu0
      %v599 = vadd.f32 %v310, %v598
      %600 = vmatprep.mubr.bf16.mxu0 0
      %601 = vmatmul.mubr.bf16.gmra.mrb[0].mxu0 %v510
      %v602 = vpop.f32.mrb[0].mxu0
      %v603 = vadd.f32 %v306, %v602
      %v604 = vpop.f32.mrb[0].mxu0
      %v605 = vadd.f32 %v310, %v604
      %v606 = vpop.f32.mrb[0].mxu0
      %v607 = vadd.f32 %v306, %v606
      %v608 = vpop.f32.mrb[0].mxu0
      %v609 = vadd.f32 %v310, %v608
      %610 = vmatprep.mubr.bf16.mxu0 0
      %611 = vmatmul.mubr.bf16.gmra.mrb[0].mxu0 %v513
      %v612 = vpop.f32.mrb[0].mxu0
      %v613 = vadd.f32 %v306, %v612
      %v614 = vpop.f32.mrb[0].mxu0
      %v615 = vadd.f32 %v310, %v614
      %v616 = vpop.f32.mrb[0].mxu0
      %v617 = vadd.f32 %v306, %v616
      %v618 = vpop.f32.mrb[0].mxu0
      %v619 = vadd.f32 %v310, %v618
      %620 = vmatprep.mubr.bf16.mxu0 0
      %621 = vmatmul.mubr.bf16.gmra.mrb[0].mxu0 %v516
      %v622 = vpop.f32.mrb[0].mxu0
      %v623 = vadd.f32 %v306, %v622
      %v624 = vpop.f32.mrb[0].mxu0
      %v625 = vadd.f32 %v310, %v624
      %v626 = vpop.f32.mrb[0].mxu0
      %v627 = vadd.f32 %v306, %v626
      %v628 = vpop.f32.mrb[0].mxu0
      %v629 = vadd.f32 %v310, %v628
      %630 = vdwg.mxu0
      %631 = vmatprep.subr.bf16.mxu0 %v456
      %632 = vmatpush1.bf16.msra.mxu0 %v455
      %633 = vmatprep.subr.bf16.mxu0 %v466
      %634 = vmatpush1.bf16.msra.mxu0 %v465
      %635 = vmatprep.subr.bf16.mxu0 0
      %636 = vmatpush1.bf16.msra.mxu0 0
      %637 = vmatprep.subr.bf16.mxu0 0
      %638 = vmatpush1.bf16.msra.mxu0 0
      %639 = vmatprep.subr.bf16.mxu0 0
      %640 = vmatpush1.bf16.msra.mxu0 0
      %641 = vmatprep.subr.bf16.mxu0 0
      %642 = vmatpush1.bf16.msra.mxu0 0
      %643 = vmatprep.subr.bf16.mxu0 0
      %644 = vmatpush1.bf16.msra.mxu0 0
      %645 = vmatprep.subr.bf16.mxu0 0
      %646 = vmatpush1.bf16.msra.mxu0 0
      %647 = vmatprep.subr.bf16.mxu0 0
      %648 = vmatpush1.bf16.msra.mxu0 0
      %649 = vmatprep.subr.bf16.mxu0 0
      %650 = vmatpush1.bf16.msra.mxu0 0
      %651 = vmatprep.subr.bf16.mxu0 0
      %652 = vmatpush1.bf16.msra.mxu0 0
      %653 = vmatprep.subr.bf16.mxu0 0
      %654 = vmatpush1.bf16.msra.mxu0 0
      %655 = vmatprep.subr.bf16.mxu0 0
      %656 = vmatpush1.bf16.msra.mxu0 0
      %657 = vmatprep.subr.bf16.mxu0 0
      %658 = vmatpush1.bf16.msra.mxu0 0
      %659 = vmatprep.subr.bf16.mxu0 0
      %660 = vmatpush1.bf16.msra.mxu0 0
      %661 = vmatprep.subr.bf16.mxu0 0
      %662 = vmatpush1.bf16.msra.mxu0 0
      %663 = vmatprep.mubr.bf16.mxu0 0
      %664 = vmatmul.mubr.bf16.gmra.mrb[0].mxu0 %v495
      %v665 = vpop.f32.mrb[0].mxu0
      %v666 = vadd.f32 %v314, %v665
      %v667 = vpop.f32.mrb[0].mxu0
      %v668 = vadd.f32 %v318, %v667
      %v669 = vpop.f32.mrb[0].mxu0
      %v670 = vadd.f32 %v314, %v669
      %v671 = vpop.f32.mrb[0].mxu0
      %v672 = vadd.f32 %v318, %v671
      %673 = vmatprep.mubr.bf16.mxu0 0
      %674 = vmatmul.mubr.bf16.gmra.mrb[0].mxu0 %v498
      %v675 = vpop.f32.mrb[0].mxu0
      %v676 = vadd.f32 %v314, %v675
      %v677 = vpop.f32.mrb[0].mxu0
      %v678 = vadd.f32 %v318, %v677
      %v679 = vpop.f32.mrb[0].mxu0
      %v680 = vadd.f32 %v314, %v679
      %v681 = vpop.f32.mrb[0].mxu0
      %v682 = vadd.f32 %v318, %v681
      %683 = vmatprep.mubr.bf16.mxu0 0
      %684 = vmatmul.mubr.bf16.gmra.mrb[0].mxu0 %v501
      %v685 = vpop.f32.mrb[0].mxu0
      %v686 = vadd.f32 %v314, %v685
      %v687 = vpop.f32.mrb[0].mxu0
      %v688 = vadd.f32 %v318, %v687
      %v689 = vpop.f32.mrb[0].mxu0
      %v690 = vadd.f32 %v314, %v689
      %v691 = vpop.f32.mrb[0].mxu0
      %v692 = vadd.f32 %v318, %v691
      %693 = vmatprep.mubr.bf16.mxu0 0
      %694 = vmatmul.mubr.bf16.gmra.mrb[0].mxu0 %v504
      %v695 = vpop.f32.mrb[0].mxu0
      %v696 = vadd.f32 %v314, %v695
      %v697 = vpop.f32.mrb[0].mxu0
      %v698 = vadd.f32 %v318, %v697
      %v699 = vpop.f32.mrb[0].mxu0
      %v700 = vadd.f32 %v314, %v699
      %v701 = vpop.f32.mrb[0].mxu0
      %v702 = vadd.f32 %v318, %v701
      %703 = vmatprep.mubr.bf16.mxu0 0
      %704 = vmatmul.mubr.bf16.gmra.mrb[0].mxu0 %v507
      %v705 = vpop.f32.mrb[0].mxu0
      %v706 = vadd.f32 %v314, %v705
      %v707 = vpop.f32.mrb[0].mxu0
      %v708 = vadd.f32 %v318, %v707
      %v709 = vpop.f32.mrb[0].mxu0
      %v710 = vadd.f32 %v314, %v709
      %v711 = vpop.f32.mrb[0].mxu0
      %v712 = vadd.f32 %v318, %v711
      %713 = vmatprep.mubr.bf16.mxu0 0
      %714 = vmatmul.mubr.bf16.gmra.mrb[0].mxu0 %v510
      %v715 = vpop.f32.mrb[0].mxu0
      %v716 = vadd.f32 %v314, %v715
      %v717 = vpop.f32.mrb[0].mxu0
      %v718 = vadd.f32 %v318, %v717
      %v719 = vpop.f32.mrb[0].mxu0
      %v720 = vadd.f32 %v314, %v719
      %v721 = vpop.f32.mrb[0].mxu0
      %v722 = vadd.f32 %v318, %v721
      %723 = vmatprep.mubr.bf16.mxu0 0
      %724 = vmatmul.mubr.bf16.gmra.mrb[0].mxu0 %v513
      %v725 = vpop.f32.mrb[0].mxu0
      %v726 = vadd.f32 %v314, %v725
      %v727 = vpop.f32.mrb[0].mxu0
      %v728 = vadd.f32 %v318, %v727
      %v729 = vpop.f32.mrb[0].mxu0
      %v730 = vadd.f32 %v314, %v729
      %v731 = vpop.f32.mrb[0].mxu0
      %v732 = vadd.f32 %v318, %v731
      %733 = vmatprep.mubr.bf16.mxu0 0
      %734 = vmatmul.mubr.bf16.gmra.mrb[0].mxu0 %v516
      %v735 = vpop.f32.mrb[0].mxu0
      %v736 = vadd.f32 %v314, %v735
      %v737 = vpop.f32.mrb[0].mxu0
      %v738 = vadd.f32 %v318, %v737
      %v739 = vpop.f32.mrb[0].mxu0
      %v740 = vadd.f32 %v314, %v739
      %v741 = vpop.f32.mrb[0].mxu0
      %v742 = vadd.f32 %v318, %v741
      %743 = vdwg.mxu0
      %744 = vmatprep.subr.bf16.mxu0 %v458
      %745 = vmatpush1.bf16.msra.mxu0 %v457
      %746 = vmatprep.subr.bf16.mxu0 %v468
      %747 = vmatpush1.bf16.msra.mxu0 %v467
      %748 = vmatprep.subr.bf16.mxu0 0
      %749 = vmatpush1.bf16.msra.mxu0 0
      %750 = vmatprep.subr.bf16.mxu0 0
      %751 = vmatpush1.bf16.msra.mxu0 0
      %752 = vmatprep.subr.bf16.mxu0 0
      %753 = vmatpush1.bf16.msra.mxu0 0
      %754 = vmatprep.subr.bf16.mxu0 0
      %755 = vmatpush1.bf16.msra.mxu0 0
      %756 = vmatprep.subr.bf16.mxu0 0
      %757 = vmatpush1.bf16.msra.mxu0 0
      %758 = vmatprep.subr.bf16.mxu0 0
      %759 = vmatpush1.bf16.msra.mxu0 0
      %760 = vmatprep.subr.bf16.mxu0 0
      %761 = vmatpush1.bf16.msra.mxu0 0
      %762 = vmatprep.subr.bf16.mxu0 0
      %763 = vmatpush1.bf16.msra.mxu0 0
      %764 = vmatprep.subr.bf16.mxu0 0
      %765 = vmatpush1.bf16.msra.mxu0 0
      %766 = vmatprep.subr.bf16.mxu0 0
      %767 = vmatpush1.bf16.msra.mxu0 0
      %768 = vmatprep.subr.bf16.mxu0 0
      %769 = vmatpush1.bf16.msra.mxu0 0
      %770 = vmatprep.subr.bf16.mxu0 0
      %771 = vmatpush1.bf16.msra.mxu0 0
      %772 = vmatprep.subr.bf16.mxu0 0
      %773 = vmatpush1.bf16.msra.mxu0 0
      %774 = vmatprep.subr.bf16.mxu0 0
      %775 = vmatpush1.bf16.msra.mxu0 0
      %776 = vmatprep.mubr.bf16.mxu0 0
      %777 = vmatmul.mubr.bf16.gmra.mrb[0].mxu0 %v495
      %v778 = vpop.f32.mrb[0].mxu0
      %v779 = vadd.f32 %v322, %v778
      %v780 = vpop.f32.mrb[0].mxu0
      %v781 = vadd.f32 %v326, %v780
      %v782 = vpop.f32.mrb[0].mxu0
      %v783 = vadd.f32 %v322, %v782
      %v784 = vpop.f32.mrb[0].mxu0
      %v785 = vadd.f32 %v326, %v784
      %786 = vmatprep.mubr.bf16.mxu0 0
      %787 = vmatmul.mubr.bf16.gmra.mrb[0].mxu0 %v498
      %v788 = vpop.f32.mrb[0].mxu0
      %v789 = vadd.f32 %v322, %v788
      %v790 = vpop.f32.mrb[0].mxu0
      %v791 = vadd.f32 %v326, %v790
      %v792 = vpop.f32.mrb[0].mxu0
      %v793 = vadd.f32 %v322, %v792
      %v794 = vpop.f32.mrb[0].mxu0
      %v795 = vadd.f32 %v326, %v794
      %796 = vmatprep.mubr.bf16.mxu0 0
      %797 = vmatmul.mubr.bf16.gmra.mrb[0].mxu0 %v501
      %v798 = vpop.f32.mrb[0].mxu0
      %v799 = vadd.f32 %v322, %v798
      %v800 = vpop.f32.mrb[0].mxu0
      %v801 = vadd.f32 %v326, %v800
      %v802 = vpop.f32.mrb[0].mxu0
      %v803 = vadd.f32 %v322, %v802
      %v804 = vpop.f32.mrb[0].mxu0
      %v805 = vadd.f32 %v326, %v804
      %806 = vmatprep.mubr.bf16.mxu0 0
      %807 = vmatmul.mubr.bf16.gmra.mrb[0].mxu0 %v504
      %v808 = vpop.f32.mrb[0].mxu0
      %v809 = vadd.f32 %v322, %v808
      %v810 = vpop.f32.mrb[0].mxu0
      %v811 = vadd.f32 %v326, %v810
      %v812 = vpop.f32.mrb[0].mxu0
      %v813 = vadd.f32 %v322, %v812
      %v814 = vpop.f32.mrb[0].mxu0
      %v815 = vadd.f32 %v326, %v814
      %816 = vmatprep.mubr.bf16.mxu0 0
      %817 = vmatmul.mubr.bf16.gmra.mrb[0].mxu0 %v507
      %v818 = vpop.f32.mrb[0].mxu0
      %v819 = vadd.f32 %v322, %v818
      %v820 = vpop.f32.mrb[0].mxu0
      %v821 = vadd.f32 %v326, %v820
      %v822 = vpop.f32.mrb[0].mxu0
      %v823 = vadd.f32 %v322, %v822
      %v824 = vpop.f32.mrb[0].mxu0
      %v825 = vadd.f32 %v326, %v824
      %826 = vmatprep.mubr.bf16.mxu0 0
      %827 = vmatmul.mubr.bf16.gmra.mrb[0].mxu0 %v510
      %v828 = vpop.f32.mrb[0].mxu0
      %v829 = vadd.f32 %v322, %v828
      %v830 = vpop.f32.mrb[0].mxu0
      %v831 = vadd.f32 %v326, %v830
      %v832 = vpop.f32.mrb[0].mxu0
      %v833 = vadd.f32 %v322, %v832
      %v834 = vpop.f32.mrb[0].mxu0
      %v835 = vadd.f32 %v326, %v834
      %836 = vmatprep.mubr.bf16.mxu0 0
      %837 = vmatmul.mubr.bf16.gmra.mrb[0].mxu0 %v513
      %v838 = vpop.f32.mrb[0].mxu0
      %v839 = vadd.f32 %v322, %v838
      %v840 = vpop.f32.mrb[0].mxu0
      %v841 = vadd.f32 %v326, %v840
      %v842 = vpop.f32.mrb[0].mxu0
      %v843 = vadd.f32 %v322, %v842
      %v844 = vpop.f32.mrb[0].mxu0
      %v845 = vadd.f32 %v326, %v844
      %846 = vmatprep.mubr.bf16.mxu0 0
      %847 = vmatmul.mubr.bf16.gmra.mrb[0].mxu0 %v516
      %v848 = vpop.f32.mrb[0].mxu0
      %v849 = vadd.f32 %v322, %v848
      %v850 = vpop.f32.mrb[0].mxu0
      %v851 = vadd.f32 %v326, %v850
      %v852 = vpop.f32.mrb[0].mxu0
      %v853 = vadd.f32 %v322, %v852
      %v854 = vpop.f32.mrb[0].mxu0
      %v855 = vadd.f32 %v326, %v854
      %856 = vdwg.mxu0
      %857 = vmatprep.subr.bf16.mxu0 %v460
      %858 = vmatpush1.bf16.msra.mxu0 %v459
      %859 = vmatprep.subr.bf16.mxu0 %v470
      %860 = vmatpush1.bf16.msra.mxu0 %v469
      %861 = vmatprep.subr.bf16.mxu0 0
      %862 = vmatpush1.bf16.msra.mxu0 0
      %863 = vmatprep.subr.bf16.mxu0 0
      %864 = vmatpush1.bf16.msra.mxu0 0
      %865 = vmatprep.subr.bf16.mxu0 0
      %866 = vmatpush1.bf16.msra.mxu0 0
      %867 = vmatprep.subr.bf16.mxu0 0
      %868 = vmatpush1.bf16.msra.mxu0 0
      %869 = vmatprep.subr.bf16.mxu0 0
      %870 = vmatpush1.bf16.msra.mxu0 0
      %871 = vmatprep.subr.bf16.mxu0 0
      %872 = vmatpush1.bf16.msra.mxu0 0
      %873 = vmatprep.subr.bf16.mxu0 0
      %874 = vmatpush1.bf16.msra.mxu0 0
      %875 = vmatprep.subr.bf16.mxu0 0
      %876 = vmatpush1.bf16.msra.mxu0 0
      %877 = vmatprep.subr.bf16.mxu0 0
      %878 = vmatpush1.bf16.msra.mxu0 0
      %879 = vmatprep.subr.bf16.mxu0 0
      %880 = vmatpush1.bf16.msra.mxu0 0
      %881 = vmatprep.subr.bf16.mxu0 0
      %882 = vmatpush1.bf16.msra.mxu0 0
      %883 = vmatprep.subr.bf16.mxu0 0
      %884 = vmatpush1.bf16.msra.mxu0 0
      %885 = vmatprep.subr.bf16.mxu0 0
      %886 = vmatpush1.bf16.msra.mxu0 0
      %887 = vmatprep.subr.bf16.mxu0 0
      %888 = vmatpush1.bf16.msra.mxu0 0
      %889 = vmatprep.mubr.bf16.mxu0 0
      %890 = vmatmul.mubr.bf16.gmra.mrb[0].mxu0 %v495
      %v891 = vpop.f32.mrb[0].mxu0
      %v892 = vadd.f32 %v330, %v891
      %v893 = vpop.f32.mrb[0].mxu0
      %v894 = vadd.f32 %v334, %v893
      %v895 = vpop.f32.mrb[0].mxu0
      %v896 = vadd.f32 %v330, %v895
      %v897 = vpop.f32.mrb[0].mxu0
      %v898 = vadd.f32 %v334, %v897
      %899 = vmatprep.mubr.bf16.mxu0 0
      %900 = vmatmul.mubr.bf16.gmra.mrb[0].mxu0 %v498
      %v901 = vpop.f32.mrb[0].mxu0
      %v902 = vadd.f32 %v330, %v901
      %v903 = vpop.f32.mrb[0].mxu0
      %v904 = vadd.f32 %v334, %v903
      %v905 = vpop.f32.mrb[0].mxu0
      %v906 = vadd.f32 %v330, %v905
      %v907 = vpop.f32.mrb[0].mxu0
      %v908 = vadd.f32 %v334, %v907
      %909 = vmatprep.mubr.bf16.mxu0 0
      %910 = vmatmul.mubr.bf16.gmra.mrb[0].mxu0 %v501
      %v911 = vpop.f32.mrb[0].mxu0
      %v912 = vadd.f32 %v330, %v911
      %v913 = vpop.f32.mrb[0].mxu0
      %v914 = vadd.f32 %v334, %v913
      %v915 = vpop.f32.mrb[0].mxu0
      %v916 = vadd.f32 %v330, %v915
      %v917 = vpop.f32.mrb[0].mxu0
      %v918 = vadd.f32 %v334, %v917
      %919 = vmatprep.mubr.bf16.mxu0 0
      %920 = vmatmul.mubr.bf16.gmra.mrb[0].mxu0 %v504
      %v921 = vpop.f32.mrb[0].mxu0
      %v922 = vadd.f32 %v330, %v921
      %v923 = vpop.f32.mrb[0].mxu0
      %v924 = vadd.f32 %v334, %v923
      %v925 = vpop.f32.mrb[0].mxu0
      %v926 = vadd.f32 %v330, %v925
      %v927 = vpop.f32.mrb[0].mxu0
      %v928 = vadd.f32 %v334, %v927
      %929 = vmatprep.mubr.bf16.mxu0 0
      %930 = vmatmul.mubr.bf16.gmra.mrb[0].mxu0 %v507
      %v931 = vpop.f32.mrb[0].mxu0
      %v932 = vadd.f32 %v330, %v931
      %v933 = vpop.f32.mrb[0].mxu0
      %v934 = vadd.f32 %v334, %v933
      %v935 = vpop.f32.mrb[0].mxu0
      %v936 = vadd.f32 %v330, %v935
      %v937 = vpop.f32.mrb[0].mxu0
      %v938 = vadd.f32 %v334, %v937
      %939 = vmatprep.mubr.bf16.mxu0 0
      %940 = vmatmul.mubr.bf16.gmra.mrb[0].mxu0 %v510
      %v941 = vpop.f32.mrb[0].mxu0
      %v942 = vadd.f32 %v330, %v941
      %v943 = vpop.f32.mrb[0].mxu0
      %v944 = vadd.f32 %v334, %v943
      %v945 = vpop.f32.mrb[0].mxu0
      %v946 = vadd.f32 %v330, %v945
      %v947 = vpop.f32.mrb[0].mxu0
      %v948 = vadd.f32 %v334, %v947
      %949 = vmatprep.mubr.bf16.mxu0 0
      %950 = vmatmul.mubr.bf16.gmra.mrb[0].mxu0 %v513
      %v951 = vpop.f32.mrb[0].mxu0
      %v952 = vadd.f32 %v330, %v951
      %v953 = vpop.f32.mrb[0].mxu0
      %v954 = vadd.f32 %v334, %v953
      %v955 = vpop.f32.mrb[0].mxu0
      %v956 = vadd.f32 %v330, %v955
      %v957 = vpop.f32.mrb[0].mxu0
      %v958 = vadd.f32 %v334, %v957
      %959 = vmatprep.mubr.bf16.mxu0 0
      %960 = vmatmul.mubr.bf16.gmra.mrb[0].mxu0 %v516
      %v961 = vpop.f32.mrb[0].mxu0
      %v962 = vadd.f32 %v330, %v961
      %v963 = vpop.f32.mrb[0].mxu0
      %v964 = vadd.f32 %v334, %v963
      %v965 = vpop.f32.mrb[0].mxu0
      %v966 = vadd.f32 %v330, %v965
      %v967 = vpop.f32.mrb[0].mxu0
      %v968 = vadd.f32 %v334, %v967
      %969 = vdwg.mxu0
      %970 = vmatprep.subr.bf16.mxu0 %v462
      %971 = vmatpush1.bf16.msra.mxu0 %v461
      %972 = vmatprep.subr.bf16.mxu0 %v472
      %973 = vmatpush1.bf16.msra.mxu0 %v471
      %974 = vmatprep.subr.bf16.mxu0 0
      %975 = vmatpush1.bf16.msra.mxu0 0
      %976 = vmatprep.subr.bf16.mxu0 0
      %977 = vmatpush1.bf16.msra.mxu0 0
      %978 = vmatprep.subr.bf16.mxu0 0
      %979 = vmatpush1.bf16.msra.mxu0 0
      %980 = vmatprep.subr.bf16.mxu0 0
      %981 = vmatpush1.bf16.msra.mxu0 0
      %982 = vmatprep.subr.bf16.mxu0 0
      %983 = vmatpush1.bf16.msra.mxu0 0
      %984 = vmatprep.subr.bf16.mxu0 0
      %985 = vmatpush1.bf16.msra.mxu0 0
      %986 = vmatprep.subr.bf16.mxu0 0
      %987 = vmatpush1.bf16.msra.mxu0 0
      %988 = vmatprep.subr.bf16.mxu0 0
      %989 = vmatpush1.bf16.msra.mxu0 0
      %990 = vmatprep.subr.bf16.mxu0 0
      %991 = vmatpush1.bf16.msra.mxu0 0
      %992 = vmatprep.subr.bf16.mxu0 0
      %993 = vmatpush1.bf16.msra.mxu0 0
      %994 = vmatprep.subr.bf16.mxu0 0
      %995 = vmatpush1.bf16.msra.mxu0 0
      %996 = vmatprep.subr.bf16.mxu0 0
      %997 = vmatpush1.bf16.msra.mxu0 0
      %998 = vmatprep.subr.bf16.mxu0 0
      %999 = vmatpush1.bf16.msra.mxu0 0
      %1000 = vmatprep.subr.bf16.mxu0 0
      %1001 = vmatpush1.bf16.msra.mxu0 0
      %1002 = vmatprep.mubr.bf16.mxu0 0
      %1003 = vmatmul.mubr.bf16.gmra.mrb[0].mxu0 %v495
      %v1004 = vpop.f32.mrb[0].mxu0
      %v1005 = vadd.f32 %v338, %v1004
      %v1006 = vpop.f32.mrb[0].mxu0
      %v1007 = vadd.f32 %v342, %v1006
      %v1008 = vpop.f32.mrb[0].mxu0
      %v1009 = vadd.f32 %v338, %v1008
      %v1010 = vpop.f32.mrb[0].mxu0
      %v1011 = vadd.f32 %v342, %v1010
      %1012 = vmatprep.mubr.bf16.mxu0 0
      %1013 = vmatmul.mubr.bf16.gmra.mrb[0].mxu0 %v498
      %v1014 = vpop.f32.mrb[0].mxu0
      %v1015 = vadd.f32 %v338, %v1014
      %v1016 = vpop.f32.mrb[0].mxu0
      %v1017 = vadd.f32 %v342, %v1016
      %v1018 = vpop.f32.mrb[0].mxu0
      %v1019 = vadd.f32 %v338, %v1018
      %v1020 = vpop.f32.mrb[0].mxu0
      %v1021 = vadd.f32 %v342, %v1020
      %1022 = vmatprep.mubr.bf16.mxu0 0
      %1023 = vmatmul.mubr.bf16.gmra.mrb[0].mxu0 %v501
      %v1024 = vpop.f32.mrb[0].mxu0
      %v1025 = vadd.f32 %v338, %v1024
      %v1026 = vpop.f32.mrb[0].mxu0
      %v1027 = vadd.f32 %v342, %v1026
      %v1028 = vpop.f32.mrb[0].mxu0
      %v1029 = vadd.f32 %v338, %v1028
      %v1030 = vpop.f32.mrb[0].mxu0
      %v1031 = vadd.f32 %v342, %v1030
      %1032 = vmatprep.mubr.bf16.mxu0 0
      %1033 = vmatmul.mubr.bf16.gmra.mrb[0].mxu0 %v504
      %v1034 = vpop.f32.mrb[0].mxu0
      %v1035 = vadd.f32 %v338, %v1034
      %v1036 = vpop.f32.mrb[0].mxu0
      %v1037 = vadd.f32 %v342, %v1036
      %v1038 = vpop.f32.mrb[0].mxu0
      %v1039 = vadd.f32 %v338, %v1038
      %v1040 = vpop.f32.mrb[0].mxu0
      %v1041 = vadd.f32 %v342, %v1040
      %1042 = vmatprep.mubr.bf16.mxu0 0
      %1043 = vmatmul.mubr.bf16.gmra.mrb[0].mxu0 %v507
      %v1044 = vpop.f32.mrb[0].mxu0
      %v1045 = vadd.f32 %v338, %v1044
      %v1046 = vpop.f32.mrb[0].mxu0
      %v1047 = vadd.f32 %v342, %v1046
      %v1048 = vpop.f32.mrb[0].mxu0
      %v1049 = vadd.f32 %v338, %v1048
      %v1050 = vpop.f32.mrb[0].mxu0
      %v1051 = vadd.f32 %v342, %v1050
      %1052 = vmatprep.mubr.bf16.mxu0 0
      %1053 = vmatmul.mubr.bf16.gmra.mrb[0].mxu0 %v510
      %v1054 = vpop.f32.mrb[0].mxu0
      %v1055 = vadd.f32 %v338, %v1054
      %v1056 = vpop.f32.mrb[0].mxu0
      %v1057 = vadd.f32 %v342, %v1056
      %v1058 = vpop.f32.mrb[0].mxu0
      %v1059 = vadd.f32 %v338, %v1058
      %v1060 = vpop.f32.mrb[0].mxu0
      %v1061 = vadd.f32 %v342, %v1060
      %1062 = vmatprep.mubr.bf16.mxu0 0
      %1063 = vmatmul.mubr.bf16.gmra.mrb[0].mxu0 %v513
      %v1064 = vpop.f32.mrb[0].mxu0
      %v1065 = vadd.f32 %v338, %v1064
      %v1066 = vpop.f32.mrb[0].mxu0
      %v1067 = vadd.f32 %v342, %v1066
      %v1068 = vpop.f32.mrb[0].mxu0
      %v1069 = vadd.f32 %v338, %v1068
      %v1070 = vpop.f32.mrb[0].mxu0
      %v1071 = vadd.f32 %v342, %v1070
      %1072 = vmatprep.mubr.bf16.mxu0 0
      %1073 = vmatmul.mubr.bf16.gmra.mrb[0].mxu0 %v516
      %v1074 = vpop.f32.mrb[0].mxu0
      %v1075 = vadd.f32 %v338, %v1074
      %v1076 = vpop.f32.mrb[0].mxu0
      %v1077 = vadd.f32 %v342, %v1076
      %v1078 = vpop.f32.mrb[0].mxu0
      %v1079 = vadd.f32 %v338, %v1078
      %v1080 = vpop.f32.mrb[0].mxu0
      %v1081 = vadd.f32 %v342, %v1080
      %1082 = vdwg.mxu0
      %v1083 = vxor.u32 %v553, 2147483648
      %v1084 = vxor.u32 %v555, 2147483648
      %v1085 = vxor.u32 %v666, 2147483648
      %v1086 = vxor.u32 %v668, 2147483648
      %v1087 = vxor.u32 %v779, 2147483648
      %v1088 = vxor.u32 %v781, 2147483648
      %v1089 = vxor.u32 %v892, 2147483648
      %v1090 = vxor.u32 %v894, 2147483648
      %v1091 = vxor.u32 %v1005, 2147483648
      %v1092 = vxor.u32 %v1007, 2147483648
      %v1093 = vxor.u32 %v557, 2147483648
      %v1094 = vxor.u32 %v559, 2147483648
      %v1095 = vxor.u32 %v670, 2147483648
      %v1096 = vxor.u32 %v672, 2147483648
      %v1097 = vxor.u32 %v783, 2147483648
      %v1098 = vxor.u32 %v785, 2147483648
      %v1099 = vxor.u32 %v896, 2147483648
      %v1100 = vxor.u32 %v898, 2147483648
      %v1101 = vxor.u32 %v1009, 2147483648
      %v1102 = vxor.u32 %v1011, 2147483648
      %v1103 = vxor.u32 %v563, 2147483648
      %v1104 = vxor.u32 %v565, 2147483648
      %v1105 = vxor.u32 %v676, 2147483648
      %v1106 = vxor.u32 %v678, 2147483648
      %v1107 = vxor.u32 %v789, 2147483648
      %v1108 = vxor.u32 %v791, 2147483648
      %v1109 = vxor.u32 %v902, 2147483648
      %v1110 = vxor.u32 %v904, 2147483648
      %v1111 = vxor.u32 %v1015, 2147483648
      %v1112 = vxor.u32 %v1017, 2147483648
      %v1113 = vxor.u32 %v567, 2147483648
      %v1114 = vxor.u32 %v569, 2147483648
      %v1115 = vxor.u32 %v680, 2147483648
      %v1116 = vxor.u32 %v682, 2147483648
      %v1117 = vxor.u32 %v793, 2147483648
      %v1118 = vxor.u32 %v795, 2147483648
      %v1119 = vxor.u32 %v906, 2147483648
      %v1120 = vxor.u32 %v908, 2147483648
      %v1121 = vxor.u32 %v1019, 2147483648
      %v1122 = vxor.u32 %v1021, 2147483648
      %v1123 = vxor.u32 %v573, 2147483648
      %v1124 = vxor.u32 %v575, 2147483648
      %v1125 = vxor.u32 %v686, 2147483648
      %v1126 = vxor.u32 %v688, 2147483648
      %v1127 = vxor.u32 %v799, 2147483648
      %v1128 = vxor.u32 %v801, 2147483648
      %v1129 = vxor.u32 %v912, 2147483648
      %v1130 = vxor.u32 %v914, 2147483648
      %v1131 = vxor.u32 %v1025, 2147483648
      %v1132 = vxor.u32 %v1027, 2147483648
      %v1133 = vxor.u32 %v577, 2147483648
      %v1134 = vxor.u32 %v579, 2147483648
      %v1135 = vxor.u32 %v690, 2147483648
      %v1136 = vxor.u32 %v692, 2147483648
      %v1137 = vxor.u32 %v803, 2147483648
      %v1138 = vxor.u32 %v805, 2147483648
      %v1139 = vxor.u32 %v916, 2147483648
      %v1140 = vxor.u32 %v918, 2147483648
      %v1141 = vxor.u32 %v1029, 2147483648
      %v1142 = vxor.u32 %v1031, 2147483648
      %v1143 = vxor.u32 %v583, 2147483648
      %v1144 = vxor.u32 %v585, 2147483648
      %v1145 = vxor.u32 %v696, 2147483648
      %v1146 = vxor.u32 %v698, 2147483648
      %v1147 = vxor.u32 %v809, 2147483648
      %v1148 = vxor.u32 %v811, 2147483648
      %v1149 = vxor.u32 %v922, 2147483648
      %v1150 = vxor.u32 %v924, 2147483648
      %v1151 = vxor.u32 %v1035, 2147483648
      %v1152 = vxor.u32 %v1037, 2147483648
      %v1153 = vxor.u32 %v587, 2147483648
      %v1154 = vxor.u32 %v589, 2147483648
      %v1155 = vxor.u32 %v700, 2147483648
      %v1156 = vxor.u32 %v702, 2147483648
      %v1157 = vxor.u32 %v813, 2147483648
      %v1158 = vxor.u32 %v815, 2147483648
      %v1159 = vxor.u32 %v926, 2147483648
      %v1160 = vxor.u32 %v928, 2147483648
      %v1161 = vxor.u32 %v1039, 2147483648
      %v1162 = vxor.u32 %v1041, 2147483648
      %v1163 = vxor.u32 %v593, 2147483648
      %v1164 = vxor.u32 %v595, 2147483648
      %v1165 = vxor.u32 %v706, 2147483648
      %v1166 = vxor.u32 %v708, 2147483648
      %v1167 = vxor.u32 %v819, 2147483648
      %v1168 = vxor.u32 %v821, 2147483648
      %v1169 = vxor.u32 %v932, 2147483648
      %v1170 = vxor.u32 %v934, 2147483648
      %v1171 = vxor.u32 %v1045, 2147483648
      %v1172 = vxor.u32 %v1047, 2147483648
      %v1173 = vxor.u32 %v597, 2147483648
      %v1174 = vxor.u32 %v599, 2147483648
      %v1175 = vxor.u32 %v710, 2147483648
      %v1176 = vxor.u32 %v712, 2147483648
      %v1177 = vxor.u32 %v823, 2147483648
      %v1178 = vxor.u32 %v825, 2147483648
      %v1179 = vxor.u32 %v936, 2147483648
      %v1180 = vxor.u32 %v938, 2147483648
      %v1181 = vxor.u32 %v1049, 2147483648
      %v1182 = vxor.u32 %v1051, 2147483648
      %v1183 = vxor.u32 %v603, 2147483648
      %v1184 = vxor.u32 %v605, 2147483648
      %v1185 = vxor.u32 %v716, 2147483648
      %v1186 = vxor.u32 %v718, 2147483648
      %v1187 = vxor.u32 %v829, 2147483648
      %v1188 = vxor.u32 %v831, 2147483648
      %v1189 = vxor.u32 %v942, 2147483648
      %v1190 = vxor.u32 %v944, 2147483648
      %v1191 = vxor.u32 %v1055, 2147483648
      %v1192 = vxor.u32 %v1057, 2147483648
      %v1193 = vxor.u32 %v607, 2147483648
      %v1194 = vxor.u32 %v609, 2147483648
      %v1195 = vxor.u32 %v720, 2147483648
      %v1196 = vxor.u32 %v722, 2147483648
      %v1197 = vxor.u32 %v833, 2147483648
      %v1198 = vxor.u32 %v835, 2147483648
      %v1199 = vxor.u32 %v946, 2147483648
      %v1200 = vxor.u32 %v948, 2147483648
      %v1201 = vxor.u32 %v1059, 2147483648
      %v1202 = vxor.u32 %v1061, 2147483648
      %v1203 = vxor.u32 %v613, 2147483648
      %v1204 = vxor.u32 %v615, 2147483648
      %v1205 = vxor.u32 %v726, 2147483648
      %v1206 = vxor.u32 %v728, 2147483648
      %v1207 = vxor.u32 %v839, 2147483648
      %v1208 = vxor.u32 %v841, 2147483648
      %v1209 = vxor.u32 %v952, 2147483648
      %v1210 = vxor.u32 %v954, 2147483648
      %v1211 = vxor.u32 %v1065, 2147483648
      %v1212 = vxor.u32 %v1067, 2147483648
      %v1213 = vxor.u32 %v617, 2147483648
      %v1214 = vxor.u32 %v619, 2147483648
      %v1215 = vxor.u32 %v730, 2147483648
      %v1216 = vxor.u32 %v732, 2147483648
      %v1217 = vxor.u32 %v843, 2147483648
      %v1218 = vxor.u32 %v845, 2147483648
      %v1219 = vxor.u32 %v956, 2147483648
      %v1220 = vxor.u32 %v958, 2147483648
      %v1221 = vxor.u32 %v1069, 2147483648
      %v1222 = vxor.u32 %v1071, 2147483648
      %v1223 = vxor.u32 %v623, 2147483648
      %v1224 = vxor.u32 %v625, 2147483648
      %v1225 = vxor.u32 %v736, 2147483648
      %v1226 = vxor.u32 %v738, 2147483648
      %v1227 = vxor.u32 %v849, 2147483648
      %v1228 = vxor.u32 %v851, 2147483648
      %v1229 = vxor.u32 %v962, 2147483648
      %v1230 = vxor.u32 %v964, 2147483648
      %v1231 = vxor.u32 %v1075, 2147483648
      %v1232 = vxor.u32 %v1077, 2147483648
      %v1233 = vxor.u32 %v627, 2147483648
      %v1234 = vxor.u32 %v629, 2147483648
      %v1235 = vxor.u32 %v740, 2147483648
      %v1236 = vxor.u32 %v742, 2147483648
      %v1237 = vxor.u32 %v853, 2147483648
      %v1238 = vxor.u32 %v855, 2147483648
      %v1239 = vxor.u32 %v966, 2147483648
      %v1240 = vxor.u32 %v968, 2147483648
      %v1241 = vxor.u32 %v1079, 2147483648
      %v1242 = vxor.u32 %v1081, 2147483648
      %v1243 = vmul.f32 %v1083, 1.442695
      %v1244 = vpow.pop %v1243
      %v1245 = vmul.f32 %v1084, 1.442695
      %v1246 = vpow.pop %v1245
      %v1247 = vmul.f32 %v1085, 1.442695
      %v1248 = vpow.pop %v1247
      %v1249 = vmul.f32 %v1086, 1.442695
      %v1250 = vpow.pop %v1249
      %v1251 = vmul.f32 %v1087, 1.442695
      %v1252 = vpow.pop %v1251
      %v1253 = vmul.f32 %v1088, 1.442695
      %v1254 = vpow.pop %v1253
      %v1255 = vmul.f32 %v1089, 1.442695
      %v1256 = vpow.pop %v1255
      %v1257 = vmul.f32 %v1090, 1.442695
      %v1258 = vpow.pop %v1257
      %v1259 = vmul.f32 %v1091, 1.442695
      %v1260 = vpow.pop %v1259
      %v1261 = vmul.f32 %v1092, 1.442695
      %v1262 = vpow.pop %v1261
      %v1263 = vmul.f32 %v1093, 1.442695
      %v1264 = vpow.pop %v1263
      %v1265 = vmul.f32 %v1094, 1.442695
      %v1266 = vpow.pop %v1265
      %v1267 = vmul.f32 %v1095, 1.442695
      %v1268 = vpow.pop %v1267
      %v1269 = vmul.f32 %v1096, 1.442695
      %v1270 = vpow.pop %v1269
      %v1271 = vmul.f32 %v1097, 1.442695
      %v1272 = vpow.pop %v1271
      %v1273 = vmul.f32 %v1098, 1.442695
      %v1274 = vpow.pop %v1273
      %v1275 = vmul.f32 %v1099, 1.442695
      %v1276 = vpow.pop %v1275
      %v1277 = vmul.f32 %v1100, 1.442695
      %v1278 = vpow.pop %v1277
      %v1279 = vmul.f32 %v1101, 1.442695
      %v1280 = vpow.pop %v1279
      %v1281 = vmul.f32 %v1102, 1.442695
      %v1282 = vpow.pop %v1281
      %v1283 = vmul.f32 %v1103, 1.442695
      %v1284 = vpow.pop %v1283
      %v1285 = vmul.f32 %v1104, 1.442695
      %v1286 = vpow.pop %v1285
      %v1287 = vmul.f32 %v1105, 1.442695
      %v1288 = vpow.pop %v1287
      %v1289 = vmul.f32 %v1106, 1.442695
      %v1290 = vpow.pop %v1289
      %v1291 = vmul.f32 %v1107, 1.442695
      %v1292 = vpow.pop %v1291
      %v1293 = vmul.f32 %v1108, 1.442695
      %v1294 = vpow.pop %v1293
      %v1295 = vmul.f32 %v1109, 1.442695
      %v1296 = vpow.pop %v1295
      %v1297 = vmul.f32 %v1110, 1.442695
      %v1298 = vpow.pop %v1297
      %v1299 = vmul.f32 %v1111, 1.442695
      %v1300 = vpow.pop %v1299
      %v1301 = vmul.f32 %v1112, 1.442695
      %v1302 = vpow.pop %v1301
      %v1303 = vmul.f32 %v1113, 1.442695
      %v1304 = vpow.pop %v1303
      %v1305 = vmul.f32 %v1114, 1.442695
      %v1306 = vpow.pop %v1305
      %v1307 = vmul.f32 %v1115, 1.442695
      %v1308 = vpow.pop %v1307
      %v1309 = vmul.f32 %v1116, 1.442695
      %v1310 = vpow.pop %v1309
      %v1311 = vmul.f32 %v1117, 1.442695
      %v1312 = vpow.pop %v1311
      %v1313 = vmul.f32 %v1118, 1.442695
      %v1314 = vpow.pop %v1313
      %v1315 = vmul.f32 %v1119, 1.442695
      %v1316 = vpow.pop %v1315
      %v1317 = vmul.f32 %v1120, 1.442695
      %v1318 = vpow.pop %v1317
      %v1319 = vmul.f32 %v1121, 1.442695
      %v1320 = vpow.pop %v1319
      %v1321 = vmul.f32 %v1122, 1.442695
      %v1322 = vpow.pop %v1321
      %v1323 = vmul.f32 %v1123, 1.442695
      %v1324 = vpow.pop %v1323
      %v1325 = vmul.f32 %v1124, 1.442695
      %v1326 = vpow.pop %v1325
      %v1327 = vmul.f32 %v1125, 1.442695
      %v1328 = vpow.pop %v1327
      %v1329 = vmul.f32 %v1126, 1.442695
      %v1330 = vpow.pop %v1329
      %v1331 = vmul.f32 %v1127, 1.442695
      %v1332 = vpow.pop %v1331
      %v1333 = vmul.f32 %v1128, 1.442695
      %v1334 = vpow.pop %v1333
      %v1335 = vmul.f32 %v1129, 1.442695
      %v1336 = vpow.pop %v1335
      %v1337 = vmul.f32 %v1130, 1.442695
      %v1338 = vpow.pop %v1337
      %v1339 = vmul.f32 %v1131, 1.442695
      %v1340 = vpow.pop %v1339
      %v1341 = vmul.f32 %v1132, 1.442695
      %v1342 = vpow.pop %v1341
      %v1343 = vmul.f32 %v1133, 1.442695
      %v1344 = vpow.pop %v1343
      %v1345 = vmul.f32 %v1134, 1.442695
      %v1346 = vpow.pop %v1345
      %v1347 = vmul.f32 %v1135, 1.442695
      %v1348 = vpow.pop %v1347
      %v1349 = vmul.f32 %v1136, 1.442695
      %v1350 = vpow.pop %v1349
      %v1351 = vmul.f32 %v1137, 1.442695
      %v1352 = vpow.pop %v1351
      %v1353 = vmul.f32 %v1138, 1.442695
      %v1354 = vpow.pop %v1353
      %v1355 = vmul.f32 %v1139, 1.442695
      %v1356 = vpow.pop %v1355
      %v1357 = vmul.f32 %v1140, 1.442695
      %v1358 = vpow.pop %v1357
      %v1359 = vmul.f32 %v1141, 1.442695
      %v1360 = vpow.pop %v1359
      %v1361 = vmul.f32 %v1142, 1.442695
      %v1362 = vpow.pop %v1361
      %v1363 = vmul.f32 %v1143, 1.442695
      %v1364 = vpow.pop %v1363
      %v1365 = vmul.f32 %v1144, 1.442695
      %v1366 = vpow.pop %v1365
      %v1367 = vmul.f32 %v1145, 1.442695
      %v1368 = vpow.pop %v1367
      %v1369 = vmul.f32 %v1146, 1.442695
      %v1370 = vpow.pop %v1369
      %v1371 = vmul.f32 %v1147, 1.442695
      %v1372 = vpow.pop %v1371
      %v1373 = vmul.f32 %v1148, 1.442695
      %v1374 = vpow.pop %v1373
      %v1375 = vmul.f32 %v1149, 1.442695
      %v1376 = vpow.pop %v1375
      %v1377 = vmul.f32 %v1150, 1.442695
      %v1378 = vpow.pop %v1377
      %v1379 = vmul.f32 %v1151, 1.442695
      %v1380 = vpow.pop %v1379
      %v1381 = vmul.f32 %v1152, 1.442695
      %v1382 = vpow.pop %v1381
      %v1383 = vmul.f32 %v1153, 1.442695
      %v1384 = vpow.pop %v1383
      %v1385 = vmul.f32 %v1154, 1.442695
      %v1386 = vpow.pop %v1385
      %v1387 = vmul.f32 %v1155, 1.442695
      %v1388 = vpow.pop %v1387
      %v1389 = vmul.f32 %v1156, 1.442695
      %v1390 = vpow.pop %v1389
      %v1391 = vmul.f32 %v1157, 1.442695
      %v1392 = vpow.pop %v1391
      %v1393 = vmul.f32 %v1158, 1.442695
      %v1394 = vpow.pop %v1393
      %v1395 = vmul.f32 %v1159, 1.442695
      %v1396 = vpow.pop %v1395
      %v1397 = vmul.f32 %v1160, 1.442695
      %v1398 = vpow.pop %v1397
      %v1399 = vmul.f32 %v1161, 1.442695
      %v1400 = vpow.pop %v1399
      %v1401 = vmul.f32 %v1162, 1.442695
      %v1402 = vpow.pop %v1401
      %v1403 = vmul.f32 %v1163, 1.442695
      %v1404 = vpow.pop %v1403
      %v1405 = vmul.f32 %v1164, 1.442695
      %v1406 = vpow.pop %v1405
      %v1407 = vmul.f32 %v1165, 1.442695
      %v1408 = vpow.pop %v1407
      %v1409 = vmul.f32 %v1166, 1.442695
      %v1410 = vpow.pop %v1409
      %v1411 = vmul.f32 %v1167, 1.442695
      %v1412 = vpow.pop %v1411
      %v1413 = vmul.f32 %v1168, 1.442695
      %v1414 = vpow.pop %v1413
      %v1415 = vmul.f32 %v1169, 1.442695
      %v1416 = vpow.pop %v1415
      %v1417 = vmul.f32 %v1170, 1.442695
      %v1418 = vpow.pop %v1417
      %v1419 = vmul.f32 %v1171, 1.442695
      %v1420 = vpow.pop %v1419
      %v1421 = vmul.f32 %v1172, 1.442695
      %v1422 = vpow.pop %v1421
      %v1423 = vmul.f32 %v1173, 1.442695
      %v1424 = vpow.pop %v1423
      %v1425 = vmul.f32 %v1174, 1.442695
      %v1426 = vpow.pop %v1425
      %v1427 = vmul.f32 %v1175, 1.442695
      %v1428 = vpow.pop %v1427
      %v1429 = vmul.f32 %v1176, 1.442695
      %v1430 = vpow.pop %v1429
      %v1431 = vmul.f32 %v1177, 1.442695
      %v1432 = vpow.pop %v1431
      %v1433 = vmul.f32 %v1178, 1.442695
      %v1434 = vpow.pop %v1433
      %v1435 = vmul.f32 %v1179, 1.442695
      %v1436 = vpow.pop %v1435
      %v1437 = vmul.f32 %v1180, 1.442695
      %v1438 = vpow.pop %v1437
      %v1439 = vmul.f32 %v1181, 1.442695
      %v1440 = vpow.pop %v1439
      %v1441 = vmul.f32 %v1182, 1.442695
      %v1442 = vpow.pop %v1441
      %v1443 = vmul.f32 %v1183, 1.442695
      %v1444 = vpow.pop %v1443
      %v1445 = vmul.f32 %v1184, 1.442695
      %v1446 = vpow.pop %v1445
      %v1447 = vmul.f32 %v1185, 1.442695
      %v1448 = vpow.pop %v1447
      %v1449 = vmul.f32 %v1186, 1.442695
      %v1450 = vpow.pop %v1449
      %v1451 = vmul.f32 %v1187, 1.442695
      %v1452 = vpow.pop %v1451
      %v1453 = vmul.f32 %v1188, 1.442695
      %v1454 = vpow.pop %v1453
      %v1455 = vmul.f32 %v1189, 1.442695
      %v1456 = vpow.pop %v1455
      %v1457 = vmul.f32 %v1190, 1.442695
      %v1458 = vpow.pop %v1457
      %v1459 = vmul.f32 %v1191, 1.442695
      %v1460 = vpow.pop %v1459
      %v1461 = vmul.f32 %v1192, 1.442695
      %v1462 = vpow.pop %v1461
      %v1463 = vmul.f32 %v1193, 1.442695
      %v1464 = vpow.pop %v1463
      %v1465 = vmul.f32 %v1194, 1.442695
      %v1466 = vpow.pop %v1465
      %v1467 = vmul.f32 %v1195, 1.442695
      %v1468 = vpow.pop %v1467
      %v1469 = vmul.f32 %v1196, 1.442695
      %v1470 = vpow.pop %v1469
      %v1471 = vmul.f32 %v1197, 1.442695
      %v1472 = vpow.pop %v1471
      %v1473 = vmul.f32 %v1198, 1.442695
      %v1474 = vpow.pop %v1473
      %v1475 = vmul.f32 %v1199, 1.442695
      %v1476 = vpow.pop %v1475
      %v1477 = vmul.f32 %v1200, 1.442695
      %v1478 = vpow.pop %v1477
      %v1479 = vmul.f32 %v1201, 1.442695
      %v1480 = vpow.pop %v1479
      %v1481 = vmul.f32 %v1202, 1.442695
      %v1482 = vpow.pop %v1481
      %v1483 = vmul.f32 %v1203, 1.442695
      %v1484 = vpow.pop %v1483
      %v1485 = vmul.f32 %v1204, 1.442695
      %v1486 = vpow.pop %v1485
      %v1487 = vmul.f32 %v1205, 1.442695
      %v1488 = vpow.pop %v1487
      %v1489 = vmul.f32 %v1206, 1.442695
      %v1490 = vpow.pop %v1489
      %v1491 = vmul.f32 %v1207, 1.442695
      %v1492 = vpow.pop %v1491
      %v1493 = vmul.f32 %v1208, 1.442695
      %v1494 = vpow.pop %v1493
      %v1495 = vmul.f32 %v1209, 1.442695
      %v1496 = vpow.pop %v1495
      %v1497 = vmul.f32 %v1210, 1.442695
      %v1498 = vpow.pop %v1497
      %v1499 = vmul.f32 %v1211, 1.442695
      %v1500 = vpow.pop %v1499
      %v1501 = vmul.f32 %v1212, 1.442695
      %v1502 = vpow.pop %v1501
      %v1503 = vmul.f32 %v1213, 1.442695
      %v1504 = vpow.pop %v1503
      %v1505 = vmul.f32 %v1214, 1.442695
      %v1506 = vpow.pop %v1505
      %v1507 = vmul.f32 %v1215, 1.442695
      %v1508 = vpow.pop %v1507
      %v1509 = vmul.f32 %v1216, 1.442695
      %v1510 = vpow.pop %v1509
      %v1511 = vmul.f32 %v1217, 1.442695
      %v1512 = vpow.pop %v1511
      %v1513 = vmul.f32 %v1218, 1.442695
      %v1514 = vpow.pop %v1513
      %v1515 = vmul.f32 %v1219, 1.442695
      %v1516 = vpow.pop %v1515
      %v1517 = vmul.f32 %v1220, 1.442695
      %v1518 = vpow.pop %v1517
      %v1519 = vmul.f32 %v1221, 1.442695
      %v1520 = vpow.pop %v1519
      %v1521 = vmul.f32 %v1222, 1.442695
      %v1522 = vpow.pop %v1521
      %v1523 = vmul.f32 %v1223, 1.442695
      %v1524 = vpow.pop %v1523
      %v1525 = vmul.f32 %v1224, 1.442695
      %v1526 = vpow.pop %v1525
      %v1527 = vmul.f32 %v1225, 1.442695
      %v1528 = vpow.pop %v1527
      %v1529 = vmul.f32 %v1226, 1.442695
      %v1530 = vpow.pop %v1529
      %v1531 = vmul.f32 %v1227, 1.442695
      %v1532 = vpow.pop %v1531
      %v1533 = vmul.f32 %v1228, 1.442695
      %v1534 = vpow.pop %v1533
      %v1535 = vmul.f32 %v1229, 1.442695
      %v1536 = vpow.pop %v1535
      %v1537 = vmul.f32 %v1230, 1.442695
      %v1538 = vpow.pop %v1537
      %v1539 = vmul.f32 %v1231, 1.442695
      %v1540 = vpow.pop %v1539
      %v1541 = vmul.f32 %v1232, 1.442695
      %v1542 = vpow.pop %v1541
      %v1543 = vmul.f32 %v1233, 1.442695
      %v1544 = vpow.pop %v1543
      %v1545 = vmul.f32 %v1234, 1.442695
      %v1546 = vpow.pop %v1545
      %v1547 = vmul.f32 %v1235, 1.442695
      %v1548 = vpow.pop %v1547
      %v1549 = vmul.f32 %v1236, 1.442695
      %v1550 = vpow.pop %v1549
      %v1551 = vmul.f32 %v1237, 1.442695
      %v1552 = vpow.pop %v1551
      %v1553 = vmul.f32 %v1238, 1.442695
      %v1554 = vpow.pop %v1553
      %v1555 = vmul.f32 %v1239, 1.442695
      %v1556 = vpow.pop %v1555
      %v1557 = vmul.f32 %v1240, 1.442695
      %v1558 = vpow.pop %v1557
      %v1559 = vmul.f32 %v1241, 1.442695
      %v1560 = vpow.pop %v1559
      %v1561 = vmul.f32 %v1242, 1.442695
      %v1562 = vpow.pop %v1561
      %v1563 = vadd.f32 %v1244, 1.0
      %v1564 = vadd.f32 %v1246, 1.0
      %v1565 = vadd.f32 %v1248, 1.0
      %v1566 = vadd.f32 %v1250, 1.0
      %v1567 = vadd.f32 %v1252, 1.0
      %v1568 = vadd.f32 %v1254, 1.0
      %v1569 = vadd.f32 %v1256, 1.0
      %v1570 = vadd.f32 %v1258, 1.0
      %v1571 = vadd.f32 %v1260, 1.0
      %v1572 = vadd.f32 %v1262, 1.0
      %v1573 = vadd.f32 %v1264, 1.0
      %v1574 = vadd.f32 %v1266, 1.0
      %v1575 = vadd.f32 %v1268, 1.0
      %v1576 = vadd.f32 %v1270, 1.0
      %v1577 = vadd.f32 %v1272, 1.0
      %v1578 = vadd.f32 %v1274, 1.0
      %v1579 = vadd.f32 %v1276, 1.0
      %v1580 = vadd.f32 %v1278, 1.0
      %v1581 = vadd.f32 %v1280, 1.0
      %v1582 = vadd.f32 %v1282, 1.0
      %v1583 = vadd.f32 %v1284, 1.0
      %v1584 = vadd.f32 %v1286, 1.0
      %v1585 = vadd.f32 %v1288, 1.0
      %v1586 = vadd.f32 %v1290, 1.0
      %v1587 = vadd.f32 %v1292, 1.0
      %v1588 = vadd.f32 %v1294, 1.0
      %v1589 = vadd.f32 %v1296, 1.0
      %v1590 = vadd.f32 %v1298, 1.0
      %v1591 = vadd.f32 %v1300, 1.0
      %v1592 = vadd.f32 %v1302, 1.0
      %v1593 = vadd.f32 %v1304, 1.0
      %v1594 = vadd.f32 %v1306, 1.0
      %v1595 = vadd.f32 %v1308, 1.0
      %v1596 = vadd.f32 %v1310, 1.0
      %v1597 = vadd.f32 %v1312, 1.0
      %v1598 = vadd.f32 %v1314, 1.0
      %v1599 = vadd.f32 %v1316, 1.0
      %v1600 = vadd.f32 %v1318, 1.0
      %v1601 = vadd.f32 %v1320, 1.0
      %v1602 = vadd.f32 %v1322, 1.0
      %v1603 = vadd.f32 %v1324, 1.0
      %v1604 = vadd.f32 %v1326, 1.0
      %v1605 = vadd.f32 %v1328, 1.0
      %v1606 = vadd.f32 %v1330, 1.0
      %v1607 = vadd.f32 %v1332, 1.0
      %v1608 = vadd.f32 %v1334, 1.0
      %v1609 = vadd.f32 %v1336, 1.0
      %v1610 = vadd.f32 %v1338, 1.0
      %v1611 = vadd.f32 %v1340, 1.0
      %v1612 = vadd.f32 %v1342, 1.0
      %v1613 = vadd.f32 %v1344, 1.0
      %v1614 = vadd.f32 %v1346, 1.0
      %v1615 = vadd.f32 %v1348, 1.0
      %v1616 = vadd.f32 %v1350, 1.0
      %v1617 = vadd.f32 %v1352, 1.0
      %v1618 = vadd.f32 %v1354, 1.0
      %v1619 = vadd.f32 %v1356, 1.0
      %v1620 = vadd.f32 %v1358, 1.0
      %v1621 = vadd.f32 %v1360, 1.0
      %v1622 = vadd.f32 %v1362, 1.0
      %v1623 = vadd.f32 %v1364, 1.0
      %v1624 = vadd.f32 %v1366, 1.0
      %v1625 = vadd.f32 %v1368, 1.0
      %v1626 = vadd.f32 %v1370, 1.0
      %v1627 = vadd.f32 %v1372, 1.0
      %v1628 = vadd.f32 %v1374, 1.0
      %v1629 = vadd.f32 %v1376, 1.0
      %v1630 = vadd.f32 %v1378, 1.0
      %v1631 = vadd.f32 %v1380, 1.0
      %v1632 = vadd.f32 %v1382, 1.0
      %v1633 = vadd.f32 %v1384, 1.0
      %v1634 = vadd.f32 %v1386, 1.0
      %v1635 = vadd.f32 %v1388, 1.0
      %v1636 = vadd.f32 %v1390, 1.0
      %v1637 = vadd.f32 %v1392, 1.0
      %v1638 = vadd.f32 %v1394, 1.0
      %v1639 = vadd.f32 %v1396, 1.0
      %v1640 = vadd.f32 %v1398, 1.0
      %v1641 = vadd.f32 %v1400, 1.0
      %v1642 = vadd.f32 %v1402, 1.0
      %v1643 = vadd.f32 %v1404, 1.0
      %v1644 = vadd.f32 %v1406, 1.0
      %v1645 = vadd.f32 %v1408, 1.0
      %v1646 = vadd.f32 %v1410, 1.0
      %v1647 = vadd.f32 %v1412, 1.0
      %v1648 = vadd.f32 %v1414, 1.0
      %v1649 = vadd.f32 %v1416, 1.0
      %v1650 = vadd.f32 %v1418, 1.0
      %v1651 = vadd.f32 %v1420, 1.0
      %v1652 = vadd.f32 %v1422, 1.0
      %v1653 = vadd.f32 %v1424, 1.0
      %v1654 = vadd.f32 %v1426, 1.0
      %v1655 = vadd.f32 %v1428, 1.0
      %v1656 = vadd.f32 %v1430, 1.0
      %v1657 = vadd.f32 %v1432, 1.0
      %v1658 = vadd.f32 %v1434, 1.0
      %v1659 = vadd.f32 %v1436, 1.0
      %v1660 = vadd.f32 %v1438, 1.0
      %v1661 = vadd.f32 %v1440, 1.0
      %v1662 = vadd.f32 %v1442, 1.0
      %v1663 = vadd.f32 %v1444, 1.0
      %v1664 = vadd.f32 %v1446, 1.0
      %v1665 = vadd.f32 %v1448, 1.0
      %v1666 = vadd.f32 %v1450, 1.0
      %v1667 = vadd.f32 %v1452, 1.0
      %v1668 = vadd.f32 %v1454, 1.0
      %v1669 = vadd.f32 %v1456, 1.0
      %v1670 = vadd.f32 %v1458, 1.0
      %v1671 = vadd.f32 %v1460, 1.0
      %v1672 = vadd.f32 %v1462, 1.0
      %v1673 = vadd.f32 %v1464, 1.0
      %v1674 = vadd.f32 %v1466, 1.0
      %v1675 = vadd.f32 %v1468, 1.0
      %v1676 = vadd.f32 %v1470, 1.0
      %v1677 = vadd.f32 %v1472, 1.0
      %v1678 = vadd.f32 %v1474, 1.0
      %v1679 = vadd.f32 %v1476, 1.0
      %v1680 = vadd.f32 %v1478, 1.0
      %v1681 = vadd.f32 %v1480, 1.0
      %v1682 = vadd.f32 %v1482, 1.0
      %v1683 = vadd.f32 %v1484, 1.0
      %v1684 = vadd.f32 %v1486, 1.0
      %v1685 = vadd.f32 %v1488, 1.0
      %v1686 = vadd.f32 %v1490, 1.0
      %v1687 = vadd.f32 %v1492, 1.0
      %v1688 = vadd.f32 %v1494, 1.0
      %v1689 = vadd.f32 %v1496, 1.0
      %v1690 = vadd.f32 %v1498, 1.0
      %v1691 = vadd.f32 %v1500, 1.0
      %v1692 = vadd.f32 %v1502, 1.0
      %v1693 = vadd.f32 %v1504, 1.0
      %v1694 = vadd.f32 %v1506, 1.0
      %v1695 = vadd.f32 %v1508, 1.0
      %v1696 = vadd.f32 %v1510, 1.0
      %v1697 = vadd.f32 %v1512, 1.0
      %v1698 = vadd.f32 %v1514, 1.0
      %v1699 = vadd.f32 %v1516, 1.0
      %v1700 = vadd.f32 %v1518, 1.0
      %v1701 = vadd.f32 %v1520, 1.0
      %v1702 = vadd.f32 %v1522, 1.0
      %v1703 = vadd.f32 %v1524, 1.0
      %v1704 = vadd.f32 %v1526, 1.0
      %v1705 = vadd.f32 %v1528, 1.0
      %v1706 = vadd.f32 %v1530, 1.0
      %v1707 = vadd.f32 %v1532, 1.0
      %v1708 = vadd.f32 %v1534, 1.0
      %v1709 = vadd.f32 %v1536, 1.0
      %v1710 = vadd.f32 %v1538, 1.0
      %v1711 = vadd.f32 %v1540, 1.0
      %v1712 = vadd.f32 %v1542, 1.0
      %v1713 = vadd.f32 %v1544, 1.0
      %v1714 = vadd.f32 %v1546, 1.0
      %v1715 = vadd.f32 %v1548, 1.0
      %v1716 = vadd.f32 %v1550, 1.0
      %v1717 = vadd.f32 %v1552, 1.0
      %v1718 = vadd.f32 %v1554, 1.0
      %v1719 = vadd.f32 %v1556, 1.0
      %v1720 = vadd.f32 %v1558, 1.0
      %v1721 = vadd.f32 %v1560, 1.0
      %v1722 = vadd.f32 %v1562, 1.0
      %v1723 = vrcp.pop %v1563
      %v1724 = vmul.f32 1.0, %v1723
      %v1725 = vrcp.pop %v1564
      %v1726 = vmul.f32 1.0, %v1725
      %v1727 = vrcp.pop %v1565
      %v1728 = vmul.f32 1.0, %v1727
      %v1729 = vrcp.pop %v1566
      %v1730 = vmul.f32 1.0, %v1729
      %v1731 = vrcp.pop %v1567
      %v1732 = vmul.f32 1.0, %v1731
      %v1733 = vrcp.pop %v1568
      %v1734 = vmul.f32 1.0, %v1733
      %v1735 = vrcp.pop %v1569
      %v1736 = vmul.f32 1.0, %v1735
      %v1737 = vrcp.pop %v1570
      %v1738 = vmul.f32 1.0, %v1737
      %v1739 = vrcp.pop %v1571
      %v1740 = vmul.f32 1.0, %v1739
      %v1741 = vrcp.pop %v1572
      %v1742 = vmul.f32 1.0, %v1741
      %v1743 = vrcp.pop %v1573
      %v1744 = vmul.f32 1.0, %v1743
      %v1745 = vrcp.pop %v1574
      %v1746 = vmul.f32 1.0, %v1745
      %v1747 = vrcp.pop %v1575
      %v1748 = vmul.f32 1.0, %v1747
      %v1749 = vrcp.pop %v1576
      %v1750 = vmul.f32 1.0, %v1749
      %v1751 = vrcp.pop %v1577
      %v1752 = vmul.f32 1.0, %v1751
      %v1753 = vrcp.pop %v1578
      %v1754 = vmul.f32 1.0, %v1753
      %v1755 = vrcp.pop %v1579
      %v1756 = vmul.f32 1.0, %v1755
      %v1757 = vrcp.pop %v1580
      %v1758 = vmul.f32 1.0, %v1757
      %v1759 = vrcp.pop %v1581
      %v1760 = vmul.f32 1.0, %v1759
      %v1761 = vrcp.pop %v1582
      %v1762 = vmul.f32 1.0, %v1761
      %v1763 = vrcp.pop %v1583
      %v1764 = vmul.f32 1.0, %v1763
      %v1765 = vrcp.pop %v1584
      %v1766 = vmul.f32 1.0, %v1765
      %v1767 = vrcp.pop %v1585
      %v1768 = vmul.f32 1.0, %v1767
      %v1769 = vrcp.pop %v1586
      %v1770 = vmul.f32 1.0, %v1769
      %v1771 = vrcp.pop %v1587
      %v1772 = vmul.f32 1.0, %v1771
      %v1773 = vrcp.pop %v1588
      %v1774 = vmul.f32 1.0, %v1773
      %v1775 = vrcp.pop %v1589
      %v1776 = vmul.f32 1.0, %v1775
      %v1777 = vrcp.pop %v1590
      %v1778 = vmul.f32 1.0, %v1777
      %v1779 = vrcp.pop %v1591
      %v1780 = vmul.f32 1.0, %v1779
      %v1781 = vrcp.pop %v1592
      %v1782 = vmul.f32 1.0, %v1781
      %v1783 = vrcp.pop %v1593
      %v1784 = vmul.f32 1.0, %v1783
      %v1785 = vrcp.pop %v1594
      %v1786 = vmul.f32 1.0, %v1785
      %v1787 = vrcp.pop %v1595
      %v1788 = vmul.f32 1.0, %v1787
      %v1789 = vrcp.pop %v1596
      %v1790 = vmul.f32 1.0, %v1789
      %v1791 = vrcp.pop %v1597
      %v1792 = vmul.f32 1.0, %v1791
      %v1793 = vrcp.pop %v1598
      %v1794 = vmul.f32 1.0, %v1793
      %v1795 = vrcp.pop %v1599
      %v1796 = vmul.f32 1.0, %v1795
      %v1797 = vrcp.pop %v1600
      %v1798 = vmul.f32 1.0, %v1797
      %v1799 = vrcp.pop %v1601
      %v1800 = vmul.f32 1.0, %v1799
      %v1801 = vrcp.pop %v1602
      %v1802 = vmul.f32 1.0, %v1801
      %v1803 = vrcp.pop %v1603
      %v1804 = vmul.f32 1.0, %v1803
      %v1805 = vrcp.pop %v1604
      %v1806 = vmul.f32 1.0, %v1805
      %v1807 = vrcp.pop %v1605
      %v1808 = vmul.f32 1.0, %v1807
      %v1809 = vrcp.pop %v1606
      %v1810 = vmul.f32 1.0, %v1809
      %v1811 = vrcp.pop %v1607
      %v1812 = vmul.f32 1.0, %v1811
      %v1813 = vrcp.pop %v1608
      %v1814 = vmul.f32 1.0, %v1813
      %v1815 = vrcp.pop %v1609
      %v1816 = vmul.f32 1.0, %v1815
      %v1817 = vrcp.pop %v1610
      %v1818 = vmul.f32 1.0, %v1817
      %v1819 = vrcp.pop %v1611
      %v1820 = vmul.f32 1.0, %v1819
      %v1821 = vrcp.pop %v1612
      %v1822 = vmul.f32 1.0, %v1821
      %v1823 = vrcp.pop %v1613
      %v1824 = vmul.f32 1.0, %v1823
      %v1825 = vrcp.pop %v1614
      %v1826 = vmul.f32 1.0, %v1825
      %v1827 = vrcp.pop %v1615
      %v1828 = vmul.f32 1.0, %v1827
      %v1829 = vrcp.pop %v1616
      %v1830 = vmul.f32 1.0, %v1829
      %v1831 = vrcp.pop %v1617
      %v1832 = vmul.f32 1.0, %v1831
      %v1833 = vrcp.pop %v1618
      %v1834 = vmul.f32 1.0, %v1833
      %v1835 = vrcp.pop %v1619
      %v1836 = vmul.f32 1.0, %v1835
      %v1837 = vrcp.pop %v1620
      %v1838 = vmul.f32 1.0, %v1837
      %v1839 = vrcp.pop %v1621
      %v1840 = vmul.f32 1.0, %v1839
      %v1841 = vrcp.pop %v1622
      %v1842 = vmul.f32 1.0, %v1841
      %v1843 = vrcp.pop %v1623
      %v1844 = vmul.f32 1.0, %v1843
      %v1845 = vrcp.pop %v1624
      %v1846 = vmul.f32 1.0, %v1845
      %v1847 = vrcp.pop %v1625
      %v1848 = vmul.f32 1.0, %v1847
      %v1849 = vrcp.pop %v1626
      %v1850 = vmul.f32 1.0, %v1849
      %v1851 = vrcp.pop %v1627
      %v1852 = vmul.f32 1.0, %v1851
      %v1853 = vrcp.pop %v1628
      %v1854 = vmul.f32 1.0, %v1853
      %v1855 = vrcp.pop %v1629
      %v1856 = vmul.f32 1.0, %v1855
      %v1857 = vrcp.pop %v1630
      %v1858 = vmul.f32 1.0, %v1857
      %v1859 = vrcp.pop %v1631
      %v1860 = vmul.f32 1.0, %v1859
      %v1861 = vrcp.pop %v1632
      %v1862 = vmul.f32 1.0, %v1861
      %v1863 = vrcp.pop %v1633
      %v1864 = vmul.f32 1.0, %v1863
      %v1865 = vrcp.pop %v1634
      %v1866 = vmul.f32 1.0, %v1865
      %v1867 = vrcp.pop %v1635
      %v1868 = vmul.f32 1.0, %v1867
      %v1869 = vrcp.pop %v1636
      %v1870 = vmul.f32 1.0, %v1869
      %v1871 = vrcp.pop %v1637
      %v1872 = vmul.f32 1.0, %v1871
      %v1873 = vrcp.pop %v1638
      %v1874 = vmul.f32 1.0, %v1873
      %v1875 = vrcp.pop %v1639
      %v1876 = vmul.f32 1.0, %v1875
      %v1877 = vrcp.pop %v1640
      %v1878 = vmul.f32 1.0, %v1877
      %v1879 = vrcp.pop %v1641
      %v1880 = vmul.f32 1.0, %v1879
      %v1881 = vrcp.pop %v1642
      %v1882 = vmul.f32 1.0, %v1881
      %v1883 = vrcp.pop %v1643
      %v1884 = vmul.f32 1.0, %v1883
      %v1885 = vrcp.pop %v1644
      %v1886 = vmul.f32 1.0, %v1885
      %v1887 = vrcp.pop %v1645
      %v1888 = vmul.f32 1.0, %v1887
      %v1889 = vrcp.pop %v1646
      %v1890 = vmul.f32 1.0, %v1889
      %v1891 = vrcp.pop %v1647
      %v1892 = vmul.f32 1.0, %v1891
      %v1893 = vrcp.pop %v1648
      %v1894 = vmul.f32 1.0, %v1893
      %v1895 = vrcp.pop %v1649
      %v1896 = vmul.f32 1.0, %v1895
      %v1897 = vrcp.pop %v1650
      %v1898 = vmul.f32 1.0, %v1897
      %v1899 = vrcp.pop %v1651
      %v1900 = vmul.f32 1.0, %v1899
      %v1901 = vrcp.pop %v1652
      %v1902 = vmul.f32 1.0, %v1901
      %v1903 = vrcp.pop %v1653
      %v1904 = vmul.f32 1.0, %v1903
      %v1905 = vrcp.pop %v1654
      %v1906 = vmul.f32 1.0, %v1905
      %v1907 = vrcp.pop %v1655
      %v1908 = vmul.f32 1.0, %v1907
      %v1909 = vrcp.pop %v1656
      %v1910 = vmul.f32 1.0, %v1909
      %v1911 = vrcp.pop %v1657
      %v1912 = vmul.f32 1.0, %v1911
      %v1913 = vrcp.pop %v1658
      %v1914 = vmul.f32 1.0, %v1913
      %v1915 = vrcp.pop %v1659
      %v1916 = vmul.f32 1.0, %v1915
      %v1917 = vrcp.pop %v1660
      %v1918 = vmul.f32 1.0, %v1917
      %v1919 = vrcp.pop %v1661
      %v1920 = vmul.f32 1.0, %v1919
      %v1921 = vrcp.pop %v1662
      %v1922 = vmul.f32 1.0, %v1921
      %v1923 = vrcp.pop %v1663
      %v1924 = vmul.f32 1.0, %v1923
      %v1925 = vrcp.pop %v1664
      %v1926 = vmul.f32 1.0, %v1925
      %v1927 = vrcp.pop %v1665
      %v1928 = vmul.f32 1.0, %v1927
      %v1929 = vrcp.pop %v1666
      %v1930 = vmul.f32 1.0, %v1929
      %v1931 = vrcp.pop %v1667
      %v1932 = vmul.f32 1.0, %v1931
      %v1933 = vrcp.pop %v1668
      %v1934 = vmul.f32 1.0, %v1933
      %v1935 = vrcp.pop %v1669
      %v1936 = vmul.f32 1.0, %v1935
      %v1937 = vrcp.pop %v1670
      %v1938 = vmul.f32 1.0, %v1937
      %v1939 = vrcp.pop %v1671
      %v1940 = vmul.f32 1.0, %v1939
      %v1941 = vrcp.pop %v1672
      %v1942 = vmul.f32 1.0, %v1941
      %v1943 = vrcp.pop %v1673
      %v1944 = vmul.f32 1.0, %v1943
      %v1945 = vrcp.pop %v1674
      %v1946 = vmul.f32 1.0, %v1945
      %v1947 = vrcp.pop %v1675
      %v1948 = vmul.f32 1.0, %v1947
      %v1949 = vrcp.pop %v1676
      %v1950 = vmul.f32 1.0, %v1949
      %v1951 = vrcp.pop %v1677
      %v1952 = vmul.f32 1.0, %v1951
      %v1953 = vrcp.pop %v1678
      %v1954 = vmul.f32 1.0, %v1953
      %v1955 = vrcp.pop %v1679
      %v1956 = vmul.f32 1.0, %v1955
      %v1957 = vrcp.pop %v1680
      %v1958 = vmul.f32 1.0, %v1957
      %v1959 = vrcp.pop %v1681
      %v1960 = vmul.f32 1.0, %v1959
      %v1961 = vrcp.pop %v1682
      %v1962 = vmul.f32 1.0, %v1961
      %v1963 = vrcp.pop %v1683
      %v1964 = vmul.f32 1.0, %v1963
      %v1965 = vrcp.pop %v1684
      %v1966 = vmul.f32 1.0, %v1965
      %v1967 = vrcp.pop %v1685
      %v1968 = vmul.f32 1.0, %v1967
      %v1969 = vrcp.pop %v1686
      %v1970 = vmul.f32 1.0, %v1969
      %v1971 = vrcp.pop %v1687
      %v1972 = vmul.f32 1.0, %v1971
      %v1973 = vrcp.pop %v1688
      %v1974 = vmul.f32 1.0, %v1973
      %v1975 = vrcp.pop %v1689
      %v1976 = vmul.f32 1.0, %v1975
      %v1977 = vrcp.pop %v1690
      %v1978 = vmul.f32 1.0, %v1977
      %v1979 = vrcp.pop %v1691
      %v1980 = vmul.f32 1.0, %v1979
      %v1981 = vrcp.pop %v1692
      %v1982 = vmul.f32 1.0, %v1981
      %v1983 = vrcp.pop %v1693
      %v1984 = vmul.f32 1.0, %v1983
      %v1985 = vrcp.pop %v1694
      %v1986 = vmul.f32 1.0, %v1985
      %v1987 = vrcp.pop %v1695
      %v1988 = vmul.f32 1.0, %v1987
      %v1989 = vrcp.pop %v1696
      %v1990 = vmul.f32 1.0, %v1989
      %v1991 = vrcp.pop %v1697
      %v1992 = vmul.f32 1.0, %v1991
      %v1993 = vrcp.pop %v1698
      %v1994 = vmul.f32 1.0, %v1993
      %v1995 = vrcp.pop %v1699
      %v1996 = vmul.f32 1.0, %v1995
      %v1997 = vrcp.pop %v1700
      %v1998 = vmul.f32 1.0, %v1997
      %v1999 = vrcp.pop %v1701
      %v2000 = vmul.f32 1.0, %v1999
      %v2001 = vrcp.pop %v1702
      %v2002 = vmul.f32 1.0, %v2001
      %v2003 = vrcp.pop %v1703
      %v2004 = vmul.f32 1.0, %v2003
      %v2005 = vrcp.pop %v1704
      %v2006 = vmul.f32 1.0, %v2005
      %v2007 = vrcp.pop %v1705
      %v2008 = vmul.f32 1.0, %v2007
      %v2009 = vrcp.pop %v1706
      %v2010 = vmul.f32 1.0, %v2009
      %v2011 = vrcp.pop %v1707
      %v2012 = vmul.f32 1.0, %v2011
      %v2013 = vrcp.pop %v1708
      %v2014 = vmul.f32 1.0, %v2013
      %v2015 = vrcp.pop %v1709
      %v2016 = vmul.f32 1.0, %v2015
      %v2017 = vrcp.pop %v1710
      %v2018 = vmul.f32 1.0, %v2017
      %v2019 = vrcp.pop %v1711
      %v2020 = vmul.f32 1.0, %v2019
      %v2021 = vrcp.pop %v1712
      %v2022 = vmul.f32 1.0, %v2021
      %v2023 = vrcp.pop %v1713
      %v2024 = vmul.f32 1.0, %v2023
      %v2025 = vrcp.pop %v1714
      %v2026 = vmul.f32 1.0, %v2025
      %v2027 = vrcp.pop %v1715
      %v2028 = vmul.f32 1.0, %v2027
      %v2029 = vrcp.pop %v1716
      %v2030 = vmul.f32 1.0, %v2029
      %v2031 = vrcp.pop %v1717
      %v2032 = vmul.f32 1.0, %v2031
      %v2033 = vrcp.pop %v1718
      %v2034 = vmul.f32 1.0, %v2033
      %v2035 = vrcp.pop %v1719
      %v2036 = vmul.f32 1.0, %v2035
      %v2037 = vrcp.pop %v1720
      %v2038 = vmul.f32 1.0, %v2037
      %v2039 = vrcp.pop %v1721
      %v2040 = vmul.f32 1.0, %v2039
      %v2041 = vrcp.pop %v1722
      %v2042 = vmul.f32 1.0, %v2041
      %v2043 = vmul.f32 %v553, %v1724
      %v2044 = vmul.f32 %v555, %v1726
      %v2045 = vmul.f32 %v666, %v1728
      %v2046 = vmul.f32 %v668, %v1730
      %v2047 = vmul.f32 %v779, %v1732
      %v2048 = vmul.f32 %v781, %v1734
      %v2049 = vmul.f32 %v892, %v1736
      %v2050 = vmul.f32 %v894, %v1738
      %v2051 = vmul.f32 %v1005, %v1740
      %v2052 = vmul.f32 %v1007, %v1742
      %v2053 = vmul.f32 %v557, %v1744
      %v2054 = vmul.f32 %v559, %v1746
      %v2055 = vmul.f32 %v670, %v1748
      %v2056 = vmul.f32 %v672, %v1750
      %v2057 = vmul.f32 %v783, %v1752
      %v2058 = vmul.f32 %v785, %v1754
      %v2059 = vmul.f32 %v896, %v1756
      %v2060 = vmul.f32 %v898, %v1758
      %v2061 = vmul.f32 %v1009, %v1760
      %v2062 = vmul.f32 %v1011, %v1762
      %v2063 = vmul.f32 %v563, %v1764
      %v2064 = vmul.f32 %v565, %v1766
      %v2065 = vmul.f32 %v676, %v1768
      %v2066 = vmul.f32 %v678, %v1770
      %v2067 = vmul.f32 %v789, %v1772
      %v2068 = vmul.f32 %v791, %v1774
      %v2069 = vmul.f32 %v902, %v1776
      %v2070 = vmul.f32 %v904, %v1778
      %v2071 = vmul.f32 %v1015, %v1780
      %v2072 = vmul.f32 %v1017, %v1782
      %v2073 = vmul.f32 %v567, %v1784
      %v2074 = vmul.f32 %v569, %v1786
      %v2075 = vmul.f32 %v680, %v1788
      %v2076 = vmul.f32 %v682, %v1790
      %v2077 = vmul.f32 %v793, %v1792
      %v2078 = vmul.f32 %v795, %v1794
      %v2079 = vmul.f32 %v906, %v1796
      %v2080 = vmul.f32 %v908, %v1798
      %v2081 = vmul.f32 %v1019, %v1800
      %v2082 = vmul.f32 %v1021, %v1802
      %v2083 = vmul.f32 %v573, %v1804
      %v2084 = vmul.f32 %v575, %v1806
      %v2085 = vmul.f32 %v686, %v1808
      %v2086 = vmul.f32 %v688, %v1810
      %v2087 = vmul.f32 %v799, %v1812
      %v2088 = vmul.f32 %v801, %v1814
      %v2089 = vmul.f32 %v912, %v1816
      %v2090 = vmul.f32 %v914, %v1818
      %v2091 = vmul.f32 %v1025, %v1820
      %v2092 = vmul.f32 %v1027, %v1822
      %v2093 = vmul.f32 %v577, %v1824
      %v2094 = vmul.f32 %v579, %v1826
      %v2095 = vmul.f32 %v690, %v1828
      %v2096 = vmul.f32 %v692, %v1830
      %v2097 = vmul.f32 %v803, %v1832
      %v2098 = vmul.f32 %v805, %v1834
      %v2099 = vmul.f32 %v916, %v1836
      %v2100 = vmul.f32 %v918, %v1838
      %v2101 = vmul.f32 %v1029, %v1840
      %v2102 = vmul.f32 %v1031, %v1842
      %v2103 = vmul.f32 %v583, %v1844
      %v2104 = vmul.f32 %v585, %v1846
      %v2105 = vmul.f32 %v696, %v1848
      %v2106 = vmul.f32 %v698, %v1850
      %v2107 = vmul.f32 %v809, %v1852
      %v2108 = vmul.f32 %v811, %v1854
      %v2109 = vmul.f32 %v922, %v1856
      %v2110 = vmul.f32 %v924, %v1858
      %v2111 = vmul.f32 %v1035, %v1860
      %v2112 = vmul.f32 %v1037, %v1862
      %v2113 = vmul.f32 %v587, %v1864
      %v2114 = vmul.f32 %v589, %v1866
      %v2115 = vmul.f32 %v700, %v1868
      %v2116 = vmul.f32 %v702, %v1870
      %v2117 = vmul.f32 %v813, %v1872
      %v2118 = vmul.f32 %v815, %v1874
      %v2119 = vmul.f32 %v926, %v1876
      %v2120 = vmul.f32 %v928, %v1878
      %v2121 = vmul.f32 %v1039, %v1880
      %v2122 = vmul.f32 %v1041, %v1882
      %v2123 = vmul.f32 %v593, %v1884
      %v2124 = vmul.f32 %v595, %v1886
      %v2125 = vmul.f32 %v706, %v1888
      %v2126 = vmul.f32 %v708, %v1890
      %v2127 = vmul.f32 %v819, %v1892
      %v2128 = vmul.f32 %v821, %v1894
      %v2129 = vmul.f32 %v932, %v1896
      %v2130 = vmul.f32 %v934, %v1898
      %v2131 = vmul.f32 %v1045, %v1900
      %v2132 = vmul.f32 %v1047, %v1902
      %v2133 = vmul.f32 %v597, %v1904
      %v2134 = vmul.f32 %v599, %v1906
      %v2135 = vmul.f32 %v710, %v1908
      %v2136 = vmul.f32 %v712, %v1910
      %v2137 = vmul.f32 %v823, %v1912
      %v2138 = vmul.f32 %v825, %v1914
      %v2139 = vmul.f32 %v936, %v1916
      %v2140 = vmul.f32 %v938, %v1918
      %v2141 = vmul.f32 %v1049, %v1920
      %v2142 = vmul.f32 %v1051, %v1922
      %v2143 = vmul.f32 %v603, %v1924
      %v2144 = vmul.f32 %v605, %v1926
      %v2145 = vmul.f32 %v716, %v1928
      %v2146 = vmul.f32 %v718, %v1930
      %v2147 = vmul.f32 %v829, %v1932
      %v2148 = vmul.f32 %v831, %v1934
      %v2149 = vmul.f32 %v942, %v1936
      %v2150 = vmul.f32 %v944, %v1938
      %v2151 = vmul.f32 %v1055, %v1940
      %v2152 = vmul.f32 %v1057, %v1942
      %v2153 = vmul.f32 %v607, %v1944
      %v2154 = vmul.f32 %v609, %v1946
      %v2155 = vmul.f32 %v720, %v1948
      %v2156 = vmul.f32 %v722, %v1950
      %v2157 = vmul.f32 %v833, %v1952
      %v2158 = vmul.f32 %v835, %v1954
      %v2159 = vmul.f32 %v946, %v1956
      %v2160 = vmul.f32 %v948, %v1958
      %v2161 = vmul.f32 %v1059, %v1960
      %v2162 = vmul.f32 %v1061, %v1962
      %v2163 = vmul.f32 %v613, %v1964
      %v2164 = vmul.f32 %v615, %v1966
      %v2165 = vmul.f32 %v726, %v1968
      %v2166 = vmul.f32 %v728, %v1970
      %v2167 = vmul.f32 %v839, %v1972
      %v2168 = vmul.f32 %v841, %v1974
      %v2169 = vmul.f32 %v952, %v1976
      %v2170 = vmul.f32 %v954, %v1978
      %v2171 = vmul.f32 %v1065, %v1980
      %v2172 = vmul.f32 %v1067, %v1982
      %v2173 = vmul.f32 %v617, %v1984
      %v2174 = vmul.f32 %v619, %v1986
      %v2175 = vmul.f32 %v730, %v1988
      %v2176 = vmul.f32 %v732, %v1990
      %v2177 = vmul.f32 %v843, %v1992
      %v2178 = vmul.f32 %v845, %v1994
      %v2179 = vmul.f32 %v956, %v1996
      %v2180 = vmul.f32 %v958, %v1998
      %v2181 = vmul.f32 %v1069, %v2000
      %v2182 = vmul.f32 %v1071, %v2002
      %v2183 = vmul.f32 %v623, %v2004
      %v2184 = vmul.f32 %v625, %v2006
      %v2185 = vmul.f32 %v736, %v2008
      %v2186 = vmul.f32 %v738, %v2010
      %v2187 = vmul.f32 %v849, %v2012
      %v2188 = vmul.f32 %v851, %v2014
      %v2189 = vmul.f32 %v962, %v2016
      %v2190 = vmul.f32 %v964, %v2018
      %v2191 = vmul.f32 %v1075, %v2020
      %v2192 = vmul.f32 %v1077, %v2022
      %v2193 = vmul.f32 %v627, %v2024
      %v2194 = vmul.f32 %v629, %v2026
      %v2195 = vmul.f32 %v740, %v2028
      %v2196 = vmul.f32 %v742, %v2030
      %v2197 = vmul.f32 %v853, %v2032
      %v2198 = vmul.f32 %v855, %v2034
      %v2199 = vmul.f32 %v966, %v2036
      %v2200 = vmul.f32 %v968, %v2038
      %v2201 = vmul.f32 %v1079, %v2040
      %v2202 = vmul.f32 %v1081, %v2042
      %v2203 = vadd.f32 %v2043, %v2053
      %v2204 = vadd.f32 %v2203, %v2063
      %v2205 = vadd.f32 %v2204, %v2073
      %v2206 = vadd.f32 %v2205, %v2083
      %v2207 = vadd.f32 %v2206, %v2093
      %v2208 = vadd.f32 %v2207, %v2103
      %v2209 = vadd.f32 %v2208, %v2113
      %v2210 = vrot.slane %v2209, 4
      %v2211 = vadd.f32 %v2209, %v2210
      %v2212 = vrot.slane %v2211, 2
      %v2213 = vadd.f32 %v2211, %v2212
      %v2214 = vrot.slane %v2213, 1
      %v2215 = vadd.f32 %v2213, %v2214
      %v2216 = vadd.f32 %v2044, %v2054
      %v2217 = vadd.f32 %v2216, %v2064
      %v2218 = vadd.f32 %v2217, %v2074
      %v2219 = vadd.f32 %v2218, %v2084
      %v2220 = vadd.f32 %v2219, %v2094
      %v2221 = vadd.f32 %v2220, %v2104
      %v2222 = vadd.f32 %v2221, %v2114
      %v2223 = vrot.slane %v2222, 4
      %v2224 = vadd.f32 %v2222, %v2223
      %v2225 = vrot.slane %v2224, 2
      %v2226 = vadd.f32 %v2224, %v2225
      %v2227 = vrot.slane %v2226, 1
      %v2228 = vadd.f32 %v2226, %v2227
      %v2229 = vadd.f32 %v2045, %v2055
      %v2230 = vadd.f32 %v2229, %v2065
      %v2231 = vadd.f32 %v2230, %v2075
      %v2232 = vadd.f32 %v2231, %v2085
      %v2233 = vadd.f32 %v2232, %v2095
      %v2234 = vadd.f32 %v2233, %v2105
      %v2235 = vadd.f32 %v2234, %v2115
      %v2236 = vrot.slane %v2235, 4
      %v2237 = vadd.f32 %v2235, %v2236
      %v2238 = vrot.slane %v2237, 2
      %v2239 = vadd.f32 %v2237, %v2238
      %v2240 = vrot.slane %v2239, 1
      %v2241 = vadd.f32 %v2239, %v2240
      %v2242 = vadd.f32 %v2046, %v2056
      %v2243 = vadd.f32 %v2242, %v2066
      %v2244 = vadd.f32 %v2243, %v2076
      %v2245 = vadd.f32 %v2244, %v2086
      %v2246 = vadd.f32 %v2245, %v2096
      %v2247 = vadd.f32 %v2246, %v2106
      %v2248 = vadd.f32 %v2247, %v2116
      %v2249 = vrot.slane %v2248, 4
      %v2250 = vadd.f32 %v2248, %v2249
      %v2251 = vrot.slane %v2250, 2
      %v2252 = vadd.f32 %v2250, %v2251
      %v2253 = vrot.slane %v2252, 1
      %v2254 = vadd.f32 %v2252, %v2253
      %v2255 = vadd.f32 %v2047, %v2057
      %v2256 = vadd.f32 %v2255, %v2067
      %v2257 = vadd.f32 %v2256, %v2077
      %v2258 = vadd.f32 %v2257, %v2087
      %v2259 = vadd.f32 %v2258, %v2097
      %v2260 = vadd.f32 %v2259, %v2107
      %v2261 = vadd.f32 %v2260, %v2117
      %v2262 = vrot.slane %v2261, 4
      %v2263 = vadd.f32 %v2261, %v2262
      %v2264 = vrot.slane %v2263, 2
      %v2265 = vadd.f32 %v2263, %v2264
      %v2266 = vrot.slane %v2265, 1
      %v2267 = vadd.f32 %v2265, %v2266
      %v2268 = vadd.f32 %v2048, %v2058
      %v2269 = vadd.f32 %v2268, %v2068
      %v2270 = vadd.f32 %v2269, %v2078
      %v2271 = vadd.f32 %v2270, %v2088
      %v2272 = vadd.f32 %v2271, %v2098
      %v2273 = vadd.f32 %v2272, %v2108
      %v2274 = vadd.f32 %v2273, %v2118
      %v2275 = vrot.slane %v2274, 4
      %v2276 = vadd.f32 %v2274, %v2275
      %v2277 = vrot.slane %v2276, 2
      %v2278 = vadd.f32 %v2276, %v2277
      %v2279 = vrot.slane %v2278, 1
      %v2280 = vadd.f32 %v2278, %v2279
      %v2281 = vadd.f32 %v2049, %v2059
      %v2282 = vadd.f32 %v2281, %v2069
      %v2283 = vadd.f32 %v2282, %v2079
      %v2284 = vadd.f32 %v2283, %v2089
      %v2285 = vadd.f32 %v2284, %v2099
      %v2286 = vadd.f32 %v2285, %v2109
      %v2287 = vadd.f32 %v2286, %v2119
      %v2288 = vrot.slane %v2287, 4
      %v2289 = vadd.f32 %v2287, %v2288
      %v2290 = vrot.slane %v2289, 2
      %v2291 = vadd.f32 %v2289, %v2290
      %v2292 = vrot.slane %v2291, 1
      %v2293 = vadd.f32 %v2291, %v2292
      %v2294 = vadd.f32 %v2050, %v2060
      %v2295 = vadd.f32 %v2294, %v2070
      %v2296 = vadd.f32 %v2295, %v2080
      %v2297 = vadd.f32 %v2296, %v2090
      %v2298 = vadd.f32 %v2297, %v2100
      %v2299 = vadd.f32 %v2298, %v2110
      %v2300 = vadd.f32 %v2299, %v2120
      %v2301 = vrot.slane %v2300, 4
      %v2302 = vadd.f32 %v2300, %v2301
      %v2303 = vrot.slane %v2302, 2
      %v2304 = vadd.f32 %v2302, %v2303
      %v2305 = vrot.slane %v2304, 1
      %v2306 = vadd.f32 %v2304, %v2305
      %v2307 = vadd.f32 %v2051, %v2061
      %v2308 = vadd.f32 %v2307, %v2071
      %v2309 = vadd.f32 %v2308, %v2081
      %v2310 = vadd.f32 %v2309, %v2091
      %v2311 = vadd.f32 %v2310, %v2101
      %v2312 = vadd.f32 %v2311, %v2111
      %v2313 = vadd.f32 %v2312, %v2121
      %v2314 = vrot.slane %v2313, 4
      %v2315 = vadd.f32 %v2313, %v2314
      %v2316 = vrot.slane %v2315, 2
      %v2317 = vadd.f32 %v2315, %v2316
      %v2318 = vrot.slane %v2317, 1
      %v2319 = vadd.f32 %v2317, %v2318
      %v2320 = vadd.f32 %v2052, %v2062
      %v2321 = vadd.f32 %v2320, %v2072
      %v2322 = vadd.f32 %v2321, %v2082
      %v2323 = vadd.f32 %v2322, %v2092
      %v2324 = vadd.f32 %v2323, %v2102
      %v2325 = vadd.f32 %v2324, %v2112
      %v2326 = vadd.f32 %v2325, %v2122
      %v2327 = vrot.slane %v2326, 4
      %v2328 = vadd.f32 %v2326, %v2327
      %v2329 = vrot.slane %v2328, 2
      %v2330 = vadd.f32 %v2328, %v2329
      %v2331 = vrot.slane %v2330, 1
      %v2332 = vadd.f32 %v2330, %v2331
      %v2333 = vadd.f32 %v2123, %v2133
      %v2334 = vadd.f32 %v2333, %v2143
      %v2335 = vadd.f32 %v2334, %v2153
      %v2336 = vadd.f32 %v2335, %v2163
      %v2337 = vadd.f32 %v2336, %v2173
      %v2338 = vadd.f32 %v2337, %v2183
      %v2339 = vadd.f32 %v2338, %v2193
      %v2340 = vrot.slane %v2339, 4
      %v2341 = vadd.f32 %v2339, %v2340
      %v2342 = vrot.slane %v2341, 2
      %v2343 = vadd.f32 %v2341, %v2342
      %v2344 = vrot.slane %v2343, 1
      %v2345 = vadd.f32 %v2343, %v2344
      %v2346 = vadd.f32 %v2124, %v2134
      %v2347 = vadd.f32 %v2346, %v2144
      %v2348 = vadd.f32 %v2347, %v2154
      %v2349 = vadd.f32 %v2348, %v2164
      %v2350 = vadd.f32 %v2349, %v2174
      %v2351 = vadd.f32 %v2350, %v2184
      %v2352 = vadd.f32 %v2351, %v2194
      %v2353 = vrot.slane %v2352, 4
      %v2354 = vadd.f32 %v2352, %v2353
      %v2355 = vrot.slane %v2354, 2
      %v2356 = vadd.f32 %v2354, %v2355
      %v2357 = vrot.slane %v2356, 1
      %v2358 = vadd.f32 %v2356, %v2357
      %v2359 = vadd.f32 %v2125, %v2135
      %v2360 = vadd.f32 %v2359, %v2145
      %v2361 = vadd.f32 %v2360, %v2155
      %v2362 = vadd.f32 %v2361, %v2165
      %v2363 = vadd.f32 %v2362, %v2175
      %v2364 = vadd.f32 %v2363, %v2185
      %v2365 = vadd.f32 %v2364, %v2195
      %v2366 = vrot.slane %v2365, 4
      %v2367 = vadd.f32 %v2365, %v2366
      %v2368 = vrot.slane %v2367, 2
      %v2369 = vadd.f32 %v2367, %v2368
      %v2370 = vrot.slane %v2369, 1
      %v2371 = vadd.f32 %v2369, %v2370
      %v2372 = vadd.f32 %v2126, %v2136
      %v2373 = vadd.f32 %v2372, %v2146
      %v2374 = vadd.f32 %v2373, %v2156
      %v2375 = vadd.f32 %v2374, %v2166
      %v2376 = vadd.f32 %v2375, %v2176
      %v2377 = vadd.f32 %v2376, %v2186
      %v2378 = vadd.f32 %v2377, %v2196
      %v2379 = vrot.slane %v2378, 4
      %v2380 = vadd.f32 %v2378, %v2379
      %v2381 = vrot.slane %v2380, 2
      %v2382 = vadd.f32 %v2380, %v2381
      %v2383 = vrot.slane %v2382, 1
      %v2384 = vadd.f32 %v2382, %v2383
      %v2385 = vadd.f32 %v2127, %v2137
      %v2386 = vadd.f32 %v2385, %v2147
      %v2387 = vadd.f32 %v2386, %v2157
      %v2388 = vadd.f32 %v2387, %v2167
      %v2389 = vadd.f32 %v2388, %v2177
      %v2390 = vadd.f32 %v2389, %v2187
      %v2391 = vadd.f32 %v2390, %v2197
      %v2392 = vrot.slane %v2391, 4
      %v2393 = vadd.f32 %v2391, %v2392
      %v2394 = vrot.slane %v2393, 2
      %v2395 = vadd.f32 %v2393, %v2394
      %v2396 = vrot.slane %v2395, 1
      %v2397 = vadd.f32 %v2395, %v2396
      %v2398 = vadd.f32 %v2128, %v2138
      %v2399 = vadd.f32 %v2398, %v2148
      %v2400 = vadd.f32 %v2399, %v2158
      %v2401 = vadd.f32 %v2400, %v2168
      %v2402 = vadd.f32 %v2401, %v2178
      %v2403 = vadd.f32 %v2402, %v2188
      %v2404 = vadd.f32 %v2403, %v2198
      %v2405 = vrot.slane %v2404, 4
      %v2406 = vadd.f32 %v2404, %v2405
      %v2407 = vrot.slane %v2406, 2
      %v2408 = vadd.f32 %v2406, %v2407
      %v2409 = vrot.slane %v2408, 1
      %v2410 = vadd.f32 %v2408, %v2409
      %v2411 = vadd.f32 %v2129, %v2139
      %v2412 = vadd.f32 %v2411, %v2149
      %v2413 = vadd.f32 %v2412, %v2159
      %v2414 = vadd.f32 %v2413, %v2169
      %v2415 = vadd.f32 %v2414, %v2179
      %v2416 = vadd.f32 %v2415, %v2189
      %v2417 = vadd.f32 %v2416, %v2199
      %v2418 = vrot.slane %v2417, 4
      %v2419 = vadd.f32 %v2417, %v2418
      %v2420 = vrot.slane %v2419, 2
      %v2421 = vadd.f32 %v2419, %v2420
      %v2422 = vrot.slane %v2421, 1
      %v2423 = vadd.f32 %v2421, %v2422
      %v2424 = vadd.f32 %v2130, %v2140
      %v2425 = vadd.f32 %v2424, %v2150
      %v2426 = vadd.f32 %v2425, %v2160
      %v2427 = vadd.f32 %v2426, %v2170
      %v2428 = vadd.f32 %v2427, %v2180
      %v2429 = vadd.f32 %v2428, %v2190
      %v2430 = vadd.f32 %v2429, %v2200
      %v2431 = vrot.slane %v2430, 4
      %v2432 = vadd.f32 %v2430, %v2431
      %v2433 = vrot.slane %v2432, 2
      %v2434 = vadd.f32 %v2432, %v2433
      %v2435 = vrot.slane %v2434, 1
      %v2436 = vadd.f32 %v2434, %v2435
      %v2437 = vadd.f32 %v2131, %v2141
      %v2438 = vadd.f32 %v2437, %v2151
      %v2439 = vadd.f32 %v2438, %v2161
      %v2440 = vadd.f32 %v2439, %v2171
      %v2441 = vadd.f32 %v2440, %v2181
      %v2442 = vadd.f32 %v2441, %v2191
      %v2443 = vadd.f32 %v2442, %v2201
      %v2444 = vrot.slane %v2443, 4
      %v2445 = vadd.f32 %v2443, %v2444
      %v2446 = vrot.slane %v2445, 2
      %v2447 = vadd.f32 %v2445, %v2446
      %v2448 = vrot.slane %v2447, 1
      %v2449 = vadd.f32 %v2447, %v2448
      %v2450 = vadd.f32 %v2132, %v2142
      %v2451 = vadd.f32 %v2450, %v2152
      %v2452 = vadd.f32 %v2451, %v2162
      %v2453 = vadd.f32 %v2452, %v2172
      %v2454 = vadd.f32 %v2453, %v2182
      %v2455 = vadd.f32 %v2454, %v2192
      %v2456 = vadd.f32 %v2455, %v2202
      %v2457 = vrot.slane %v2456, 4
      %v2458 = vadd.f32 %v2456, %v2457
      %v2459 = vrot.slane %v2458, 2
      %v2460 = vadd.f32 %v2458, %v2459
      %v2461 = vrot.slane %v2460, 1
      %v2462 = vadd.f32 %v2460, %v2461
      %v2463 = vmul.f32 %v2215, 0.015625
      %v2464 = vmul.f32 %v2228, 0.015625
      %v2465 = vmul.f32 %v2241, 0.015625
      %v2466 = vmul.f32 %v2254, 0.015625
      %v2467 = vmul.f32 %v2267, 0.015625
      %v2468 = vmul.f32 %v2280, 0.015625
      %v2469 = vmul.f32 %v2293, 0.015625
      %v2470 = vmul.f32 %v2306, 0.015625
      %v2471 = vmul.f32 %v2319, 0.015625
      %v2472 = vmul.f32 %v2332, 0.015625
      %v2473 = vmul.f32 %v2345, 0.015625
      %v2474 = vmul.f32 %v2358, 0.015625
      %v2475 = vmul.f32 %v2371, 0.015625
      %v2476 = vmul.f32 %v2384, 0.015625
      %v2477 = vmul.f32 %v2397, 0.015625
      %v2478 = vmul.f32 %v2410, 0.015625
      %v2479 = vmul.f32 %v2423, 0.015625
      %v2480 = vmul.f32 %v2436, 0.015625
      %v2481 = vmul.f32 %v2449, 0.015625
      %v2482 = vmul.f32 %v2462, 0.015625
      %v2483 = vpack.c.bf16 %v2463, %v2463
      %v2484 = vpack.c.bf16 %v2464, %v2464
      %v2485 = vpack.c.bf16 %v2465, %v2465
      %v2486 = vpack.c.bf16 %v2466, %v2466
      %v2487 = vpack.c.bf16 %v2467, %v2467
      %v2488 = vpack.c.bf16 %v2468, %v2468
      %v2489 = vpack.c.bf16 %v2469, %v2469
      %v2490 = vpack.c.bf16 %v2470, %v2470
      %v2491 = vpack.c.bf16 %v2471, %v2471
      %v2492 = vpack.c.bf16 %v2472, %v2472
      %v2493 = vpack.c.bf16 %v2473, %v2473
      %v2494 = vpack.c.bf16 %v2474, %v2474
      %v2495 = vpack.c.bf16 %v2475, %v2475
      %v2496 = vpack.c.bf16 %v2476, %v2476
      %v2497 = vpack.c.bf16 %v2477, %v2477
      %v2498 = vpack.c.bf16 %v2478, %v2478
      %v2499 = vpack.c.bf16 %v2479, %v2479
      %v2500 = vpack.c.bf16 %v2480, %v2480
      %v2501 = vpack.c.bf16 %v2481, %v2481
      %v2502 = vpack.c.bf16 %v2482, %v2482
      %v2503 = vld [vmem:[%s252] sm:$0xff]
      %v2504 = vld [vmem:[%s252 + $0x8] sm:$0xff]
      %v2505 = vld [vmem:[%s252 + $0x10] sm:$0xff]
      %v2506 = vld [vmem:[%s252 + $0x18] sm:$0xff]
      %v2507 = vld [vmem:[%s252 + $0x20] sm:$0xff]
      %v2508 = vld [vmem:[%s252 + $0x28] sm:$0xff]
      %v2509 = vld [vmem:[%s252 + $0x30] sm:$0xff]
      %v2510 = vld [vmem:[%s252 + $0x38] sm:$0xff]
      %v2511 = vld [vmem:[%s252 + $0x40] sm:$0xff]
      %v2512 = vld [vmem:[%s252 + $0x48] sm:$0xff]
      %v2513 = vld [vmem:[%s252 + $0x50] sm:$0xff]
      %v2514 = vld [vmem:[%s252 + $0x58] sm:$0xff]
      %v2515 = vld [vmem:[%s252 + $0x60] sm:$0xff]
      %v2516 = vld [vmem:[%s252 + $0x68] sm:$0xff]
      %v2517 = vld [vmem:[%s252 + $0x70] sm:$0xff]
      %v2518 = vld [vmem:[%s252 + $0x78] sm:$0xff]
      %v2519 = vld [vmem:[%s252 + $0x80] sm:$0xff]
      %v2520 = vld [vmem:[%s252 + $0x88] sm:$0xff]
      %v2521 = vld [vmem:[%s252 + $0x90] sm:$0xff]
      %v2522 = vld [vmem:[%s252 + $0x98] sm:$0xff]
      %v2523 = vld [vmem:[%s252 + $0xa0] sm:$0xff]
      %v2524 = vld [vmem:[%s252 + $0xa8] sm:$0xff]
      %v2525 = vld [vmem:[%s252 + $0xb0] sm:$0xff]
      %v2526 = vld [vmem:[%s252 + $0xb8] sm:$0xff]
      %v2527 = vld [vmem:[%s252 + $0xc0] sm:$0xff]
      %v2528 = vld [vmem:[%s252 + $0xc8] sm:$0xff]
      %v2529 = vld [vmem:[%s252 + $0xd0] sm:$0xff]
      %v2530 = vld [vmem:[%s252 + $0xd8] sm:$0xff]
      %v2531 = vld [vmem:[%s252 + $0xe0] sm:$0xff]
      %v2532 = vld [vmem:[%s252 + $0xe8] sm:$0xff]
      %v2533 = vld [vmem:[%s252 + $0xf0] sm:$0xff]
      %v2534 = vld [vmem:[%s252 + $0xf8] sm:$0xff]
      %v2535 = vld [vmem:[%s252 + $0x100] sm:$0xff]
      %v2536 = vld [vmem:[%s252 + $0x108] sm:$0xff]
      %v2537 = vld [vmem:[%s252 + $0x110] sm:$0xff]
      %v2538 = vld [vmem:[%s252 + $0x118] sm:$0xff]
      %v2539 = vld [vmem:[%s252 + $0x120] sm:$0xff]
      %v2540 = vld [vmem:[%s252 + $0x128] sm:$0xff]
      %v2541 = vld [vmem:[%s252 + $0x130] sm:$0xff]
      %v2542 = vld [vmem:[%s252 + $0x138] sm:$0xff]
      %v2543 = vld [vmem:[%s252 + $0x140] sm:$0xff]
      %v2544 = vld [vmem:[%s252 + $0x148] sm:$0xff]
      %v2545 = vld [vmem:[%s252 + $0x150] sm:$0xff]
      %v2546 = vld [vmem:[%s252 + $0x158] sm:$0xff]
      %v2547 = vld [vmem:[%s252 + $0x160] sm:$0xff]
      %v2548 = vld [vmem:[%s252 + $0x168] sm:$0xff]
      %v2549 = vld [vmem:[%s252 + $0x170] sm:$0xff]
      %v2550 = vld [vmem:[%s252 + $0x178] sm:$0xff]
      %v2551 = vld [vmem:[%s252 + $0x180] sm:$0xff]
      %v2552 = vld [vmem:[%s252 + $0x188] sm:$0xff]
      %v2553 = vld [vmem:[%s252 + $0x190] sm:$0xff]
      %v2554 = vld [vmem:[%s252 + $0x198] sm:$0xff]
      %v2555 = vld [vmem:[%s252 + $0x1a0] sm:$0xff]
      %v2556 = vld [vmem:[%s252 + $0x1a8] sm:$0xff]
      %v2557 = vld [vmem:[%s252 + $0x1b0] sm:$0xff]
      %v2558 = vld [vmem:[%s252 + $0x1b8] sm:$0xff]
      %v2559 = vld [vmem:[%s252 + $0x1c0] sm:$0xff]
      %v2560 = vld [vmem:[%s252 + $0x1c8] sm:$0xff]
      %v2561 = vld [vmem:[%s252 + $0x1d0] sm:$0xff]
      %v2562 = vld [vmem:[%s252 + $0x1d8] sm:$0xff]
      %v2563 = vld [vmem:[%s252 + $0x1e0] sm:$0xff]
      %v2564 = vld [vmem:[%s252 + $0x1e8] sm:$0xff]
      %v2565 = vld [vmem:[%s252 + $0x1f0] sm:$0xff]
      %v2566 = vld [vmem:[%s252 + $0x1f8] sm:$0xff]
      %v2567 = vld [vmem:[%s252 + $0x200] sm:$0xff]
      %v2568 = vld [vmem:[%s252 + $0x208] sm:$0xff]
      %v2569 = vld [vmem:[%s252 + $0x210] sm:$0xff]
      %v2570 = vld [vmem:[%s252 + $0x218] sm:$0xff]
      %v2571 = vld [vmem:[%s252 + $0x220] sm:$0xff]
      %v2572 = vld [vmem:[%s252 + $0x228] sm:$0xff]
      %v2573 = vld [vmem:[%s252 + $0x230] sm:$0xff]
      %v2574 = vld [vmem:[%s252 + $0x238] sm:$0xff]
      %v2575 = vld [vmem:[%s252 + $0x240] sm:$0xff]
      %v2576 = vld [vmem:[%s252 + $0x248] sm:$0xff]
      %v2577 = vld [vmem:[%s252 + $0x250] sm:$0xff]
      %v2578 = vld [vmem:[%s252 + $0x258] sm:$0xff]
      %v2579 = vld [vmem:[%s252 + $0x260] sm:$0xff]
      %v2580 = vld [vmem:[%s252 + $0x268] sm:$0xff]
      %v2581 = vld [vmem:[%s252 + $0x270] sm:$0xff]
      %v2582 = vld [vmem:[%s252 + $0x278] sm:$0xff]
      %v2583 = vld [vmem:[%s252 + $0x280] sm:$0xff]
      %v2584 = vld [vmem:[%s252 + $0x288] sm:$0xff]
      %v2585 = vld [vmem:[%s252 + $0x290] sm:$0xff]
      %v2586 = vld [vmem:[%s252 + $0x298] sm:$0xff]
      %v2587 = vld [vmem:[%s252 + $0x2a0] sm:$0xff]
      %v2588 = vld [vmem:[%s252 + $0x2a8] sm:$0xff]
      %v2589 = vld [vmem:[%s252 + $0x2b0] sm:$0xff]
      %v2590 = vld [vmem:[%s252 + $0x2b8] sm:$0xff]
      %v2591 = vld [vmem:[%s252 + $0x2c0] sm:$0xff]
      %v2592 = vld [vmem:[%s252 + $0x2c8] sm:$0xff]
      %v2593 = vld [vmem:[%s252 + $0x2d0] sm:$0xff]
      %v2594 = vld [vmem:[%s252 + $0x2d8] sm:$0xff]
      %v2595 = vld [vmem:[%s252 + $0x2e0] sm:$0xff]
      %v2596 = vld [vmem:[%s252 + $0x2e8] sm:$0xff]
      %v2597 = vld [vmem:[%s252 + $0x2f0] sm:$0xff]
      %v2598 = vld [vmem:[%s252 + $0x2f8] sm:$0xff]
      %v2599 = vld [vmem:[%s252 + $0x300] sm:$0xff]
      %v2600 = vld [vmem:[%s252 + $0x308] sm:$0xff]
      %v2601 = vld [vmem:[%s252 + $0x310] sm:$0xff]
      %v2602 = vld [vmem:[%s252 + $0x318] sm:$0xff]
      %v2603 = vld [vmem:[%s252 + $0x320] sm:$0xff]
      %v2604 = vld [vmem:[%s252 + $0x328] sm:$0xff]
      %v2605 = vld [vmem:[%s252 + $0x330] sm:$0xff]
      %v2606 = vld [vmem:[%s252 + $0x338] sm:$0xff]
      %v2607 = vld [vmem:[%s252 + $0x340] sm:$0xff]
      %v2608 = vld [vmem:[%s252 + $0x348] sm:$0xff]
      %v2609 = vld [vmem:[%s252 + $0x350] sm:$0xff]
      %v2610 = vld [vmem:[%s252 + $0x358] sm:$0xff]
      %v2611 = vld [vmem:[%s252 + $0x360] sm:$0xff]
      %v2612 = vld [vmem:[%s252 + $0x368] sm:$0xff]
      %v2613 = vld [vmem:[%s252 + $0x370] sm:$0xff]
      %v2614 = vld [vmem:[%s252 + $0x378] sm:$0xff]
      %v2615 = vld [vmem:[%s252 + $0x380] sm:$0xff]
      %v2616 = vld [vmem:[%s252 + $0x388] sm:$0xff]
      %v2617 = vld [vmem:[%s252 + $0x390] sm:$0xff]
      %v2618 = vld [vmem:[%s252 + $0x398] sm:$0xff]
      %v2619 = vld [vmem:[%s252 + $0x3a0] sm:$0xff]
      %v2620 = vld [vmem:[%s252 + $0x3a8] sm:$0xff]
      %v2621 = vld [vmem:[%s252 + $0x3b0] sm:$0xff]
      %v2622 = vld [vmem:[%s252 + $0x3b8] sm:$0xff]
      %v2623 = vld [vmem:[%s252 + $0x3c0] sm:$0xff]
      %v2624 = vld [vmem:[%s252 + $0x3c8] sm:$0xff]
      %v2625 = vld [vmem:[%s252 + $0x3d0] sm:$0xff]
      %v2626 = vld [vmem:[%s252 + $0x3d8] sm:$0xff]
      %v2627 = vld [vmem:[%s252 + $0x3e0] sm:$0xff]
      %v2628 = vld [vmem:[%s252 + $0x3e8] sm:$0xff]
      %v2629 = vld [vmem:[%s252 + $0x3f0] sm:$0xff]
      %v2630 = vld [vmem:[%s252 + $0x3f8] sm:$0xff]
      %v2631 = vld [vmem:[%s252 + $0x400] sm:$0xff]
      %v2632 = vld [vmem:[%s252 + $0x408] sm:$0xff]
      %v2633 = vld [vmem:[%s252 + $0x410] sm:$0xff]
      %v2634 = vld [vmem:[%s252 + $0x418] sm:$0xff]
      %v2635 = vld [vmem:[%s252 + $0x420] sm:$0xff]
      %v2636 = vld [vmem:[%s252 + $0x428] sm:$0xff]
      %v2637 = vld [vmem:[%s252 + $0x430] sm:$0xff]
      %v2638 = vld [vmem:[%s252 + $0x438] sm:$0xff]
      %v2639 = vld [vmem:[%s252 + $0x440] sm:$0xff]
      %v2640 = vld [vmem:[%s252 + $0x448] sm:$0xff]
      %v2641 = vld [vmem:[%s252 + $0x450] sm:$0xff]
      %v2642 = vld [vmem:[%s252 + $0x458] sm:$0xff]
      %v2643 = vld [vmem:[%s252 + $0x460] sm:$0xff]
      %v2644 = vld [vmem:[%s252 + $0x468] sm:$0xff]
      %v2645 = vld [vmem:[%s252 + $0x470] sm:$0xff]
      %v2646 = vld [vmem:[%s252 + $0x478] sm:$0xff]
      %v2647 = vld [vmem:[%s252 + $0x480] sm:$0xff]
      %v2648 = vld [vmem:[%s252 + $0x488] sm:$0xff]
      %v2649 = vld [vmem:[%s252 + $0x490] sm:$0xff]
      %v2650 = vld [vmem:[%s252 + $0x498] sm:$0xff]
      %v2651 = vld [vmem:[%s252 + $0x4a0] sm:$0xff]
      %v2652 = vld [vmem:[%s252 + $0x4a8] sm:$0xff]
      %v2653 = vld [vmem:[%s252 + $0x4b0] sm:$0xff]
      %v2654 = vld [vmem:[%s252 + $0x4b8] sm:$0xff]
      %v2655 = vld [vmem:[%s252 + $0x4c0] sm:$0xff]
      %v2656 = vld [vmem:[%s252 + $0x4c8] sm:$0xff]
      %v2657 = vld [vmem:[%s252 + $0x4d0] sm:$0xff]
      %v2658 = vld [vmem:[%s252 + $0x4d8] sm:$0xff]
      %v2659 = vld [vmem:[%s252 + $0x4e0] sm:$0xff]
      %v2660 = vld [vmem:[%s252 + $0x4e8] sm:$0xff]
      %v2661 = vld [vmem:[%s252 + $0x4f0] sm:$0xff]
      %v2662 = vld [vmem:[%s252 + $0x4f8] sm:$0xff]
      %v2663 = vld [vmem:[%s252 + $0x500] sm:$0xff]
      %v2664 = vld [vmem:[%s252 + $0x508] sm:$0xff]
      %v2665 = vld [vmem:[%s252 + $0x510] sm:$0xff]
      %v2666 = vld [vmem:[%s252 + $0x518] sm:$0xff]
      %v2667 = vld [vmem:[%s252 + $0x520] sm:$0xff]
      %v2668 = vld [vmem:[%s252 + $0x528] sm:$0xff]
      %v2669 = vld [vmem:[%s252 + $0x530] sm:$0xff]
      %v2670 = vld [vmem:[%s252 + $0x538] sm:$0xff]
      %v2671 = vld [vmem:[%s252 + $0x540] sm:$0xff]
      %v2672 = vld [vmem:[%s252 + $0x548] sm:$0xff]
      %v2673 = vld [vmem:[%s252 + $0x550] sm:$0xff]
      %v2674 = vld [vmem:[%s252 + $0x558] sm:$0xff]
      %v2675 = vld [vmem:[%s252 + $0x560] sm:$0xff]
      %v2676 = vld [vmem:[%s252 + $0x568] sm:$0xff]
      %v2677 = vld [vmem:[%s252 + $0x570] sm:$0xff]
      %v2678 = vld [vmem:[%s252 + $0x578] sm:$0xff]
      %v2679 = vld [vmem:[%s252 + $0x580] sm:$0xff]
      %v2680 = vld [vmem:[%s252 + $0x588] sm:$0xff]
      %v2681 = vld [vmem:[%s252 + $0x590] sm:$0xff]
      %v2682 = vld [vmem:[%s252 + $0x598] sm:$0xff]
      %v2683 = vld [vmem:[%s252 + $0x5a0] sm:$0xff]
      %v2684 = vld [vmem:[%s252 + $0x5a8] sm:$0xff]
      %v2685 = vld [vmem:[%s252 + $0x5b0] sm:$0xff]
      %v2686 = vld [vmem:[%s252 + $0x5b8] sm:$0xff]
      %v2687 = vld [vmem:[%s252 + $0x5c0] sm:$0xff]
      %v2688 = vld [vmem:[%s252 + $0x5c8] sm:$0xff]
      %v2689 = vld [vmem:[%s252 + $0x5d0] sm:$0xff]
      %v2690 = vld [vmem:[%s252 + $0x5d8] sm:$0xff]
      %v2691 = vld [vmem:[%s252 + $0x5e0] sm:$0xff]
      %v2692 = vld [vmem:[%s252 + $0x5e8] sm:$0xff]
      %v2693 = vld [vmem:[%s252 + $0x5f0] sm:$0xff]
      %v2694 = vld [vmem:[%s252 + $0x5f8] sm:$0xff]
      %v2695 = vld [vmem:[%s252 + $0x600] sm:$0xff]
      %v2696 = vld [vmem:[%s252 + $0x608] sm:$0xff]
      %v2697 = vld [vmem:[%s252 + $0x610] sm:$0xff]
      %v2698 = vld [vmem:[%s252 + $0x618] sm:$0xff]
      %v2699 = vld [vmem:[%s252 + $0x620] sm:$0xff]
      %v2700 = vld [vmem:[%s252 + $0x628] sm:$0xff]
      %v2701 = vld [vmem:[%s252 + $0x630] sm:$0xff]
      %v2702 = vld [vmem:[%s252 + $0x638] sm:$0xff]
      %v2703 = vld [vmem:[%s252 + $0x640] sm:$0xff]
      %v2704 = vld [vmem:[%s252 + $0x648] sm:$0xff]
      %v2705 = vld [vmem:[%s252 + $0x650] sm:$0xff]
      %v2706 = vld [vmem:[%s252 + $0x658] sm:$0xff]
      %v2707 = vld [vmem:[%s252 + $0x660] sm:$0xff]
      %v2708 = vld [vmem:[%s252 + $0x668] sm:$0xff]
      %v2709 = vld [vmem:[%s252 + $0x670] sm:$0xff]
      %v2710 = vld [vmem:[%s252 + $0x678] sm:$0xff]
      %v2711 = vld [vmem:[%s252 + $0x680] sm:$0xff]
      %v2712 = vld [vmem:[%s252 + $0x688] sm:$0xff]
      %v2713 = vld [vmem:[%s252 + $0x690] sm:$0xff]
      %v2714 = vld [vmem:[%s252 + $0x698] sm:$0xff]
      %v2715 = vld [vmem:[%s252 + $0x6a0] sm:$0xff]
      %v2716 = vld [vmem:[%s252 + $0x6a8] sm:$0xff]
      %v2717 = vld [vmem:[%s252 + $0x6b0] sm:$0xff]
      %v2718 = vld [vmem:[%s252 + $0x6b8] sm:$0xff]
      %v2719 = vld [vmem:[%s252 + $0x6c0] sm:$0xff]
      %v2720 = vld [vmem:[%s252 + $0x6c8] sm:$0xff]
      %v2721 = vld [vmem:[%s252 + $0x6d0] sm:$0xff]
      %v2722 = vld [vmem:[%s252 + $0x6d8] sm:$0xff]
      %v2723 = vld [vmem:[%s252 + $0x6e0] sm:$0xff]
      %v2724 = vld [vmem:[%s252 + $0x6e8] sm:$0xff]
      %v2725 = vld [vmem:[%s252 + $0x6f0] sm:$0xff]
      %v2726 = vld [vmem:[%s252 + $0x6f8] sm:$0xff]
      %v2727 = vld [vmem:[%s252 + $0x700] sm:$0xff]
      %v2728 = vld [vmem:[%s252 + $0x708] sm:$0xff]
      %v2729 = vld [vmem:[%s252 + $0x710] sm:$0xff]
      %v2730 = vld [vmem:[%s252 + $0x718] sm:$0xff]
      %v2731 = vld [vmem:[%s252 + $0x720] sm:$0xff]
      %v2732 = vld [vmem:[%s252 + $0x728] sm:$0xff]
      %v2733 = vld [vmem:[%s252 + $0x730] sm:$0xff]
      %v2734 = vld [vmem:[%s252 + $0x738] sm:$0xff]
      %v2735 = vld [vmem:[%s252 + $0x740] sm:$0xff]
      %v2736 = vld [vmem:[%s252 + $0x748] sm:$0xff]
      %v2737 = vld [vmem:[%s252 + $0x750] sm:$0xff]
      %v2738 = vld [vmem:[%s252 + $0x758] sm:$0xff]
      %v2739 = vld [vmem:[%s252 + $0x760] sm:$0xff]
      %v2740 = vld [vmem:[%s252 + $0x768] sm:$0xff]
      %v2741 = vld [vmem:[%s252 + $0x770] sm:$0xff]
      %v2742 = vld [vmem:[%s252 + $0x778] sm:$0xff]
      %v2743 = vld [vmem:[%s252 + $0x780] sm:$0xff]
      %v2744 = vld [vmem:[%s252 + $0x788] sm:$0xff]
      %v2745 = vld [vmem:[%s252 + $0x790] sm:$0xff]
      %v2746 = vld [vmem:[%s252 + $0x798] sm:$0xff]
      %v2747 = vld [vmem:[%s252 + $0x7a0] sm:$0xff]
      %v2748 = vld [vmem:[%s252 + $0x7a8] sm:$0xff]
      %v2749 = vld [vmem:[%s252 + $0x7b0] sm:$0xff]
      %v2750 = vld [vmem:[%s252 + $0x7b8] sm:$0xff]
      %v2751 = vld [vmem:[%s252 + $0x7c0] sm:$0xff]
      %v2752 = vld [vmem:[%s252 + $0x7c8] sm:$0xff]
      %v2753 = vld [vmem:[%s252 + $0x7d0] sm:$0xff]
      %v2754 = vld [vmem:[%s252 + $0x7d8] sm:$0xff]
      %v2755 = vld [vmem:[%s252 + $0x7e0] sm:$0xff]
      %v2756 = vld [vmem:[%s252 + $0x7e8] sm:$0xff]
      %v2757 = vld [vmem:[%s252 + $0x7f0] sm:$0xff]
      %v2758 = vld [vmem:[%s252 + $0x7f8] sm:$0xff]
      %v2759 = vld [vmem:[%s252 + $0x800] sm:$0xff]
      %v2760 = vld [vmem:[%s252 + $0x808] sm:$0xff]
      %v2761 = vld [vmem:[%s252 + $0x810] sm:$0xff]
      %v2762 = vld [vmem:[%s252 + $0x818] sm:$0xff]
      %v2763 = vld [vmem:[%s252 + $0x820] sm:$0xff]
      %v2764 = vld [vmem:[%s252 + $0x828] sm:$0xff]
      %v2765 = vld [vmem:[%s252 + $0x830] sm:$0xff]
      %v2766 = vld [vmem:[%s252 + $0x838] sm:$0xff]
      %v2767 = vld [vmem:[%s252 + $0x840] sm:$0xff]
      %v2768 = vld [vmem:[%s252 + $0x848] sm:$0xff]
      %v2769 = vld [vmem:[%s252 + $0x850] sm:$0xff]
      %v2770 = vld [vmem:[%s252 + $0x858] sm:$0xff]
      %v2771 = vld [vmem:[%s252 + $0x860] sm:$0xff]
      %v2772 = vld [vmem:[%s252 + $0x868] sm:$0xff]
      %v2773 = vld [vmem:[%s252 + $0x870] sm:$0xff]
      %v2774 = vld [vmem:[%s252 + $0x878] sm:$0xff]
      %v2775 = vld [vmem:[%s252 + $0x880] sm:$0xff]
      %v2776 = vld [vmem:[%s252 + $0x888] sm:$0xff]
      %v2777 = vld [vmem:[%s252 + $0x890] sm:$0xff]
      %v2778 = vld [vmem:[%s252 + $0x898] sm:$0xff]
      %v2779 = vld [vmem:[%s252 + $0x8a0] sm:$0xff]
      %v2780 = vld [vmem:[%s252 + $0x8a8] sm:$0xff]
      %v2781 = vld [vmem:[%s252 + $0x8b0] sm:$0xff]
      %v2782 = vld [vmem:[%s252 + $0x8b8] sm:$0xff]
      %v2783 = vld [vmem:[%s252 + $0x8c0] sm:$0xff]
      %v2784 = vld [vmem:[%s252 + $0x8c8] sm:$0xff]
      %v2785 = vld [vmem:[%s252 + $0x8d0] sm:$0xff]
      %v2786 = vld [vmem:[%s252 + $0x8d8] sm:$0xff]
      %v2787 = vld [vmem:[%s252 + $0x8e0] sm:$0xff]
      %v2788 = vld [vmem:[%s252 + $0x8e8] sm:$0xff]
      %v2789 = vld [vmem:[%s252 + $0x8f0] sm:$0xff]
      %v2790 = vld [vmem:[%s252 + $0x8f8] sm:$0xff]
      %v2791 = vld [vmem:[%s252 + $0x900] sm:$0xff]
      %v2792 = vld [vmem:[%s252 + $0x908] sm:$0xff]
      %v2793 = vld [vmem:[%s252 + $0x910] sm:$0xff]
      %v2794 = vld [vmem:[%s252 + $0x918] sm:$0xff]
      %v2795 = vld [vmem:[%s252 + $0x920] sm:$0xff]
      %v2796 = vld [vmem:[%s252 + $0x928] sm:$0xff]
      %v2797 = vld [vmem:[%s252 + $0x930] sm:$0xff]
      %v2798 = vld [vmem:[%s252 + $0x938] sm:$0xff]
      %v2799 = vld [vmem:[%s252 + $0x940] sm:$0xff]
      %v2800 = vld [vmem:[%s252 + $0x948] sm:$0xff]
      %v2801 = vld [vmem:[%s252 + $0x950] sm:$0xff]
      %v2802 = vld [vmem:[%s252 + $0x958] sm:$0xff]
      %v2803 = vld [vmem:[%s252 + $0x960] sm:$0xff]
      %v2804 = vld [vmem:[%s252 + $0x968] sm:$0xff]
      %v2805 = vld [vmem:[%s252 + $0x970] sm:$0xff]
      %v2806 = vld [vmem:[%s252 + $0x978] sm:$0xff]
      %v2807 = vld [vmem:[%s252 + $0x980] sm:$0xff]
      %v2808 = vld [vmem:[%s252 + $0x988] sm:$0xff]
      %v2809 = vld [vmem:[%s252 + $0x990] sm:$0xff]
      %v2810 = vld [vmem:[%s252 + $0x998] sm:$0xff]
      %v2811 = vld [vmem:[%s252 + $0x9a0] sm:$0xff]
      %v2812 = vld [vmem:[%s252 + $0x9a8] sm:$0xff]
      %v2813 = vld [vmem:[%s252 + $0x9b0] sm:$0xff]
      %v2814 = vld [vmem:[%s252 + $0x9b8] sm:$0xff]
      %v2815 = vld [vmem:[%s252 + $0x9c0] sm:$0xff]
      %v2816 = vld [vmem:[%s252 + $0x9c8] sm:$0xff]
      %v2817 = vld [vmem:[%s252 + $0x9d0] sm:$0xff]
      %v2818 = vld [vmem:[%s252 + $0x9d8] sm:$0xff]
      %v2819 = vld [vmem:[%s252 + $0x9e0] sm:$0xff]
      %v2820 = vld [vmem:[%s252 + $0x9e8] sm:$0xff]
      %v2821 = vld [vmem:[%s252 + $0x9f0] sm:$0xff]
      %v2822 = vld [vmem:[%s252 + $0x9f8] sm:$0xff]
      %v2823 = vld [vmem:[%s256] sm:$0xf]
      %v2825 = vlaneseq
      %v2826 = vshrl.u32 %v2825, 7
      %v2827 = vsub.s32 0, %v2826
      %v2828 = vrot.slane %v2823, %v2827
      %v2829 = vlaneseq
      %v2830 = vshrl.u32 %v2829, 7
      %v2831 = vsub.s32 1, %v2830
      %v2832 = vrot.slane %v2823, %v2831
      %v2833 = vlaneseq
      %v2834 = vshrl.u32 %v2833, 7
      %v2835 = vsub.s32 2, %v2834
      %v2836 = vrot.slane %v2823, %v2835
      %v2837 = vlaneseq
      %v2838 = vshrl.u32 %v2837, 7
      %v2839 = vsub.s32 3, %v2838
      %v2840 = vrot.slane %v2823, %v2839
      %v2865 = vunpack.c.l.b16 %v2483
      %v2866 = vunpack.c.l.b16 %v2484
      %v2867 = vunpack.c.l.b16 %v2485
      %v2868 = vunpack.c.l.b16 %v2486
      %v2869 = vunpack.c.l.b16 %v2487
      %v2870 = vunpack.c.l.b16 %v2488
      %v2871 = vunpack.c.l.b16 %v2489
      %v2872 = vunpack.c.l.b16 %v2490
      %v2873 = vunpack.c.l.b16 %v2491
      %v2874 = vunpack.c.l.b16 %v2492
      %v2875 = vunpack.c.l.b16 %v2493
      %v2876 = vunpack.c.l.b16 %v2494
      %v2877 = vunpack.c.l.b16 %v2495
      %v2878 = vunpack.c.l.b16 %v2496
      %v2879 = vunpack.c.l.b16 %v2497
      %v2880 = vunpack.c.l.b16 %v2498
      %v2881 = vunpack.c.l.b16 %v2499
      %v2882 = vunpack.c.l.b16 %v2500
      %v2883 = vunpack.c.l.b16 %v2501
      %v2884 = vunpack.c.l.b16 %v2502
      %vm2885 = vcmask 1041409
      %v2886 = vsel %vm2885, %v2875, %v2865
      %v2887 = vsel %vm2885, %v2876, %v2866
      %v2888 = vsel %vm2885, %v2877, %v2867
      %v2889 = vsel %vm2885, %v2878, %v2868
      %v2890 = vsel %vm2885, %v2879, %v2869
      %v2891 = vsel %vm2885, %v2880, %v2870
      %v2892 = vsel %vm2885, %v2881, %v2871
      %v2893 = vsel %vm2885, %v2882, %v2872
      %v2894 = vsel %vm2885, %v2883, %v2873
      %v2895 = vsel %vm2885, %v2884, %v2874
      %v2896 = vpack.c.b16 %v2886, %v2886
      %v2897 = vpack.c.b16 %v2887, %v2887
      %v2898 = vpack.c.b16 %v2888, %v2888
      %v2899 = vpack.c.b16 %v2889, %v2889
      %v2900 = vpack.c.b16 %v2890, %v2890
      %v2901 = vpack.c.b16 %v2891, %v2891
      %v2902 = vpack.c.b16 %v2892, %v2892
      %v2903 = vpack.c.b16 %v2893, %v2893
      %v2904 = vpack.c.b16 %v2894, %v2894
      %v2905 = vpack.c.b16 %v2895, %v2895
      %v3236 = vunpack.c.l.b16 %v2503
      %v3237 = vunpack.c.h.b16 %v2503
      %v3238 = vunpack.c.l.b16 %v2504
      %v3239 = vunpack.c.h.b16 %v2504
      %v3240 = vunpack.c.l.b16 %v2505
      %v3241 = vunpack.c.h.b16 %v2505
      %v3242 = vunpack.c.l.b16 %v2506
      %v3243 = vunpack.c.h.b16 %v2506
      %v3244 = vunpack.c.l.b16 %v2507
      %v3245 = vunpack.c.h.b16 %v2507
      %v3246 = vunpack.c.l.b16 %v2508
      %v3247 = vunpack.c.h.b16 %v2508
      %v3248 = vunpack.c.l.b16 %v2509
      %v3249 = vunpack.c.h.b16 %v2509
      %v3250 = vunpack.c.l.b16 %v2510
      %v3251 = vunpack.c.h.b16 %v2510
      %v3252 = vunpack.c.l.b16 %v2511
      %v3253 = vunpack.c.h.b16 %v2511
      %v3254 = vunpack.c.l.b16 %v2512
      %v3255 = vunpack.c.h.b16 %v2512
      %v3256 = vunpack.c.l.b16 %v2513
      %v3257 = vunpack.c.h.b16 %v2513
      %v3258 = vunpack.c.l.b16 %v2514
      %v3259 = vunpack.c.h.b16 %v2514
      %v3260 = vunpack.c.l.b16 %v2515
      %v3261 = vunpack.c.h.b16 %v2515
      %v3262 = vunpack.c.l.b16 %v2516
      %v3263 = vunpack.c.h.b16 %v2516
      %v3264 = vunpack.c.l.b16 %v2517
      %v3265 = vunpack.c.h.b16 %v2517
      %v3266 = vunpack.c.l.b16 %v2518
      %v3267 = vunpack.c.h.b16 %v2518
      %v3268 = vunpack.c.l.b16 %v2519
      %v3269 = vunpack.c.h.b16 %v2519
      %v3270 = vunpack.c.l.b16 %v2520
      %v3271 = vunpack.c.h.b16 %v2520
      %v3272 = vunpack.c.l.b16 %v2521
      %v3273 = vunpack.c.h.b16 %v2521
      %v3274 = vunpack.c.l.b16 %v2522
      %v3275 = vunpack.c.h.b16 %v2522
      %v3276 = vunpack.c.l.b16 %v2523
      %v3277 = vunpack.c.h.b16 %v2523
      %v3278 = vunpack.c.l.b16 %v2524
      %v3279 = vunpack.c.h.b16 %v2524
      %v3280 = vunpack.c.l.b16 %v2525
      %v3281 = vunpack.c.h.b16 %v2525
      %v3282 = vunpack.c.l.b16 %v2526
      %v3283 = vunpack.c.h.b16 %v2526
      %v3284 = vunpack.c.l.b16 %v2527
      %v3285 = vunpack.c.h.b16 %v2527
      %v3286 = vunpack.c.l.b16 %v2528
      %v3287 = vunpack.c.h.b16 %v2528
      %v3288 = vunpack.c.l.b16 %v2529
      %v3289 = vunpack.c.h.b16 %v2529
      %v3290 = vunpack.c.l.b16 %v2530
      %v3291 = vunpack.c.h.b16 %v2530
      %v3292 = vunpack.c.l.b16 %v2531
      %v3293 = vunpack.c.h.b16 %v2531
      %v3294 = vunpack.c.l.b16 %v2532
      %v3295 = vunpack.c.h.b16 %v2532
      %v3296 = vunpack.c.l.b16 %v2533
      %v3297 = vunpack.c.h.b16 %v2533
      %v3298 = vunpack.c.l.b16 %v2534
      %v3299 = vunpack.c.h.b16 %v2534
      %v3300 = vunpack.c.l.b16 %v2535
      %v3301 = vunpack.c.h.b16 %v2535
      %v3302 = vunpack.c.l.b16 %v2536
      %v3303 = vunpack.c.h.b16 %v2536
      %v3304 = vunpack.c.l.b16 %v2537
      %v3305 = vunpack.c.h.b16 %v2537
      %v3306 = vunpack.c.l.b16 %v2538
      %v3307 = vunpack.c.h.b16 %v2538
      %v3308 = vunpack.c.l.b16 %v2539
      %v3309 = vunpack.c.h.b16 %v2539
      %v3310 = vunpack.c.l.b16 %v2540
      %v3311 = vunpack.c.h.b16 %v2540
      %v3312 = vunpack.c.l.b16 %v2541
      %v3313 = vunpack.c.h.b16 %v2541
      %v3314 = vunpack.c.l.b16 %v2542
      %v3315 = vunpack.c.h.b16 %v2542
      %v3316 = vunpack.c.l.b16 %v2543
      %v3317 = vunpack.c.h.b16 %v2543
      %v3318 = vunpack.c.l.b16 %v2544
      %v3319 = vunpack.c.h.b16 %v2544
      %v3320 = vunpack.c.l.b16 %v2545
      %v3321 = vunpack.c.h.b16 %v2545
      %v3322 = vunpack.c.l.b16 %v2546
      %v3323 = vunpack.c.h.b16 %v2546
      %v3324 = vunpack.c.l.b16 %v2547
      %v3325 = vunpack.c.h.b16 %v2547
      %v3326 = vunpack.c.l.b16 %v2548
      %v3327 = vunpack.c.h.b16 %v2548
      %v3328 = vunpack.c.l.b16 %v2549
      %v3329 = vunpack.c.h.b16 %v2549
      %v3330 = vunpack.c.l.b16 %v2550
      %v3331 = vunpack.c.h.b16 %v2550
      %v3332 = vunpack.c.l.b16 %v2551
      %v3333 = vunpack.c.h.b16 %v2551
      %v3334 = vunpack.c.l.b16 %v2552
      %v3335 = vunpack.c.h.b16 %v2552
      %v3336 = vunpack.c.l.b16 %v2553
      %v3337 = vunpack.c.h.b16 %v2553
      %v3338 = vunpack.c.l.b16 %v2554
      %v3339 = vunpack.c.h.b16 %v2554
      %v3340 = vunpack.c.l.b16 %v2555
      %v3341 = vunpack.c.h.b16 %v2555
      %v3342 = vunpack.c.l.b16 %v2556
      %v3343 = vunpack.c.h.b16 %v2556
      %v3344 = vunpack.c.l.b16 %v2557
      %v3345 = vunpack.c.h.b16 %v2557
      %v3346 = vunpack.c.l.b16 %v2558
      %v3347 = vunpack.c.h.b16 %v2558
      %v3348 = vunpack.c.l.b16 %v2559
      %v3349 = vunpack.c.h.b16 %v2559
      %v3350 = vunpack.c.l.b16 %v2560
      %v3351 = vunpack.c.h.b16 %v2560
      %v3352 = vunpack.c.l.b16 %v2561
      %v3353 = vunpack.c.h.b16 %v2561
      %v3354 = vunpack.c.l.b16 %v2562
      %v3355 = vunpack.c.h.b16 %v2562
      %v3356 = vunpack.c.l.b16 %v2563
      %v3357 = vunpack.c.h.b16 %v2563
      %v3358 = vunpack.c.l.b16 %v2564
      %v3359 = vunpack.c.h.b16 %v2564
      %v3360 = vunpack.c.l.b16 %v2565
      %v3361 = vunpack.c.h.b16 %v2565
      %v3362 = vunpack.c.l.b16 %v2566
      %v3363 = vunpack.c.h.b16 %v2566
      %v3364 = vunpack.c.l.b16 %v2567
      %v3365 = vunpack.c.h.b16 %v2567
      %v3366 = vunpack.c.l.b16 %v2568
      %v3367 = vunpack.c.h.b16 %v2568
      %v3368 = vunpack.c.l.b16 %v2569
      %v3369 = vunpack.c.h.b16 %v2569
      %v3370 = vunpack.c.l.b16 %v2570
      %v3371 = vunpack.c.h.b16 %v2570
      %v3372 = vunpack.c.l.b16 %v2571
      %v3373 = vunpack.c.h.b16 %v2571
      %v3374 = vunpack.c.l.b16 %v2572
      %v3375 = vunpack.c.h.b16 %v2572
      %v3376 = vunpack.c.l.b16 %v2573
      %v3377 = vunpack.c.h.b16 %v2573
      %v3378 = vunpack.c.l.b16 %v2574
      %v3379 = vunpack.c.h.b16 %v2574
      %v3380 = vunpack.c.l.b16 %v2575
      %v3381 = vunpack.c.h.b16 %v2575
      %v3382 = vunpack.c.l.b16 %v2576
      %v3383 = vunpack.c.h.b16 %v2576
      %v3384 = vunpack.c.l.b16 %v2577
      %v3385 = vunpack.c.h.b16 %v2577
      %v3386 = vunpack.c.l.b16 %v2578
      %v3387 = vunpack.c.h.b16 %v2578
      %v3388 = vunpack.c.l.b16 %v2579
      %v3389 = vunpack.c.h.b16 %v2579
      %v3390 = vunpack.c.l.b16 %v2580
      %v3391 = vunpack.c.h.b16 %v2580
      %v3392 = vunpack.c.l.b16 %v2581
      %v3393 = vunpack.c.h.b16 %v2581
      %v3394 = vunpack.c.l.b16 %v2582
      %v3395 = vunpack.c.h.b16 %v2582
      %v3396 = vunpack.c.l.b16 %v2583
      %v3397 = vunpack.c.h.b16 %v2583
      %v3398 = vunpack.c.l.b16 %v2584
      %v3399 = vunpack.c.h.b16 %v2584
      %v3400 = vunpack.c.l.b16 %v2585
      %v3401 = vunpack.c.h.b16 %v2585
      %v3402 = vunpack.c.l.b16 %v2586
      %v3403 = vunpack.c.h.b16 %v2586
      %v3404 = vunpack.c.l.b16 %v2587
      %v3405 = vunpack.c.h.b16 %v2587
      %v3406 = vunpack.c.l.b16 %v2588
      %v3407 = vunpack.c.h.b16 %v2588
      %v3408 = vunpack.c.l.b16 %v2589
      %v3409 = vunpack.c.h.b16 %v2589
      %v3410 = vunpack.c.l.b16 %v2590
      %v3411 = vunpack.c.h.b16 %v2590
      %v3412 = vunpack.c.l.b16 %v2591
      %v3413 = vunpack.c.h.b16 %v2591
      %v3414 = vunpack.c.l.b16 %v2592
      %v3415 = vunpack.c.h.b16 %v2592
      %v3416 = vunpack.c.l.b16 %v2593
      %v3417 = vunpack.c.h.b16 %v2593
      %v3418 = vunpack.c.l.b16 %v2594
      %v3419 = vunpack.c.h.b16 %v2594
      %v3420 = vunpack.c.l.b16 %v2595
      %v3421 = vunpack.c.h.b16 %v2595
      %v3422 = vunpack.c.l.b16 %v2596
      %v3423 = vunpack.c.h.b16 %v2596
      %v3424 = vunpack.c.l.b16 %v2597
      %v3425 = vunpack.c.h.b16 %v2597
      %v3426 = vunpack.c.l.b16 %v2598
      %v3427 = vunpack.c.h.b16 %v2598
      %v3428 = vunpack.c.l.b16 %v2599
      %v3429 = vunpack.c.h.b16 %v2599
      %v3430 = vunpack.c.l.b16 %v2600
      %v3431 = vunpack.c.h.b16 %v2600
      %v3432 = vunpack.c.l.b16 %v2601
      %v3433 = vunpack.c.h.b16 %v2601
      %v3434 = vunpack.c.l.b16 %v2602
      %v3435 = vunpack.c.h.b16 %v2602
      %v3436 = vunpack.c.l.b16 %v2603
      %v3437 = vunpack.c.h.b16 %v2603
      %v3438 = vunpack.c.l.b16 %v2604
      %v3439 = vunpack.c.h.b16 %v2604
      %v3440 = vunpack.c.l.b16 %v2605
      %v3441 = vunpack.c.h.b16 %v2605
      %v3442 = vunpack.c.l.b16 %v2606
      %v3443 = vunpack.c.h.b16 %v2606
      %v3444 = vunpack.c.l.b16 %v2607
      %v3445 = vunpack.c.h.b16 %v2607
      %v3446 = vunpack.c.l.b16 %v2608
      %v3447 = vunpack.c.h.b16 %v2608
      %v3448 = vunpack.c.l.b16 %v2609
      %v3449 = vunpack.c.h.b16 %v2609
      %v3450 = vunpack.c.l.b16 %v2610
      %v3451 = vunpack.c.h.b16 %v2610
      %v3452 = vunpack.c.l.b16 %v2611
      %v3453 = vunpack.c.h.b16 %v2611
      %v3454 = vunpack.c.l.b16 %v2612
      %v3455 = vunpack.c.h.b16 %v2612
      %v3456 = vunpack.c.l.b16 %v2613
      %v3457 = vunpack.c.h.b16 %v2613
      %v3458 = vunpack.c.l.b16 %v2614
      %v3459 = vunpack.c.h.b16 %v2614
      %v3460 = vunpack.c.l.b16 %v2615
      %v3461 = vunpack.c.h.b16 %v2615
      %v3462 = vunpack.c.l.b16 %v2616
      %v3463 = vunpack.c.h.b16 %v2616
      %v3464 = vunpack.c.l.b16 %v2617
      %v3465 = vunpack.c.h.b16 %v2617
      %v3466 = vunpack.c.l.b16 %v2618
      %v3467 = vunpack.c.h.b16 %v2618
      %v3468 = vunpack.c.l.b16 %v2619
      %v3469 = vunpack.c.h.b16 %v2619
      %v3470 = vunpack.c.l.b16 %v2620
      %v3471 = vunpack.c.h.b16 %v2620
      %v3472 = vunpack.c.l.b16 %v2621
      %v3473 = vunpack.c.h.b16 %v2621
      %v3474 = vunpack.c.l.b16 %v2622
      %v3475 = vunpack.c.h.b16 %v2622
      %v3476 = vunpack.c.l.b16 %v2623
      %v3477 = vunpack.c.h.b16 %v2623
      %v3478 = vunpack.c.l.b16 %v2624
      %v3479 = vunpack.c.h.b16 %v2624
      %v3480 = vunpack.c.l.b16 %v2625
      %v3481 = vunpack.c.h.b16 %v2625
      %v3482 = vunpack.c.l.b16 %v2626
      %v3483 = vunpack.c.h.b16 %v2626
      %v3484 = vunpack.c.l.b16 %v2627
      %v3485 = vunpack.c.h.b16 %v2627
      %v3486 = vunpack.c.l.b16 %v2628
      %v3487 = vunpack.c.h.b16 %v2628
      %v3488 = vunpack.c.l.b16 %v2629
      %v3489 = vunpack.c.h.b16 %v2629
      %v3490 = vunpack.c.l.b16 %v2630
      %v3491 = vunpack.c.h.b16 %v2630
      %v3492 = vunpack.c.l.b16 %v2631
      %v3493 = vunpack.c.h.b16 %v2631
      %v3494 = vunpack.c.l.b16 %v2632
      %v3495 = vunpack.c.h.b16 %v2632
      %v3496 = vunpack.c.l.b16 %v2633
      %v3497 = vunpack.c.h.b16 %v2633
      %v3498 = vunpack.c.l.b16 %v2634
      %v3499 = vunpack.c.h.b16 %v2634
      %v3500 = vunpack.c.l.b16 %v2635
      %v3501 = vunpack.c.h.b16 %v2635
      %v3502 = vunpack.c.l.b16 %v2636
      %v3503 = vunpack.c.h.b16 %v2636
      %v3504 = vunpack.c.l.b16 %v2637
      %v3505 = vunpack.c.h.b16 %v2637
      %v3506 = vunpack.c.l.b16 %v2638
      %v3507 = vunpack.c.h.b16 %v2638
      %v3508 = vunpack.c.l.b16 %v2639
      %v3509 = vunpack.c.h.b16 %v2639
      %v3510 = vunpack.c.l.b16 %v2640
      %v3511 = vunpack.c.h.b16 %v2640
      %v3512 = vunpack.c.l.b16 %v2641
      %v3513 = vunpack.c.h.b16 %v2641
      %v3514 = vunpack.c.l.b16 %v2642
      %v3515 = vunpack.c.h.b16 %v2642
      %v3516 = vunpack.c.l.b16 %v2643
      %v3517 = vunpack.c.h.b16 %v2643
      %v3518 = vunpack.c.l.b16 %v2644
      %v3519 = vunpack.c.h.b16 %v2644
      %v3520 = vunpack.c.l.b16 %v2645
      %v3521 = vunpack.c.h.b16 %v2645
      %v3522 = vunpack.c.l.b16 %v2646
      %v3523 = vunpack.c.h.b16 %v2646
      %v3524 = vunpack.c.l.b16 %v2647
      %v3525 = vunpack.c.h.b16 %v2647
      %v3526 = vunpack.c.l.b16 %v2648
      %v3527 = vunpack.c.h.b16 %v2648
      %v3528 = vunpack.c.l.b16 %v2649
      %v3529 = vunpack.c.h.b16 %v2649
      %v3530 = vunpack.c.l.b16 %v2650
      %v3531 = vunpack.c.h.b16 %v2650
      %v3532 = vunpack.c.l.b16 %v2651
      %v3533 = vunpack.c.h.b16 %v2651
      %v3534 = vunpack.c.l.b16 %v2652
      %v3535 = vunpack.c.h.b16 %v2652
      %v3536 = vunpack.c.l.b16 %v2653
      %v3537 = vunpack.c.h.b16 %v2653
      %v3538 = vunpack.c.l.b16 %v2654
      %v3539 = vunpack.c.h.b16 %v2654
      %v3540 = vunpack.c.l.b16 %v2655
      %v3541 = vunpack.c.h.b16 %v2655
      %v3542 = vunpack.c.l.b16 %v2656
      %v3543 = vunpack.c.h.b16 %v2656
      %v3544 = vunpack.c.l.b16 %v2657
      %v3545 = vunpack.c.h.b16 %v2657
      %v3546 = vunpack.c.l.b16 %v2658
      %v3547 = vunpack.c.h.b16 %v2658
      %v3548 = vunpack.c.l.b16 %v2659
      %v3549 = vunpack.c.h.b16 %v2659
      %v3550 = vunpack.c.l.b16 %v2660
      %v3551 = vunpack.c.h.b16 %v2660
      %v3552 = vunpack.c.l.b16 %v2661
      %v3553 = vunpack.c.h.b16 %v2661
      %v3554 = vunpack.c.l.b16 %v2662
      %v3555 = vunpack.c.h.b16 %v2662
      %v3556 = vunpack.c.l.b16 %v2663
      %v3557 = vunpack.c.h.b16 %v2663
      %v3558 = vunpack.c.l.b16 %v2664
      %v3559 = vunpack.c.h.b16 %v2664
      %v3560 = vunpack.c.l.b16 %v2665
      %v3561 = vunpack.c.h.b16 %v2665
      %v3562 = vunpack.c.l.b16 %v2666
      %v3563 = vunpack.c.h.b16 %v2666
      %v3564 = vunpack.c.l.b16 %v2667
      %v3565 = vunpack.c.h.b16 %v2667
      %v3566 = vunpack.c.l.b16 %v2668
      %v3567 = vunpack.c.h.b16 %v2668
      %v3568 = vunpack.c.l.b16 %v2669
      %v3569 = vunpack.c.h.b16 %v2669
      %v3570 = vunpack.c.l.b16 %v2670
      %v3571 = vunpack.c.h.b16 %v2670
      %v3572 = vunpack.c.l.b16 %v2671
      %v3573 = vunpack.c.h.b16 %v2671
      %v3574 = vunpack.c.l.b16 %v2672
      %v3575 = vunpack.c.h.b16 %v2672
      %v3576 = vunpack.c.l.b16 %v2673
      %v3577 = vunpack.c.h.b16 %v2673
      %v3578 = vunpack.c.l.b16 %v2674
      %v3579 = vunpack.c.h.b16 %v2674
      %v3580 = vunpack.c.l.b16 %v2675
      %v3581 = vunpack.c.h.b16 %v2675
      %v3582 = vunpack.c.l.b16 %v2676
      %v3583 = vunpack.c.h.b16 %v2676
      %v3584 = vunpack.c.l.b16 %v2677
      %v3585 = vunpack.c.h.b16 %v2677
      %v3586 = vunpack.c.l.b16 %v2678
      %v3587 = vunpack.c.h.b16 %v2678
      %v3588 = vunpack.c.l.b16 %v2679
      %v3589 = vunpack.c.h.b16 %v2679
      %v3590 = vunpack.c.l.b16 %v2680
      %v3591 = vunpack.c.h.b16 %v2680
      %v3592 = vunpack.c.l.b16 %v2681
      %v3593 = vunpack.c.h.b16 %v2681
      %v3594 = vunpack.c.l.b16 %v2682
      %v3595 = vunpack.c.h.b16 %v2682
      %v3596 = vunpack.c.l.b16 %v2683
      %v3597 = vunpack.c.h.b16 %v2683
      %v3598 = vunpack.c.l.b16 %v2684
      %v3599 = vunpack.c.h.b16 %v2684
      %v3600 = vunpack.c.l.b16 %v2685
      %v3601 = vunpack.c.h.b16 %v2685
      %v3602 = vunpack.c.l.b16 %v2686
      %v3603 = vunpack.c.h.b16 %v2686
      %v3604 = vunpack.c.l.b16 %v2687
      %v3605 = vunpack.c.h.b16 %v2687
      %v3606 = vunpack.c.l.b16 %v2688
      %v3607 = vunpack.c.h.b16 %v2688
      %v3608 = vunpack.c.l.b16 %v2689
      %v3609 = vunpack.c.h.b16 %v2689
      %v3610 = vunpack.c.l.b16 %v2690
      %v3611 = vunpack.c.h.b16 %v2690
      %v3612 = vunpack.c.l.b16 %v2691
      %v3613 = vunpack.c.h.b16 %v2691
      %v3614 = vunpack.c.l.b16 %v2692
      %v3615 = vunpack.c.h.b16 %v2692
      %v3616 = vunpack.c.l.b16 %v2693
      %v3617 = vunpack.c.h.b16 %v2693
      %v3618 = vunpack.c.l.b16 %v2694
      %v3619 = vunpack.c.h.b16 %v2694
      %v3620 = vunpack.c.l.b16 %v2695
      %v3621 = vunpack.c.h.b16 %v2695
      %v3622 = vunpack.c.l.b16 %v2696
      %v3623 = vunpack.c.h.b16 %v2696
      %v3624 = vunpack.c.l.b16 %v2697
      %v3625 = vunpack.c.h.b16 %v2697
      %v3626 = vunpack.c.l.b16 %v2698
      %v3627 = vunpack.c.h.b16 %v2698
      %v3628 = vunpack.c.l.b16 %v2699
      %v3629 = vunpack.c.h.b16 %v2699
      %v3630 = vunpack.c.l.b16 %v2700
      %v3631 = vunpack.c.h.b16 %v2700
      %v3632 = vunpack.c.l.b16 %v2701
      %v3633 = vunpack.c.h.b16 %v2701
      %v3634 = vunpack.c.l.b16 %v2702
      %v3635 = vunpack.c.h.b16 %v2702
      %v3636 = vunpack.c.l.b16 %v2703
      %v3637 = vunpack.c.h.b16 %v2703
      %v3638 = vunpack.c.l.b16 %v2704
      %v3639 = vunpack.c.h.b16 %v2704
      %v3640 = vunpack.c.l.b16 %v2705
      %v3641 = vunpack.c.h.b16 %v2705
      %v3642 = vunpack.c.l.b16 %v2706
      %v3643 = vunpack.c.h.b16 %v2706
      %v3644 = vunpack.c.l.b16 %v2707
      %v3645 = vunpack.c.h.b16 %v2707
      %v3646 = vunpack.c.l.b16 %v2708
      %v3647 = vunpack.c.h.b16 %v2708
      %v3648 = vunpack.c.l.b16 %v2709
      %v3649 = vunpack.c.h.b16 %v2709
      %v3650 = vunpack.c.l.b16 %v2710
      %v3651 = vunpack.c.h.b16 %v2710
      %v3652 = vunpack.c.l.b16 %v2711
      %v3653 = vunpack.c.h.b16 %v2711
      %v3654 = vunpack.c.l.b16 %v2712
      %v3655 = vunpack.c.h.b16 %v2712
      %v3656 = vunpack.c.l.b16 %v2713
      %v3657 = vunpack.c.h.b16 %v2713
      %v3658 = vunpack.c.l.b16 %v2714
      %v3659 = vunpack.c.h.b16 %v2714
      %v3660 = vunpack.c.l.b16 %v2715
      %v3661 = vunpack.c.h.b16 %v2715
      %v3662 = vunpack.c.l.b16 %v2716
      %v3663 = vunpack.c.h.b16 %v2716
      %v3664 = vunpack.c.l.b16 %v2717
      %v3665 = vunpack.c.h.b16 %v2717
      %v3666 = vunpack.c.l.b16 %v2718
      %v3667 = vunpack.c.h.b16 %v2718
      %v3668 = vunpack.c.l.b16 %v2719
      %v3669 = vunpack.c.h.b16 %v2719
      %v3670 = vunpack.c.l.b16 %v2720
      %v3671 = vunpack.c.h.b16 %v2720
      %v3672 = vunpack.c.l.b16 %v2721
      %v3673 = vunpack.c.h.b16 %v2721
      %v3674 = vunpack.c.l.b16 %v2722
      %v3675 = vunpack.c.h.b16 %v2722
      %v3676 = vunpack.c.l.b16 %v2723
      %v3677 = vunpack.c.h.b16 %v2723
      %v3678 = vunpack.c.l.b16 %v2724
      %v3679 = vunpack.c.h.b16 %v2724
      %v3680 = vunpack.c.l.b16 %v2725
      %v3681 = vunpack.c.h.b16 %v2725
      %v3682 = vunpack.c.l.b16 %v2726
      %v3683 = vunpack.c.h.b16 %v2726
      %v3684 = vunpack.c.l.b16 %v2727
      %v3685 = vunpack.c.h.b16 %v2727
      %v3686 = vunpack.c.l.b16 %v2728
      %v3687 = vunpack.c.h.b16 %v2728
      %v3688 = vunpack.c.l.b16 %v2729
      %v3689 = vunpack.c.h.b16 %v2729
      %v3690 = vunpack.c.l.b16 %v2730
      %v3691 = vunpack.c.h.b16 %v2730
      %v3692 = vunpack.c.l.b16 %v2731
      %v3693 = vunpack.c.h.b16 %v2731
      %v3694 = vunpack.c.l.b16 %v2732
      %v3695 = vunpack.c.h.b16 %v2732
      %v3696 = vunpack.c.l.b16 %v2733
      %v3697 = vunpack.c.h.b16 %v2733
      %v3698 = vunpack.c.l.b16 %v2734
      %v3699 = vunpack.c.h.b16 %v2734
      %v3700 = vunpack.c.l.b16 %v2735
      %v3701 = vunpack.c.h.b16 %v2735
      %v3702 = vunpack.c.l.b16 %v2736
      %v3703 = vunpack.c.h.b16 %v2736
      %v3704 = vunpack.c.l.b16 %v2737
      %v3705 = vunpack.c.h.b16 %v2737
      %v3706 = vunpack.c.l.b16 %v2738
      %v3707 = vunpack.c.h.b16 %v2738
      %v3708 = vunpack.c.l.b16 %v2739
      %v3709 = vunpack.c.h.b16 %v2739
      %v3710 = vunpack.c.l.b16 %v2740
      %v3711 = vunpack.c.h.b16 %v2740
      %v3712 = vunpack.c.l.b16 %v2741
      %v3713 = vunpack.c.h.b16 %v2741
      %v3714 = vunpack.c.l.b16 %v2742
      %v3715 = vunpack.c.h.b16 %v2742
      %v3716 = vunpack.c.l.b16 %v2743
      %v3717 = vunpack.c.h.b16 %v2743
      %v3718 = vunpack.c.l.b16 %v2744
      %v3719 = vunpack.c.h.b16 %v2744
      %v3720 = vunpack.c.l.b16 %v2745
      %v3721 = vunpack.c.h.b16 %v2745
      %v3722 = vunpack.c.l.b16 %v2746
      %v3723 = vunpack.c.h.b16 %v2746
      %v3724 = vunpack.c.l.b16 %v2747
      %v3725 = vunpack.c.h.b16 %v2747
      %v3726 = vunpack.c.l.b16 %v2748
      %v3727 = vunpack.c.h.b16 %v2748
      %v3728 = vunpack.c.l.b16 %v2749
      %v3729 = vunpack.c.h.b16 %v2749
      %v3730 = vunpack.c.l.b16 %v2750
      %v3731 = vunpack.c.h.b16 %v2750
      %v3732 = vunpack.c.l.b16 %v2751
      %v3733 = vunpack.c.h.b16 %v2751
      %v3734 = vunpack.c.l.b16 %v2752
      %v3735 = vunpack.c.h.b16 %v2752
      %v3736 = vunpack.c.l.b16 %v2753
      %v3737 = vunpack.c.h.b16 %v2753
      %v3738 = vunpack.c.l.b16 %v2754
      %v3739 = vunpack.c.h.b16 %v2754
      %v3740 = vunpack.c.l.b16 %v2755
      %v3741 = vunpack.c.h.b16 %v2755
      %v3742 = vunpack.c.l.b16 %v2756
      %v3743 = vunpack.c.h.b16 %v2756
      %v3744 = vunpack.c.l.b16 %v2757
      %v3745 = vunpack.c.h.b16 %v2757
      %v3746 = vunpack.c.l.b16 %v2758
      %v3747 = vunpack.c.h.b16 %v2758
      %v3748 = vunpack.c.l.b16 %v2759
      %v3749 = vunpack.c.h.b16 %v2759
      %v3750 = vunpack.c.l.b16 %v2760
      %v3751 = vunpack.c.h.b16 %v2760
      %v3752 = vunpack.c.l.b16 %v2761
      %v3753 = vunpack.c.h.b16 %v2761
      %v3754 = vunpack.c.l.b16 %v2762
      %v3755 = vunpack.c.h.b16 %v2762
      %v3756 = vunpack.c.l.b16 %v2763
      %v3757 = vunpack.c.h.b16 %v2763
      %v3758 = vunpack.c.l.b16 %v2764
      %v3759 = vunpack.c.h.b16 %v2764
      %v3760 = vunpack.c.l.b16 %v2765
      %v3761 = vunpack.c.h.b16 %v2765
      %v3762 = vunpack.c.l.b16 %v2766
      %v3763 = vunpack.c.h.b16 %v2766
      %v3764 = vunpack.c.l.b16 %v2767
      %v3765 = vunpack.c.h.b16 %v2767
      %v3766 = vunpack.c.l.b16 %v2768
      %v3767 = vunpack.c.h.b16 %v2768
      %v3768 = vunpack.c.l.b16 %v2769
      %v3769 = vunpack.c.h.b16 %v2769
      %v3770 = vunpack.c.l.b16 %v2770
      %v3771 = vunpack.c.h.b16 %v2770
      %v3772 = vunpack.c.l.b16 %v2771
      %v3773 = vunpack.c.h.b16 %v2771
      %v3774 = vunpack.c.l.b16 %v2772
      %v3775 = vunpack.c.h.b16 %v2772
      %v3776 = vunpack.c.l.b16 %v2773
      %v3777 = vunpack.c.h.b16 %v2773
      %v3778 = vunpack.c.l.b16 %v2774
      %v3779 = vunpack.c.h.b16 %v2774
      %v3780 = vunpack.c.l.b16 %v2775
      %v3781 = vunpack.c.h.b16 %v2775
      %v3782 = vunpack.c.l.b16 %v2776
      %v3783 = vunpack.c.h.b16 %v2776
      %v3784 = vunpack.c.l.b16 %v2777
      %v3785 = vunpack.c.h.b16 %v2777
      %v3786 = vunpack.c.l.b16 %v2778
      %v3787 = vunpack.c.h.b16 %v2778
      %v3788 = vunpack.c.l.b16 %v2779
      %v3789 = vunpack.c.h.b16 %v2779
      %v3790 = vunpack.c.l.b16 %v2780
      %v3791 = vunpack.c.h.b16 %v2780
      %v3792 = vunpack.c.l.b16 %v2781
      %v3793 = vunpack.c.h.b16 %v2781
      %v3794 = vunpack.c.l.b16 %v2782
      %v3795 = vunpack.c.h.b16 %v2782
      %v3796 = vunpack.c.l.b16 %v2783
      %v3797 = vunpack.c.h.b16 %v2783
      %v3798 = vunpack.c.l.b16 %v2784
      %v3799 = vunpack.c.h.b16 %v2784
      %v3800 = vunpack.c.l.b16 %v2785
      %v3801 = vunpack.c.h.b16 %v2785
      %v3802 = vunpack.c.l.b16 %v2786
      %v3803 = vunpack.c.h.b16 %v2786
      %v3804 = vunpack.c.l.b16 %v2787
      %v3805 = vunpack.c.h.b16 %v2787
      %v3806 = vunpack.c.l.b16 %v2788
      %v3807 = vunpack.c.h.b16 %v2788
      %v3808 = vunpack.c.l.b16 %v2789
      %v3809 = vunpack.c.h.b16 %v2789
      %v3810 = vunpack.c.l.b16 %v2790
      %v3811 = vunpack.c.h.b16 %v2790
      %v3812 = vunpack.c.l.b16 %v2791
      %v3813 = vunpack.c.h.b16 %v2791
      %v3814 = vunpack.c.l.b16 %v2792
      %v3815 = vunpack.c.h.b16 %v2792
      %v3816 = vunpack.c.l.b16 %v2793
      %v3817 = vunpack.c.h.b16 %v2793
      %v3818 = vunpack.c.l.b16 %v2794
      %v3819 = vunpack.c.h.b16 %v2794
      %v3820 = vunpack.c.l.b16 %v2795
      %v3821 = vunpack.c.h.b16 %v2795
      %v3822 = vunpack.c.l.b16 %v2796
      %v3823 = vunpack.c.h.b16 %v2796
      %v3824 = vunpack.c.l.b16 %v2797
      %v3825 = vunpack.c.h.b16 %v2797
      %v3826 = vunpack.c.l.b16 %v2798
      %v3827 = vunpack.c.h.b16 %v2798
      %v3828 = vunpack.c.l.b16 %v2799
      %v3829 = vunpack.c.h.b16 %v2799
      %v3830 = vunpack.c.l.b16 %v2800
      %v3831 = vunpack.c.h.b16 %v2800
      %v3832 = vunpack.c.l.b16 %v2801
      %v3833 = vunpack.c.h.b16 %v2801
      %v3834 = vunpack.c.l.b16 %v2802
      %v3835 = vunpack.c.h.b16 %v2802
      %v3836 = vunpack.c.l.b16 %v2803
      %v3837 = vunpack.c.h.b16 %v2803
      %v3838 = vunpack.c.l.b16 %v2804
      %v3839 = vunpack.c.h.b16 %v2804
      %v3840 = vunpack.c.l.b16 %v2805
      %v3841 = vunpack.c.h.b16 %v2805
      %v3842 = vunpack.c.l.b16 %v2806
      %v3843 = vunpack.c.h.b16 %v2806
      %v3844 = vunpack.c.l.b16 %v2807
      %v3845 = vunpack.c.h.b16 %v2807
      %v3846 = vunpack.c.l.b16 %v2808
      %v3847 = vunpack.c.h.b16 %v2808
      %v3848 = vunpack.c.l.b16 %v2809
      %v3849 = vunpack.c.h.b16 %v2809
      %v3850 = vunpack.c.l.b16 %v2810
      %v3851 = vunpack.c.h.b16 %v2810
      %v3852 = vunpack.c.l.b16 %v2811
      %v3853 = vunpack.c.h.b16 %v2811
      %v3854 = vunpack.c.l.b16 %v2812
      %v3855 = vunpack.c.h.b16 %v2812
      %v3856 = vunpack.c.l.b16 %v2813
      %v3857 = vunpack.c.h.b16 %v2813
      %v3858 = vunpack.c.l.b16 %v2814
      %v3859 = vunpack.c.h.b16 %v2814
      %v3860 = vunpack.c.l.b16 %v2815
      %v3861 = vunpack.c.h.b16 %v2815
      %v3862 = vunpack.c.l.b16 %v2816
      %v3863 = vunpack.c.h.b16 %v2816
      %v3864 = vunpack.c.l.b16 %v2817
      %v3865 = vunpack.c.h.b16 %v2817
      %v3866 = vunpack.c.l.b16 %v2818
      %v3867 = vunpack.c.h.b16 %v2818
      %v3868 = vunpack.c.l.b16 %v2819
      %v3869 = vunpack.c.h.b16 %v2819
      %v3870 = vunpack.c.l.b16 %v2820
      %v3871 = vunpack.c.h.b16 %v2820
      %v3872 = vunpack.c.l.b16 %v2821
      %v3873 = vunpack.c.h.b16 %v2821
      %v3874 = vunpack.c.l.b16 %v2822
      %v3875 = vunpack.c.h.b16 %v2822
      %v3876 = vpack.c.b16 %v3240, %v3236
      %v3877 = vpack.c.b16 %v3241, %v3237
      %v3878 = vpack.c.b16 %v3242, %v3238
      %v3879 = vpack.c.b16 %v3243, %v3239
      %v3880 = vpack.c.b16 %v3248, %v3244
      %v3881 = vpack.c.b16 %v3249, %v3245
      %v3882 = vpack.c.b16 %v3250, %v3246
      %v3883 = vpack.c.b16 %v3251, %v3247
      %v3884 = vpack.c.b16 %v3256, %v3252
      %v3885 = vpack.c.b16 %v3257, %v3253
      %v3886 = vpack.c.b16 %v3258, %v3254
      %v3887 = vpack.c.b16 %v3259, %v3255
      %v3888 = vpack.c.b16 %v3264, %v3260
      %v3889 = vpack.c.b16 %v3265, %v3261
      %v3890 = vpack.c.b16 %v3266, %v3262
      %v3891 = vpack.c.b16 %v3267, %v3263
      %v3892 = vpack.c.b16 %v3272, %v3268
      %v3893 = vpack.c.b16 %v3273, %v3269
      %v3894 = vpack.c.b16 %v3274, %v3270
      %v3895 = vpack.c.b16 %v3275, %v3271
      %v3896 = vpack.c.b16 %v3280, %v3276
      %v3897 = vpack.c.b16 %v3281, %v3277
      %v3898 = vpack.c.b16 %v3282, %v3278
      %v3899 = vpack.c.b16 %v3283, %v3279
      %v3900 = vpack.c.b16 %v3288, %v3284
      %v3901 = vpack.c.b16 %v3289, %v3285
      %v3902 = vpack.c.b16 %v3290, %v3286
      %v3903 = vpack.c.b16 %v3291, %v3287
      %v3904 = vpack.c.b16 %v3296, %v3292
      %v3905 = vpack.c.b16 %v3297, %v3293
      %v3906 = vpack.c.b16 %v3298, %v3294
      %v3907 = vpack.c.b16 %v3299, %v3295
      %v3908 = vpack.c.b16 %v3304, %v3300
      %v3909 = vpack.c.b16 %v3305, %v3301
      %v3910 = vpack.c.b16 %v3306, %v3302
      %v3911 = vpack.c.b16 %v3307, %v3303
      %v3912 = vpack.c.b16 %v3312, %v3308
      %v3913 = vpack.c.b16 %v3313, %v3309
      %v3914 = vpack.c.b16 %v3314, %v3310
      %v3915 = vpack.c.b16 %v3315, %v3311
      %v3916 = vpack.c.b16 %v3320, %v3316
      %v3917 = vpack.c.b16 %v3321, %v3317
      %v3918 = vpack.c.b16 %v3322, %v3318
      %v3919 = vpack.c.b16 %v3323, %v3319
      %v3920 = vpack.c.b16 %v3328, %v3324
      %v3921 = vpack.c.b16 %v3329, %v3325
      %v3922 = vpack.c.b16 %v3330, %v3326
      %v3923 = vpack.c.b16 %v3331, %v3327
      %v3924 = vpack.c.b16 %v3336, %v3332
      %v3925 = vpack.c.b16 %v3337, %v3333
      %v3926 = vpack.c.b16 %v3338, %v3334
      %v3927 = vpack.c.b16 %v3339, %v3335
      %v3928 = vpack.c.b16 %v3344, %v3340
      %v3929 = vpack.c.b16 %v3345, %v3341
      %v3930 = vpack.c.b16 %v3346, %v3342
      %v3931 = vpack.c.b16 %v3347, %v3343
      %v3932 = vpack.c.b16 %v3352, %v3348
      %v3933 = vpack.c.b16 %v3353, %v3349
      %v3934 = vpack.c.b16 %v3354, %v3350
      %v3935 = vpack.c.b16 %v3355, %v3351
      %v3936 = vpack.c.b16 %v3360, %v3356
      %v3937 = vpack.c.b16 %v3361, %v3357
      %v3938 = vpack.c.b16 %v3362, %v3358
      %v3939 = vpack.c.b16 %v3363, %v3359
      %v3940 = vpack.c.b16 %v3368, %v3364
      %v3941 = vpack.c.b16 %v3369, %v3365
      %v3942 = vpack.c.b16 %v3370, %v3366
      %v3943 = vpack.c.b16 %v3371, %v3367
      %v3944 = vpack.c.b16 %v3376, %v3372
      %v3945 = vpack.c.b16 %v3377, %v3373
      %v3946 = vpack.c.b16 %v3378, %v3374
      %v3947 = vpack.c.b16 %v3379, %v3375
      %v3948 = vpack.c.b16 %v3384, %v3380
      %v3949 = vpack.c.b16 %v3385, %v3381
      %v3950 = vpack.c.b16 %v3386, %v3382
      %v3951 = vpack.c.b16 %v3387, %v3383
      %v3952 = vpack.c.b16 %v3392, %v3388
      %v3953 = vpack.c.b16 %v3393, %v3389
      %v3954 = vpack.c.b16 %v3394, %v3390
      %v3955 = vpack.c.b16 %v3395, %v3391
      %v3956 = vpack.c.b16 %v3400, %v3396
      %v3957 = vpack.c.b16 %v3401, %v3397
      %v3958 = vpack.c.b16 %v3402, %v3398
      %v3959 = vpack.c.b16 %v3403, %v3399
      %v3960 = vpack.c.b16 %v3408, %v3404
      %v3961 = vpack.c.b16 %v3409, %v3405
      %v3962 = vpack.c.b16 %v3410, %v3406
      %v3963 = vpack.c.b16 %v3411, %v3407
      %v3964 = vpack.c.b16 %v3416, %v3412
      %v3965 = vpack.c.b16 %v3417, %v3413
      %v3966 = vpack.c.b16 %v3418, %v3414
      %v3967 = vpack.c.b16 %v3419, %v3415
      %v3968 = vpack.c.b16 %v3424, %v3420
      %v3969 = vpack.c.b16 %v3425, %v3421
      %v3970 = vpack.c.b16 %v3426, %v3422
      %v3971 = vpack.c.b16 %v3427, %v3423
      %v3972 = vpack.c.b16 %v3432, %v3428
      %v3973 = vpack.c.b16 %v3433, %v3429
      %v3974 = vpack.c.b16 %v3434, %v3430
      %v3975 = vpack.c.b16 %v3435, %v3431
      %v3976 = vpack.c.b16 %v3440, %v3436
      %v3977 = vpack.c.b16 %v3441, %v3437
      %v3978 = vpack.c.b16 %v3442, %v3438
      %v3979 = vpack.c.b16 %v3443, %v3439
      %v3980 = vpack.c.b16 %v3448, %v3444
      %v3981 = vpack.c.b16 %v3449, %v3445
      %v3982 = vpack.c.b16 %v3450, %v3446
      %v3983 = vpack.c.b16 %v3451, %v3447
      %v3984 = vpack.c.b16 %v3456, %v3452
      %v3985 = vpack.c.b16 %v3457, %v3453
      %v3986 = vpack.c.b16 %v3458, %v3454
      %v3987 = vpack.c.b16 %v3459, %v3455
      %v3988 = vpack.c.b16 %v3464, %v3460
      %v3989 = vpack.c.b16 %v3465, %v3461
      %v3990 = vpack.c.b16 %v3466, %v3462
      %v3991 = vpack.c.b16 %v3467, %v3463
      %v3992 = vpack.c.b16 %v3472, %v3468
      %v3993 = vpack.c.b16 %v3473, %v3469
      %v3994 = vpack.c.b16 %v3474, %v3470
      %v3995 = vpack.c.b16 %v3475, %v3471
      %v3996 = vpack.c.b16 %v3480, %v3476
      %v3997 = vpack.c.b16 %v3481, %v3477
      %v3998 = vpack.c.b16 %v3482, %v3478
      %v3999 = vpack.c.b16 %v3483, %v3479
      %v4000 = vpack.c.b16 %v3488, %v3484
      %v4001 = vpack.c.b16 %v3489, %v3485
      %v4002 = vpack.c.b16 %v3490, %v3486
      %v4003 = vpack.c.b16 %v3491, %v3487
      %v4004 = vpack.c.b16 %v3496, %v3492
      %v4005 = vpack.c.b16 %v3497, %v3493
      %v4006 = vpack.c.b16 %v3498, %v3494
      %v4007 = vpack.c.b16 %v3499, %v3495
      %v4008 = vpack.c.b16 %v3504, %v3500
      %v4009 = vpack.c.b16 %v3505, %v3501
      %v4010 = vpack.c.b16 %v3506, %v3502
      %v4011 = vpack.c.b16 %v3507, %v3503
      %v4012 = vpack.c.b16 %v3512, %v3508
      %v4013 = vpack.c.b16 %v3513, %v3509
      %v4014 = vpack.c.b16 %v3514, %v3510
      %v4015 = vpack.c.b16 %v3515, %v3511
      %v4016 = vpack.c.b16 %v3520, %v3516
      %v4017 = vpack.c.b16 %v3521, %v3517
      %v4018 = vpack.c.b16 %v3522, %v3518
      %v4019 = vpack.c.b16 %v3523, %v3519
      %v4020 = vpack.c.b16 %v3528, %v3524
      %v4021 = vpack.c.b16 %v3529, %v3525
      %v4022 = vpack.c.b16 %v3530, %v3526
      %v4023 = vpack.c.b16 %v3531, %v3527
      %v4024 = vpack.c.b16 %v3536, %v3532
      %v4025 = vpack.c.b16 %v3537, %v3533
      %v4026 = vpack.c.b16 %v3538, %v3534
      %v4027 = vpack.c.b16 %v3539, %v3535
      %v4028 = vpack.c.b16 %v3544, %v3540
      %v4029 = vpack.c.b16 %v3545, %v3541
      %v4030 = vpack.c.b16 %v3546, %v3542
      %v4031 = vpack.c.b16 %v3547, %v3543
      %v4032 = vpack.c.b16 %v3552, %v3548
      %v4033 = vpack.c.b16 %v3553, %v3549
      %v4034 = vpack.c.b16 %v3554, %v3550
      %v4035 = vpack.c.b16 %v3555, %v3551
      %v4036 = vpack.c.b16 %v3560, %v3556
      %v4037 = vpack.c.b16 %v3561, %v3557
      %v4038 = vpack.c.b16 %v3562, %v3558
      %v4039 = vpack.c.b16 %v3563, %v3559
      %v4040 = vpack.c.b16 %v3568, %v3564
      %v4041 = vpack.c.b16 %v3569, %v3565
      %v4042 = vpack.c.b16 %v3570, %v3566
      %v4043 = vpack.c.b16 %v3571, %v3567
      %v4044 = vpack.c.b16 %v3576, %v3572
      %v4045 = vpack.c.b16 %v3577, %v3573
      %v4046 = vpack.c.b16 %v3578, %v3574
      %v4047 = vpack.c.b16 %v3579, %v3575
      %v4048 = vpack.c.b16 %v3584, %v3580
      %v4049 = vpack.c.b16 %v3585, %v3581
      %v4050 = vpack.c.b16 %v3586, %v3582
      %v4051 = vpack.c.b16 %v3587, %v3583
      %v4052 = vpack.c.b16 %v3592, %v3588
      %v4053 = vpack.c.b16 %v3593, %v3589
      %v4054 = vpack.c.b16 %v3594, %v3590
      %v4055 = vpack.c.b16 %v3595, %v3591
      %v4056 = vpack.c.b16 %v3600, %v3596
      %v4057 = vpack.c.b16 %v3601, %v3597
      %v4058 = vpack.c.b16 %v3602, %v3598
      %v4059 = vpack.c.b16 %v3603, %v3599
      %v4060 = vpack.c.b16 %v3608, %v3604
      %v4061 = vpack.c.b16 %v3609, %v3605
      %v4062 = vpack.c.b16 %v3610, %v3606
      %v4063 = vpack.c.b16 %v3611, %v3607
      %v4064 = vpack.c.b16 %v3616, %v3612
      %v4065 = vpack.c.b16 %v3617, %v3613
      %v4066 = vpack.c.b16 %v3618, %v3614
      %v4067 = vpack.c.b16 %v3619, %v3615
      %v4068 = vpack.c.b16 %v3624, %v3620
      %v4069 = vpack.c.b16 %v3625, %v3621
      %v4070 = vpack.c.b16 %v3626, %v3622
      %v4071 = vpack.c.b16 %v3627, %v3623
      %v4072 = vpack.c.b16 %v3632, %v3628
      %v4073 = vpack.c.b16 %v3633, %v3629
      %v4074 = vpack.c.b16 %v3634, %v3630
      %v4075 = vpack.c.b16 %v3635, %v3631
      %v4076 = vpack.c.b16 %v3640, %v3636
      %v4077 = vpack.c.b16 %v3641, %v3637
      %v4078 = vpack.c.b16 %v3642, %v3638
      %v4079 = vpack.c.b16 %v3643, %v3639
      %v4080 = vpack.c.b16 %v3648, %v3644
      %v4081 = vpack.c.b16 %v3649, %v3645
      %v4082 = vpack.c.b16 %v3650, %v3646
      %v4083 = vpack.c.b16 %v3651, %v3647
      %v4084 = vpack.c.b16 %v3656, %v3652
      %v4085 = vpack.c.b16 %v3657, %v3653
      %v4086 = vpack.c.b16 %v3658, %v3654
      %v4087 = vpack.c.b16 %v3659, %v3655
      %v4088 = vpack.c.b16 %v3664, %v3660
      %v4089 = vpack.c.b16 %v3665, %v3661
      %v4090 = vpack.c.b16 %v3666, %v3662
      %v4091 = vpack.c.b16 %v3667, %v3663
      %v4092 = vpack.c.b16 %v3672, %v3668
      %v4093 = vpack.c.b16 %v3673, %v3669
      %v4094 = vpack.c.b16 %v3674, %v3670
      %v4095 = vpack.c.b16 %v3675, %v3671
      %v4096 = vpack.c.b16 %v3680, %v3676
      %v4097 = vpack.c.b16 %v3681, %v3677
      %v4098 = vpack.c.b16 %v3682, %v3678
      %v4099 = vpack.c.b16 %v3683, %v3679
      %v4100 = vpack.c.b16 %v3688, %v3684
      %v4101 = vpack.c.b16 %v3689, %v3685
      %v4102 = vpack.c.b16 %v3690, %v3686
      %v4103 = vpack.c.b16 %v3691, %v3687
      %v4104 = vpack.c.b16 %v3696, %v3692
      %v4105 = vpack.c.b16 %v3697, %v3693
      %v4106 = vpack.c.b16 %v3698, %v3694
      %v4107 = vpack.c.b16 %v3699, %v3695
      %v4108 = vpack.c.b16 %v3704, %v3700
      %v4109 = vpack.c.b16 %v3705, %v3701
      %v4110 = vpack.c.b16 %v3706, %v3702
      %v4111 = vpack.c.b16 %v3707, %v3703
      %v4112 = vpack.c.b16 %v3712, %v3708
      %v4113 = vpack.c.b16 %v3713, %v3709
      %v4114 = vpack.c.b16 %v3714, %v3710
      %v4115 = vpack.c.b16 %v3715, %v3711
      %v4116 = vpack.c.b16 %v3720, %v3716
      %v4117 = vpack.c.b16 %v3721, %v3717
      %v4118 = vpack.c.b16 %v3722, %v3718
      %v4119 = vpack.c.b16 %v3723, %v3719
      %v4120 = vpack.c.b16 %v3728, %v3724
      %v4121 = vpack.c.b16 %v3729, %v3725
      %v4122 = vpack.c.b16 %v3730, %v3726
      %v4123 = vpack.c.b16 %v3731, %v3727
      %v4124 = vpack.c.b16 %v3736, %v3732
      %v4125 = vpack.c.b16 %v3737, %v3733
      %v4126 = vpack.c.b16 %v3738, %v3734
      %v4127 = vpack.c.b16 %v3739, %v3735
      %v4128 = vpack.c.b16 %v3744, %v3740
      %v4129 = vpack.c.b16 %v3745, %v3741
      %v4130 = vpack.c.b16 %v3746, %v3742
      %v4131 = vpack.c.b16 %v3747, %v3743
      %v4132 = vpack.c.b16 %v3752, %v3748
      %v4133 = vpack.c.b16 %v3753, %v3749
      %v4134 = vpack.c.b16 %v3754, %v3750
      %v4135 = vpack.c.b16 %v3755, %v3751
      %v4136 = vpack.c.b16 %v3760, %v3756
      %v4137 = vpack.c.b16 %v3761, %v3757
      %v4138 = vpack.c.b16 %v3762, %v3758
      %v4139 = vpack.c.b16 %v3763, %v3759
      %v4140 = vpack.c.b16 %v3768, %v3764
      %v4141 = vpack.c.b16 %v3769, %v3765
      %v4142 = vpack.c.b16 %v3770, %v3766
      %v4143 = vpack.c.b16 %v3771, %v3767
      %v4144 = vpack.c.b16 %v3776, %v3772
      %v4145 = vpack.c.b16 %v3777, %v3773
      %v4146 = vpack.c.b16 %v3778, %v3774
      %v4147 = vpack.c.b16 %v3779, %v3775
      %v4148 = vpack.c.b16 %v3784, %v3780
      %v4149 = vpack.c.b16 %v3785, %v3781
      %v4150 = vpack.c.b16 %v3786, %v3782
      %v4151 = vpack.c.b16 %v3787, %v3783
      %v4152 = vpack.c.b16 %v3792, %v3788
      %v4153 = vpack.c.b16 %v3793, %v3789
      %v4154 = vpack.c.b16 %v3794, %v3790
      %v4155 = vpack.c.b16 %v3795, %v3791
      %v4156 = vpack.c.b16 %v3800, %v3796
      %v4157 = vpack.c.b16 %v3801, %v3797
      %v4158 = vpack.c.b16 %v3802, %v3798
      %v4159 = vpack.c.b16 %v3803, %v3799
      %v4160 = vpack.c.b16 %v3808, %v3804
      %v4161 = vpack.c.b16 %v3809, %v3805
      %v4162 = vpack.c.b16 %v3810, %v3806
      %v4163 = vpack.c.b16 %v3811, %v3807
      %v4164 = vpack.c.b16 %v3816, %v3812
      %v4165 = vpack.c.b16 %v3817, %v3813
      %v4166 = vpack.c.b16 %v3818, %v3814
      %v4167 = vpack.c.b16 %v3819, %v3815
      %v4168 = vpack.c.b16 %v3824, %v3820
      %v4169 = vpack.c.b16 %v3825, %v3821
      %v4170 = vpack.c.b16 %v3826, %v3822
      %v4171 = vpack.c.b16 %v3827, %v3823
      %v4172 = vpack.c.b16 %v3832, %v3828
      %v4173 = vpack.c.b16 %v3833, %v3829
      %v4174 = vpack.c.b16 %v3834, %v3830
      %v4175 = vpack.c.b16 %v3835, %v3831
      %v4176 = vpack.c.b16 %v3840, %v3836
      %v4177 = vpack.c.b16 %v3841, %v3837
      %v4178 = vpack.c.b16 %v3842, %v3838
      %v4179 = vpack.c.b16 %v3843, %v3839
      %v4180 = vpack.c.b16 %v3848, %v3844
      %v4181 = vpack.c.b16 %v3849, %v3845
      %v4182 = vpack.c.b16 %v3850, %v3846
      %v4183 = vpack.c.b16 %v3851, %v3847
      %v4184 = vpack.c.b16 %v3856, %v3852
      %v4185 = vpack.c.b16 %v3857, %v3853
      %v4186 = vpack.c.b16 %v3858, %v3854
      %v4187 = vpack.c.b16 %v3859, %v3855
      %v4188 = vpack.c.b16 %v3864, %v3860
      %v4189 = vpack.c.b16 %v3865, %v3861
      %v4190 = vpack.c.b16 %v3866, %v3862
      %v4191 = vpack.c.b16 %v3867, %v3863
      %v4192 = vpack.c.b16 %v3872, %v3868
      %v4193 = vpack.c.b16 %v3873, %v3869
      %v4194 = vpack.c.b16 %v3874, %v3870
      %v4195 = vpack.c.b16 %v3875, %v3871
      %4516 = vmatprep.subr.bf16.mxu0 %v3877
      %4517 = vmatpush1.bf16.msra.mxu0 %v3876
      %4518 = vmatprep.subr.bf16.mxu0 %v3881
      %4519 = vmatpush1.bf16.msra.mxu0 %v3880
      %4520 = vmatprep.subr.bf16.mxu0 %v3885
      %4521 = vmatpush1.bf16.msra.mxu0 %v3884
      %4522 = vmatprep.subr.bf16.mxu0 %v3889
      %4523 = vmatpush1.bf16.msra.mxu0 %v3888
      %4524 = vmatprep.subr.bf16.mxu0 %v3893
      %4525 = vmatpush1.bf16.msra.mxu0 %v3892
      %4526 = vmatprep.subr.bf16.mxu0 %v3897
      %4527 = vmatpush1.bf16.msra.mxu0 %v3896
      %4528 = vmatprep.subr.bf16.mxu0 %v3901
      %4529 = vmatpush1.bf16.msra.mxu0 %v3900
      %4530 = vmatprep.subr.bf16.mxu0 %v3905
      %4531 = vmatpush1.bf16.msra.mxu0 %v3904
      %4532 = vmatprep.subr.bf16.mxu0 %v3909
      %4533 = vmatpush1.bf16.msra.mxu0 %v3908
      %4534 = vmatprep.subr.bf16.mxu0 %v3913
      %4535 = vmatpush1.bf16.msra.mxu0 %v3912
      %4536 = vmatprep.subr.bf16.mxu0 %v3917
      %4537 = vmatpush1.bf16.msra.mxu0 %v3916
      %4538 = vmatprep.subr.bf16.mxu0 %v3921
      %4539 = vmatpush1.bf16.msra.mxu0 %v3920
      %4540 = vmatprep.subr.bf16.mxu0 %v3925
      %4541 = vmatpush1.bf16.msra.mxu0 %v3924
      %4542 = vmatprep.subr.bf16.mxu0 %v3929
      %4543 = vmatpush1.bf16.msra.mxu0 %v3928
      %4544 = vmatprep.subr.bf16.mxu0 %v3933
      %4545 = vmatpush1.bf16.msra.mxu0 %v3932
      %4546 = vmatprep.subr.bf16.mxu0 %v3937
      %4547 = vmatpush1.bf16.msra.mxu0 %v3936
      %4548 = vmatprep.mubr.bf16.mxu0 %v2897
      %4549 = vmatmul.mubr.bf16.gmra.mrb[0].mxu0 %v2896
      %v4550 = vpop.f32.mrb[0].mxu0
      %v4551 = vadd.f32 %v2828, %v4550
      %v4552 = vpop.f32.mrb[0].mxu0
      %v4553 = vadd.f32 %v2832, %v4552
      %v4554 = vpop.f32.mrb[0].mxu0
      %v4555 = vpop.f32.mrb[0].mxu0
      %4556 = vdwg.mxu0
      %4557 = vmatprep.subr.bf16.mxu0 %v3941
      %4558 = vmatpush1.bf16.msra.mxu0 %v3940
      %4559 = vmatprep.subr.bf16.mxu0 %v3945
      %4560 = vmatpush1.bf16.msra.mxu0 %v3944
      %4561 = vmatprep.subr.bf16.mxu0 %v3949
      %4562 = vmatpush1.bf16.msra.mxu0 %v3948
      %4563 = vmatprep.subr.bf16.mxu0 %v3953
      %4564 = vmatpush1.bf16.msra.mxu0 %v3952
      %4565 = vmatprep.subr.bf16.mxu0 %v3957
      %4566 = vmatpush1.bf16.msra.mxu0 %v3956
      %4567 = vmatprep.subr.bf16.mxu0 %v3961
      %4568 = vmatpush1.bf16.msra.mxu0 %v3960
      %4569 = vmatprep.subr.bf16.mxu0 %v3965
      %4570 = vmatpush1.bf16.msra.mxu0 %v3964
      %4571 = vmatprep.subr.bf16.mxu0 %v3969
      %4572 = vmatpush1.bf16.msra.mxu0 %v3968
      %4573 = vmatprep.subr.bf16.mxu0 %v3973
      %4574 = vmatpush1.bf16.msra.mxu0 %v3972
      %4575 = vmatprep.subr.bf16.mxu0 %v3977
      %4576 = vmatpush1.bf16.msra.mxu0 %v3976
      %4577 = vmatprep.subr.bf16.mxu0 %v3981
      %4578 = vmatpush1.bf16.msra.mxu0 %v3980
      %4579 = vmatprep.subr.bf16.mxu0 %v3985
      %4580 = vmatpush1.bf16.msra.mxu0 %v3984
      %4581 = vmatprep.subr.bf16.mxu0 %v3989
      %4582 = vmatpush1.bf16.msra.mxu0 %v3988
      %4583 = vmatprep.subr.bf16.mxu0 %v3993
      %4584 = vmatpush1.bf16.msra.mxu0 %v3992
      %4585 = vmatprep.subr.bf16.mxu0 %v3997
      %4586 = vmatpush1.bf16.msra.mxu0 %v3996
      %4587 = vmatprep.subr.bf16.mxu0 %v4001
      %4588 = vmatpush1.bf16.msra.mxu0 %v4000
      %4589 = vmatprep.mubr.bf16.mxu0 %v2899
      %4590 = vmatmul.mubr.bf16.gmra.mrb[0].mxu0 %v2898
      %v4591 = vpop.f32.mrb[0].mxu0
      %v4592 = vadd.f32 %v4551, %v4591
      %v4593 = vpop.f32.mrb[0].mxu0
      %v4594 = vadd.f32 %v4553, %v4593
      %v4595 = vpop.f32.mrb[0].mxu0
      %v4596 = vpop.f32.mrb[0].mxu0
      %4597 = vdwg.mxu0
      %4598 = vmatprep.subr.bf16.mxu0 %v4005
      %4599 = vmatpush1.bf16.msra.mxu0 %v4004
      %4600 = vmatprep.subr.bf16.mxu0 %v4009
      %4601 = vmatpush1.bf16.msra.mxu0 %v4008
      %4602 = vmatprep.subr.bf16.mxu0 %v4013
      %4603 = vmatpush1.bf16.msra.mxu0 %v4012
      %4604 = vmatprep.subr.bf16.mxu0 %v4017
      %4605 = vmatpush1.bf16.msra.mxu0 %v4016
      %4606 = vmatprep.subr.bf16.mxu0 %v4021
      %4607 = vmatpush1.bf16.msra.mxu0 %v4020
      %4608 = vmatprep.subr.bf16.mxu0 %v4025
      %4609 = vmatpush1.bf16.msra.mxu0 %v4024
      %4610 = vmatprep.subr.bf16.mxu0 %v4029
      %4611 = vmatpush1.bf16.msra.mxu0 %v4028
      %4612 = vmatprep.subr.bf16.mxu0 %v4033
      %4613 = vmatpush1.bf16.msra.mxu0 %v4032
      %4614 = vmatprep.subr.bf16.mxu0 %v4037
      %4615 = vmatpush1.bf16.msra.mxu0 %v4036
      %4616 = vmatprep.subr.bf16.mxu0 %v4041
      %4617 = vmatpush1.bf16.msra.mxu0 %v4040
      %4618 = vmatprep.subr.bf16.mxu0 %v4045
      %4619 = vmatpush1.bf16.msra.mxu0 %v4044
      %4620 = vmatprep.subr.bf16.mxu0 %v4049
      %4621 = vmatpush1.bf16.msra.mxu0 %v4048
      %4622 = vmatprep.subr.bf16.mxu0 %v4053
      %4623 = vmatpush1.bf16.msra.mxu0 %v4052
      %4624 = vmatprep.subr.bf16.mxu0 %v4057
      %4625 = vmatpush1.bf16.msra.mxu0 %v4056
      %4626 = vmatprep.subr.bf16.mxu0 %v4061
      %4627 = vmatpush1.bf16.msra.mxu0 %v4060
      %4628 = vmatprep.subr.bf16.mxu0 %v4065
      %4629 = vmatpush1.bf16.msra.mxu0 %v4064
      %4630 = vmatprep.mubr.bf16.mxu0 %v2901
      %4631 = vmatmul.mubr.bf16.gmra.mrb[0].mxu0 %v2900
      %v4632 = vpop.f32.mrb[0].mxu0
      %v4633 = vadd.f32 %v4592, %v4632
      %v4634 = vpop.f32.mrb[0].mxu0
      %v4635 = vadd.f32 %v4594, %v4634
      %v4636 = vpop.f32.mrb[0].mxu0
      %v4637 = vpop.f32.mrb[0].mxu0
      %4638 = vdwg.mxu0
      %4639 = vmatprep.subr.bf16.mxu0 %v4069
      %4640 = vmatpush1.bf16.msra.mxu0 %v4068
      %4641 = vmatprep.subr.bf16.mxu0 %v4073
      %4642 = vmatpush1.bf16.msra.mxu0 %v4072
      %4643 = vmatprep.subr.bf16.mxu0 %v4077
      %4644 = vmatpush1.bf16.msra.mxu0 %v4076
      %4645 = vmatprep.subr.bf16.mxu0 %v4081
      %4646 = vmatpush1.bf16.msra.mxu0 %v4080
      %4647 = vmatprep.subr.bf16.mxu0 %v4085
      %4648 = vmatpush1.bf16.msra.mxu0 %v4084
      %4649 = vmatprep.subr.bf16.mxu0 %v4089
      %4650 = vmatpush1.bf16.msra.mxu0 %v4088
      %4651 = vmatprep.subr.bf16.mxu0 %v4093
      %4652 = vmatpush1.bf16.msra.mxu0 %v4092
      %4653 = vmatprep.subr.bf16.mxu0 %v4097
      %4654 = vmatpush1.bf16.msra.mxu0 %v4096
      %4655 = vmatprep.subr.bf16.mxu0 %v4101
      %4656 = vmatpush1.bf16.msra.mxu0 %v4100
      %4657 = vmatprep.subr.bf16.mxu0 %v4105
      %4658 = vmatpush1.bf16.msra.mxu0 %v4104
      %4659 = vmatprep.subr.bf16.mxu0 %v4109
      %4660 = vmatpush1.bf16.msra.mxu0 %v4108
      %4661 = vmatprep.subr.bf16.mxu0 %v4113
      %4662 = vmatpush1.bf16.msra.mxu0 %v4112
      %4663 = vmatprep.subr.bf16.mxu0 %v4117
      %4664 = vmatpush1.bf16.msra.mxu0 %v4116
      %4665 = vmatprep.subr.bf16.mxu0 %v4121
      %4666 = vmatpush1.bf16.msra.mxu0 %v4120
      %4667 = vmatprep.subr.bf16.mxu0 %v4125
      %4668 = vmatpush1.bf16.msra.mxu0 %v4124
      %4669 = vmatprep.subr.bf16.mxu0 %v4129
      %4670 = vmatpush1.bf16.msra.mxu0 %v4128
      %4671 = vmatprep.mubr.bf16.mxu0 %v2903
      %4672 = vmatmul.mubr.bf16.gmra.mrb[0].mxu0 %v2902
      %v4673 = vpop.f32.mrb[0].mxu0
      %v4674 = vadd.f32 %v4633, %v4673
      %v4675 = vpop.f32.mrb[0].mxu0
      %v4676 = vadd.f32 %v4635, %v4675
      %v4677 = vpop.f32.mrb[0].mxu0
      %v4678 = vpop.f32.mrb[0].mxu0
      %4679 = vdwg.mxu0
      %4680 = vmatprep.subr.bf16.mxu0 %v4133
      %4681 = vmatpush1.bf16.msra.mxu0 %v4132
      %4682 = vmatprep.subr.bf16.mxu0 %v4137
      %4683 = vmatpush1.bf16.msra.mxu0 %v4136
      %4684 = vmatprep.subr.bf16.mxu0 %v4141
      %4685 = vmatpush1.bf16.msra.mxu0 %v4140
      %4686 = vmatprep.subr.bf16.mxu0 %v4145
      %4687 = vmatpush1.bf16.msra.mxu0 %v4144
      %4688 = vmatprep.subr.bf16.mxu0 %v4149
      %4689 = vmatpush1.bf16.msra.mxu0 %v4148
      %4690 = vmatprep.subr.bf16.mxu0 %v4153
      %4691 = vmatpush1.bf16.msra.mxu0 %v4152
      %4692 = vmatprep.subr.bf16.mxu0 %v4157
      %4693 = vmatpush1.bf16.msra.mxu0 %v4156
      %4694 = vmatprep.subr.bf16.mxu0 %v4161
      %4695 = vmatpush1.bf16.msra.mxu0 %v4160
      %4696 = vmatprep.subr.bf16.mxu0 %v4165
      %4697 = vmatpush1.bf16.msra.mxu0 %v4164
      %4698 = vmatprep.subr.bf16.mxu0 %v4169
      %4699 = vmatpush1.bf16.msra.mxu0 %v4168
      %4700 = vmatprep.subr.bf16.mxu0 %v4173
      %4701 = vmatpush1.bf16.msra.mxu0 %v4172
      %4702 = vmatprep.subr.bf16.mxu0 %v4177
      %4703 = vmatpush1.bf16.msra.mxu0 %v4176
      %4704 = vmatprep.subr.bf16.mxu0 %v4181
      %4705 = vmatpush1.bf16.msra.mxu0 %v4180
      %4706 = vmatprep.subr.bf16.mxu0 %v4185
      %4707 = vmatpush1.bf16.msra.mxu0 %v4184
      %4708 = vmatprep.subr.bf16.mxu0 %v4189
      %4709 = vmatpush1.bf16.msra.mxu0 %v4188
      %4710 = vmatprep.subr.bf16.mxu0 %v4193
      %4711 = vmatpush1.bf16.msra.mxu0 %v4192
      %4712 = vmatprep.mubr.bf16.mxu0 %v2905
      %4713 = vmatmul.mubr.bf16.gmra.mrb[0].mxu0 %v2904
      %v4714 = vpop.f32.mrb[0].mxu0
      %v4715 = vadd.f32 %v4674, %v4714
      %v4716 = vpop.f32.mrb[0].mxu0
      %v4717 = vadd.f32 %v4676, %v4716
      %v4718 = vpop.f32.mrb[0].mxu0
      %v4719 = vpop.f32.mrb[0].mxu0
      %4720 = vdwg.mxu0
      %4721 = vmatprep.subr.bf16.mxu0 %v3879
      %4722 = vmatpush1.bf16.msra.mxu0 %v3878
      %4723 = vmatprep.subr.bf16.mxu0 %v3883
      %4724 = vmatpush1.bf16.msra.mxu0 %v3882
      %4725 = vmatprep.subr.bf16.mxu0 %v3887
      %4726 = vmatpush1.bf16.msra.mxu0 %v3886
      %4727 = vmatprep.subr.bf16.mxu0 %v3891
      %4728 = vmatpush1.bf16.msra.mxu0 %v3890
      %4729 = vmatprep.subr.bf16.mxu0 %v3895
      %4730 = vmatpush1.bf16.msra.mxu0 %v3894
      %4731 = vmatprep.subr.bf16.mxu0 %v3899
      %4732 = vmatpush1.bf16.msra.mxu0 %v3898
      %4733 = vmatprep.subr.bf16.mxu0 %v3903
      %4734 = vmatpush1.bf16.msra.mxu0 %v3902
      %4735 = vmatprep.subr.bf16.mxu0 %v3907
      %4736 = vmatpush1.bf16.msra.mxu0 %v3906
      %4737 = vmatprep.subr.bf16.mxu0 %v3911
      %4738 = vmatpush1.bf16.msra.mxu0 %v3910
      %4739 = vmatprep.subr.bf16.mxu0 %v3915
      %4740 = vmatpush1.bf16.msra.mxu0 %v3914
      %4741 = vmatprep.subr.bf16.mxu0 %v3919
      %4742 = vmatpush1.bf16.msra.mxu0 %v3918
      %4743 = vmatprep.subr.bf16.mxu0 %v3923
      %4744 = vmatpush1.bf16.msra.mxu0 %v3922
      %4745 = vmatprep.subr.bf16.mxu0 %v3927
      %4746 = vmatpush1.bf16.msra.mxu0 %v3926
      %4747 = vmatprep.subr.bf16.mxu0 %v3931
      %4748 = vmatpush1.bf16.msra.mxu0 %v3930
      %4749 = vmatprep.subr.bf16.mxu0 %v3935
      %4750 = vmatpush1.bf16.msra.mxu0 %v3934
      %4751 = vmatprep.subr.bf16.mxu0 %v3939
      %4752 = vmatpush1.bf16.msra.mxu0 %v3938
      %4753 = vmatprep.mubr.bf16.mxu0 %v2897
      %4754 = vmatmul.mubr.bf16.gmra.mrb[0].mxu0 %v2896
      %v4755 = vpop.f32.mrb[0].mxu0
      %v4756 = vadd.f32 %v2836, %v4755
      %v4757 = vpop.f32.mrb[0].mxu0
      %v4758 = vadd.f32 %v2840, %v4757
      %v4759 = vpop.f32.mrb[0].mxu0
      %v4760 = vpop.f32.mrb[0].mxu0
      %4761 = vdwg.mxu0
      %4762 = vmatprep.subr.bf16.mxu0 %v3943
      %4763 = vmatpush1.bf16.msra.mxu0 %v3942
      %4764 = vmatprep.subr.bf16.mxu0 %v3947
      %4765 = vmatpush1.bf16.msra.mxu0 %v3946
      %4766 = vmatprep.subr.bf16.mxu0 %v3951
      %4767 = vmatpush1.bf16.msra.mxu0 %v3950
      %4768 = vmatprep.subr.bf16.mxu0 %v3955
      %4769 = vmatpush1.bf16.msra.mxu0 %v3954
      %4770 = vmatprep.subr.bf16.mxu0 %v3959
      %4771 = vmatpush1.bf16.msra.mxu0 %v3958
      %4772 = vmatprep.subr.bf16.mxu0 %v3963
      %4773 = vmatpush1.bf16.msra.mxu0 %v3962
      %4774 = vmatprep.subr.bf16.mxu0 %v3967
      %4775 = vmatpush1.bf16.msra.mxu0 %v3966
      %4776 = vmatprep.subr.bf16.mxu0 %v3971
      %4777 = vmatpush1.bf16.msra.mxu0 %v3970
      %4778 = vmatprep.subr.bf16.mxu0 %v3975
      %4779 = vmatpush1.bf16.msra.mxu0 %v3974
      %4780 = vmatprep.subr.bf16.mxu0 %v3979
      %4781 = vmatpush1.bf16.msra.mxu0 %v3978
      %4782 = vmatprep.subr.bf16.mxu0 %v3983
      %4783 = vmatpush1.bf16.msra.mxu0 %v3982
      %4784 = vmatprep.subr.bf16.mxu0 %v3987
      %4785 = vmatpush1.bf16.msra.mxu0 %v3986
      %4786 = vmatprep.subr.bf16.mxu0 %v3991
      %4787 = vmatpush1.bf16.msra.mxu0 %v3990
      %4788 = vmatprep.subr.bf16.mxu0 %v3995
      %4789 = vmatpush1.bf16.msra.mxu0 %v3994
      %4790 = vmatprep.subr.bf16.mxu0 %v3999
      %4791 = vmatpush1.bf16.msra.mxu0 %v3998
      %4792 = vmatprep.subr.bf16.mxu0 %v4003
      %4793 = vmatpush1.bf16.msra.mxu0 %v4002
      %4794 = vmatprep.mubr.bf16.mxu0 %v2899
      %4795 = vmatmul.mubr.bf16.gmra.mrb[0].mxu0 %v2898
      %v4796 = vpop.f32.mrb[0].mxu0
      %v4797 = vadd.f32 %v4756, %v4796
      %v4798 = vpop.f32.mrb[0].mxu0
      %v4799 = vadd.f32 %v4758, %v4798
      %v4800 = vpop.f32.mrb[0].mxu0
      %v4801 = vpop.f32.mrb[0].mxu0
      %4802 = vdwg.mxu0
      %4803 = vmatprep.subr.bf16.mxu0 %v4007
      %4804 = vmatpush1.bf16.msra.mxu0 %v4006
      %4805 = vmatprep.subr.bf16.mxu0 %v4011
      %4806 = vmatpush1.bf16.msra.mxu0 %v4010
      %4807 = vmatprep.subr.bf16.mxu0 %v4015
      %4808 = vmatpush1.bf16.msra.mxu0 %v4014
      %4809 = vmatprep.subr.bf16.mxu0 %v4019
      %4810 = vmatpush1.bf16.msra.mxu0 %v4018
      %4811 = vmatprep.subr.bf16.mxu0 %v4023
      %4812 = vmatpush1.bf16.msra.mxu0 %v4022
      %4813 = vmatprep.subr.bf16.mxu0 %v4027
      %4814 = vmatpush1.bf16.msra.mxu0 %v4026
      %4815 = vmatprep.subr.bf16.mxu0 %v4031
      %4816 = vmatpush1.bf16.msra.mxu0 %v4030
      %4817 = vmatprep.subr.bf16.mxu0 %v4035
      %4818 = vmatpush1.bf16.msra.mxu0 %v4034
      %4819 = vmatprep.subr.bf16.mxu0 %v4039
      %4820 = vmatpush1.bf16.msra.mxu0 %v4038
      %4821 = vmatprep.subr.bf16.mxu0 %v4043
      %4822 = vmatpush1.bf16.msra.mxu0 %v4042
      %4823 = vmatprep.subr.bf16.mxu0 %v4047
      %4824 = vmatpush1.bf16.msra.mxu0 %v4046
      %4825 = vmatprep.subr.bf16.mxu0 %v4051
      %4826 = vmatpush1.bf16.msra.mxu0 %v4050
      %4827 = vmatprep.subr.bf16.mxu0 %v4055
      %4828 = vmatpush1.bf16.msra.mxu0 %v4054
      %4829 = vmatprep.subr.bf16.mxu0 %v4059
      %4830 = vmatpush1.bf16.msra.mxu0 %v4058
      %4831 = vmatprep.subr.bf16.mxu0 %v4063
      %4832 = vmatpush1.bf16.msra.mxu0 %v4062
      %4833 = vmatprep.subr.bf16.mxu0 %v4067
      %4834 = vmatpush1.bf16.msra.mxu0 %v4066
      %4835 = vmatprep.mubr.bf16.mxu0 %v2901
      %4836 = vmatmul.mubr.bf16.gmra.mrb[0].mxu0 %v2900
      %v4837 = vpop.f32.mrb[0].mxu0
      %v4838 = vadd.f32 %v4797, %v4837
      %v4839 = vpop.f32.mrb[0].mxu0
      %v4840 = vadd.f32 %v4799, %v4839
      %v4841 = vpop.f32.mrb[0].mxu0
      %v4842 = vpop.f32.mrb[0].mxu0
      %4843 = vdwg.mxu0
      %4844 = vmatprep.subr.bf16.mxu0 %v4071
      %4845 = vmatpush1.bf16.msra.mxu0 %v4070
      %4846 = vmatprep.subr.bf16.mxu0 %v4075
      %4847 = vmatpush1.bf16.msra.mxu0 %v4074
      %4848 = vmatprep.subr.bf16.mxu0 %v4079
      %4849 = vmatpush1.bf16.msra.mxu0 %v4078
      %4850 = vmatprep.subr.bf16.mxu0 %v4083
      %4851 = vmatpush1.bf16.msra.mxu0 %v4082
      %4852 = vmatprep.subr.bf16.mxu0 %v4087
      %4853 = vmatpush1.bf16.msra.mxu0 %v4086
      %4854 = vmatprep.subr.bf16.mxu0 %v4091
      %4855 = vmatpush1.bf16.msra.mxu0 %v4090
      %4856 = vmatprep.subr.bf16.mxu0 %v4095
      %4857 = vmatpush1.bf16.msra.mxu0 %v4094
      %4858 = vmatprep.subr.bf16.mxu0 %v4099
      %4859 = vmatpush1.bf16.msra.mxu0 %v4098
      %4860 = vmatprep.subr.bf16.mxu0 %v4103
      %4861 = vmatpush1.bf16.msra.mxu0 %v4102
      %4862 = vmatprep.subr.bf16.mxu0 %v4107
      %4863 = vmatpush1.bf16.msra.mxu0 %v4106
      %4864 = vmatprep.subr.bf16.mxu0 %v4111
      %4865 = vmatpush1.bf16.msra.mxu0 %v4110
      %4866 = vmatprep.subr.bf16.mxu0 %v4115
      %4867 = vmatpush1.bf16.msra.mxu0 %v4114
      %4868 = vmatprep.subr.bf16.mxu0 %v4119
      %4869 = vmatpush1.bf16.msra.mxu0 %v4118
      %4870 = vmatprep.subr.bf16.mxu0 %v4123
      %4871 = vmatpush1.bf16.msra.mxu0 %v4122
      %4872 = vmatprep.subr.bf16.mxu0 %v4127
      %4873 = vmatpush1.bf16.msra.mxu0 %v4126
      %4874 = vmatprep.subr.bf16.mxu0 %v4131
      %4875 = vmatpush1.bf16.msra.mxu0 %v4130
      %4876 = vmatprep.mubr.bf16.mxu0 %v2903
      %4877 = vmatmul.mubr.bf16.gmra.mrb[0].mxu0 %v2902
      %v4878 = vpop.f32.mrb[0].mxu0
      %v4879 = vadd.f32 %v4838, %v4878
      %v4880 = vpop.f32.mrb[0].mxu0
      %v4881 = vadd.f32 %v4840, %v4880
      %v4882 = vpop.f32.mrb[0].mxu0
      %v4883 = vpop.f32.mrb[0].mxu0
      %4884 = vdwg.mxu0
      %4885 = vmatprep.subr.bf16.mxu0 %v4135
      %4886 = vmatpush1.bf16.msra.mxu0 %v4134
      %4887 = vmatprep.subr.bf16.mxu0 %v4139
      %4888 = vmatpush1.bf16.msra.mxu0 %v4138
      %4889 = vmatprep.subr.bf16.mxu0 %v4143
      %4890 = vmatpush1.bf16.msra.mxu0 %v4142
      %4891 = vmatprep.subr.bf16.mxu0 %v4147
      %4892 = vmatpush1.bf16.msra.mxu0 %v4146
      %4893 = vmatprep.subr.bf16.mxu0 %v4151
      %4894 = vmatpush1.bf16.msra.mxu0 %v4150
      %4895 = vmatprep.subr.bf16.mxu0 %v4155
      %4896 = vmatpush1.bf16.msra.mxu0 %v4154
      %4897 = vmatprep.subr.bf16.mxu0 %v4159
      %4898 = vmatpush1.bf16.msra.mxu0 %v4158
      %4899 = vmatprep.subr.bf16.mxu0 %v4163
      %4900 = vmatpush1.bf16.msra.mxu0 %v4162
      %4901 = vmatprep.subr.bf16.mxu0 %v4167
      %4902 = vmatpush1.bf16.msra.mxu0 %v4166
      %4903 = vmatprep.subr.bf16.mxu0 %v4171
      %4904 = vmatpush1.bf16.msra.mxu0 %v4170
      %4905 = vmatprep.subr.bf16.mxu0 %v4175
      %4906 = vmatpush1.bf16.msra.mxu0 %v4174
      %4907 = vmatprep.subr.bf16.mxu0 %v4179
      %4908 = vmatpush1.bf16.msra.mxu0 %v4178
      %4909 = vmatprep.subr.bf16.mxu0 %v4183
      %4910 = vmatpush1.bf16.msra.mxu0 %v4182
      %4911 = vmatprep.subr.bf16.mxu0 %v4187
      %4912 = vmatpush1.bf16.msra.mxu0 %v4186
      %4913 = vmatprep.subr.bf16.mxu0 %v4191
      %4914 = vmatpush1.bf16.msra.mxu0 %v4190
      %4915 = vmatprep.subr.bf16.mxu0 %v4195
      %4916 = vmatpush1.bf16.msra.mxu0 %v4194
      %4917 = vmatprep.mubr.bf16.mxu0 %v2905
      %4918 = vmatmul.mubr.bf16.gmra.mrb[0].mxu0 %v2904
      %v4919 = vpop.f32.mrb[0].mxu0
      %v4920 = vadd.f32 %v4879, %v4919
      %v4921 = vpop.f32.mrb[0].mxu0
      %v4922 = vadd.f32 %v4881, %v4921
      %v4923 = vpop.f32.mrb[0].mxu0
      %v4924 = vpop.f32.mrb[0].mxu0
      %4925 = vdwg.mxu0
      %v4930 = vcombine.low %v4715, %v4717
      %v4931 = vcombine.low %v4920, %v4922
      %v4933 = vunpack.c.l.s4 1983009808
      %v4934 = vunpack.c.0.s8 %v4933
      %v4935 = vlaneseq
      %v4936 = vshrl.u32 %v4935, 7
      %v4937 = vsub.s32 %v4934, %v4936
      %v4938 = vrot.slane %v4930, %v4937
      %v4940 = vunpack.c.l.s4 1983009808
      %v4941 = vunpack.c.0.s8 %v4940
      %v4942 = vlaneseq
      %v4943 = vshrl.u32 %v4942, 7
      %v4944 = vsub.s32 %v4941, %v4943
      %v4945 = vrot.slane %v4931, %v4944
      %v4946 = vcombine.low %v4938, %v4945
      %4948 = vst [vmem:[%s261] sm:$0xff] %v4946
      %p4949 = scmp.lt.s32.totalorder %s16, 1
      %s4950 = scalar_select %p4949, %s16, 1
      %s4951 = smul.addr %s4950, 4
      %s4952 = smul.addr %s4951, 2
      %s4953 = scalar_lea.vmem %s5, %s4952
      // Predicated region
      $region41: #{style2vec_v2_forward.1} parent=39 // pred_check
        %p4954 = pneg %p154
      $region42: #{style2vec_v2_forward.1} parent=39 // pred_check_branch
        %4956 = sbr.rel (%p4954) target = $region44
      $region43: #{style2vec_v2_forward.1} parent=39 // pred_region
        _
      $region44: #{style2vec_v2_forward.1} parent=39 // pred_fallthru
        _
    $region40: #{style2vec_v2_forward.1} parent=5 // pred_fallthru
      _
    %p4957 = scmp.le.s32.totalorder 2, %s11
    // Predicated region
    $region45: #{style2vec_v2_forward.1} parent=5 // pred_check
      %p4958 = pneg %p4957
    $region46: #{style2vec_v2_forward.1} parent=5 // pred_check_branch
      %4960 = sbr.rel (%p4958) target = $region48
    $region47: #{style2vec_v2_forward.1} parent=5 // pred_region
      %s4961 = ssub.s32 %s11, 2
      // Predicated region
      $region49: #{style2vec_v2_forward.1} parent=47 // pred_check
        %p4962 = pneg %p160
      $region50: #{style2vec_v2_forward.1} parent=47 // pred_check_branch
        %4964 = sbr.rel (%p4962) target = $region52
      $region51: #{style2vec_v2_forward.1} parent=47 // pred_region
        %p4965 = scmp.lt.s32.totalorder %s17, 1
        %s4966 = scalar_select %p4965, %s17, 1
        %s4967 = smul.addr %s4966, 4
        %s4968 = smul.addr %s4967, 2
        %s4969 = scalar_lea.vmem %s5, %s4968
      $region52: #{style2vec_v2_forward.1} parent=47 // pred_fallthru
        _
    $region48: #{style2vec_v2_forward.1} parent=5 // pred_fallthru
      _
  $region6: #{style2vec_v2_forward.1} parent=0 // loop_footer
    %s15 = sadd.s32 1, %s11
  $region7: #{style2vec_v2_forward.1} parent=0 // loop_footer_branch
    %10 = sbr.rel target = $region3
  $region8: #{style2vec_v2_forward.1} parent=0 // loop_exit
    _

</llo_original>
